<compile_context>
chip_gen: v6e
topology: v6e:2x2x1
jax: 0.10.0
libtpu: 0.0.40
codegen_flags: <defaults>
</compile_context>

<pallas_src>
import math

import jax
import jax.numpy as jnp
from jax.experimental import pallas as pl
from jax.experimental.pallas import tpu as pltpu

# ----------------------- configuration (small shapes) -----------------------
BATCH = 2
IMG_SIZE = 16
PATCH_SIZE = 4
IN_CH = 3
ACTION_DIM = 4
ACTION_EMB_DIM = 8
LATENT_DIM = 32
DEC_DIM = 32
DEC_DEPTH = 2
DEC_HEADS = 4
HEAD_DIM = DEC_DIM // DEC_HEADS
DEC_MLP_DIM = 64
OUT_CH = 3
OUT_IMG_SIZE = 16
DEC_PATCH = PATCH_SIZE                        # decoder_patch_size defaults to patch_size
NP_H = OUT_IMG_SIZE // DEC_PATCH
NP_W = OUT_IMG_SIZE // DEC_PATCH
NUM_PATCHES = NP_H * NP_W                     # 16 output query tokens
OUT_PATCH_DIM = OUT_CH * DEC_PATCH * DEC_PATCH
ENC_HIDDEN = 64                               # MLPEncoder hidden_dim (encoder_params)
ENC_IN = IN_CH * IMG_SIZE * IMG_SIZE          # 768
LN_EPS = 1e-5
VEC_WIDTH = 64
ACTP_PAD_ROWS = 8                             # action-proj weight padded to 8 rows

# ----- w64 slab row offsets (lane width 64) -----
P_ENC1 = 0
P_ENC2 = P_ENC1 + ENC_IN                                        # 768
P_FF1 = (P_ENC2 + ENC_HIDDEN, P_ENC2 + ENC_HIDDEN + DEC_DIM)    # (832, 864)
P_PIX = P_FF1[1] + DEC_DIM                                      # 896
W64_ROWS = P_PIX + DEC_DIM                                      # 928

# ----- w32 slab row offsets (lane width 32) -----
O_ENC3P = 0
O_ACTP = O_ENC3P + ENC_HIDDEN                                   # 64
O_CA = (O_ACTP + ACTP_PAD_ROWS, O_ACTP + ACTP_PAD_ROWS + DEC_DIM)          # (72, 104)
O_FF2 = (O_CA[1] + DEC_DIM, O_CA[1] + DEC_DIM + DEC_MLP_DIM)    # (136, 200)
O_SAQ = O_FF2[1] + DEC_MLP_DIM                                  # 264
O_SAK = O_SAQ + DEC_DIM                                         # 296
O_SAV = O_SAK + DEC_DIM                                         # 328
O_SAO = O_SAV + DEC_DIM                                         # 360
O_TGT0 = O_SAO + DEC_DIM                                        # 392
W32_ROWS = O_TGT0 + NUM_PATCHES                                 # 408

# ----- vec slab rows (biases / LN params / misc vectors, 64-lane rows) -----
R_ENC1B, R_ENC2B, R_MEMB, R_PIXB = 0, 1, 2, 3
R_SABQ, R_SABK, R_SABV, R_SABO, R_LN1G, R_LN1B = 4, 5, 6, 7, 8, 9
R_LAYER, NR_PER_LAYER = 10, 7      # per layer: [ca_b, ff1_b, ff2_b, ln2_g, ln2_b, ln3_g, ln3_b]
VEC_ROWS = R_LAYER + NR_PER_LAYER * DEC_DEPTH                   # 24


# ------------------------------ fused kernel ---------------------------------
def _fused_forward_kernel(img_ref, act_ref, w64_ref, w32_ref, vec_ref, o_ref):
    f32 = jnp.float32
    B = img_ref.shape[0]
    T, D, F = NUM_PATCHES, DEC_DIM, DEC_MLP_DIM
    BT = B * T

    def vrow(r, width=VEC_WIDTH):
        return vec_ref[r:r + 1, :width]                           # (1, width), broadcasts

    def add_layernorm(x, resid, g_row, b_row):
        # LayerNorm(x + residual), fused moments: var = E[h^2] - mu^2.
        h = x + resid
        mu = jnp.mean(h, axis=-1, keepdims=True)
        m2 = jnp.mean(h * h, axis=-1, keepdims=True)
        inv = jax.lax.rsqrt(m2 - mu * mu + LN_EPS)
        return (h - mu) * inv * vrow(g_row, D) + vrow(b_row, D)

    # ---------------- MLP encoder (enc3 + input_projection folded offline) ----------------
    h = jnp.dot(img_ref[...], w64_ref[P_ENC1:P_ENC1 + ENC_IN, :],
                preferred_element_type=f32) + vrow(R_ENC1B)
    h = jnp.maximum(h, 0.0)
    h = jnp.dot(h, w64_ref[P_ENC2:P_ENC2 + ENC_HIDDEN, :],
                preferred_element_type=f32) + vrow(R_ENC2B)
    h = jnp.maximum(h, 0.0)
    # memory = relu2 @ (enc3_w·proj_lat) + action @ (act_w·proj_act) + folded bias
    memory = (jnp.dot(h, w32_ref[O_ENC3P:O_ENC3P + ENC_HIDDEN, :], preferred_element_type=f32)
              + jnp.dot(act_ref[...], w32_ref[O_ACTP:O_ACTP + ACTION_DIM, :],
                        preferred_element_type=f32)
              + vrow(R_MEMB, D))                                  # (B, D): single memory token

    def cross_and_ff(tgt3, l):
        # Cross-attention with memory length 1 (softmax == 1, W_v·W_o folded) + norm2,
        # then feed-forward (relu) + norm3.  tgt3 broadcasts to (B, T, D).
        base = R_LAYER + NR_PER_LAYER * l
        ca = (jnp.dot(memory, w32_ref[O_CA[l]:O_CA[l] + D, :], preferred_element_type=f32)
              + vrow(base + 0, D))                                # (B, D)
        t3 = add_layernorm(ca[:, None, :], tgt3, base + 3, base + 4)   # (B, T, D)
        t2 = t3.reshape(BT, D)
        ff = jnp.dot(t2, w64_ref[P_FF1[l]:P_FF1[l] + D, :],
                     preferred_element_type=f32) + vrow(base + 1)
        ff = jnp.maximum(ff, 0.0)
        ff = jnp.dot(ff, w32_ref[O_FF2[l]:O_FF2[l] + F, :],
                     preferred_element_type=f32) + vrow(base + 2, D)
        return add_layernorm(ff, t2, base + 5, base + 6)          # (BT, D)

    # ---- layer 0: self-attn + norm1 precomputed offline (input-independent) ----
    tgt0 = w32_ref[O_TGT0:O_TGT0 + T, :]                          # (T, D)
    tgt = cross_and_ff(tgt0[None, :, :], 0)                       # (BT, D)

    # ---- layer 1: self attention (flattened projections, per-head out-proj fold) ----
    q = jnp.dot(tgt, w32_ref[O_SAQ:O_SAQ + D, :], preferred_element_type=f32) + vrow(R_SABQ, D)
    k = jnp.dot(tgt, w32_ref[O_SAK:O_SAK + D, :], preferred_element_type=f32) + vrow(R_SABK, D)
    v = jnp.dot(tgt, w32_ref[O_SAV:O_SAV + D, :], preferred_element_type=f32) + vrow(R_SABV, D)
    q3 = q.reshape(B, T, D)
    k3 = k.reshape(B, T, D)
    v3 = v.reshape(B, T, D)
    scale = 1.0 / math.sqrt(HEAD_DIM)
    sa = None
    for hh in range(DEC_HEADS):                                   # static unroll over 4 heads
        sl = slice(hh * HEAD_DIM, (hh + 1) * HEAD_DIM)
        s = jnp.einsum("bqd,bkd->bqk", q3[:, :, sl], k3[:, :, sl],
                       preferred_element_type=f32) * scale
        s = s - jnp.max(s, axis=-1, keepdims=True)
        p = jnp.exp(s)
        p = p / jnp.sum(p, axis=-1, keepdims=True)                # exact softmax
        ctx = jnp.einsum("bqk,bkd->bqd", p, v3[:, :, sl],
                         preferred_element_type=f32)              # (B, T, head_dim)
        contrib = jnp.dot(ctx.reshape(BT, HEAD_DIM),
                          w32_ref[O_SAO + hh * HEAD_DIM:O_SAO + (hh + 1) * HEAD_DIM, :],
                          preferred_element_type=f32)             # (BT, D)
        sa = contrib if sa is None else sa + contrib
    sa = sa + vrow(R_SABO, D)
    tgt = add_layernorm(sa, tgt, R_LN1G, R_LN1B)                  # (BT, D)

    # ---- layer 1: cross-attn + feed-forward ----
    tgt = cross_and_ff(tgt.reshape(B, T, D), 1)                   # (BT, D)

    # ---------------- to_pixels (weight zero-padded to 64 lanes inside w64 slab) ----------------
    pix = jnp.dot(tgt, w64_ref[P_PIX:P_PIX + D, :], preferred_element_type=f32)
    o_ref[...] = (pix[:, :OUT_PATCH_DIM] + vrow(R_PIXB, OUT_PATCH_DIM)).astype(o_ref.dtype)


# ------------------------------ parameter init -------------------------------
def _layer0_self_attention(qtok, l0):
    # Post-norm self-attention block of decoder layer 0: LN1(q + MHA(q, q, q)).
    # Depends only on the (parameter) query tokens -> folded once at init time.
    q = qtok @ l0["wq"] + l0["bq"]
    k = qtok @ l0["wk"] + l0["bk"]
    v = qtok @ l0["wv"] + l0["bv"]
    scale = 1.0 / math.sqrt(HEAD_DIM)
    parts = []
    for h in range(DEC_HEADS):
        sl = slice(h * HEAD_DIM, (h + 1) * HEAD_DIM)
        s = (q[:, sl] @ k[:, sl].T) * scale
        p = jax.nn.softmax(s, axis=-1)
        parts.append(p @ v[:, sl])
    sa = jnp.concatenate(parts, axis=-1) @ l0["wo"] + l0["bo"]
    h_ = qtok + sa
    mu = jnp.mean(h_, axis=-1, keepdims=True)
    var = jnp.mean((h_ - mu) ** 2, axis=-1, keepdims=True)
    return (h_ - mu) * jax.lax.rsqrt(var + LN_EPS) * l0["ln1_g"] + l0["ln1_b"]


def init_params(key):
    keys = iter(jax.random.split(key, 64))

    def w(shape, scale=0.02):
        return jax.random.normal(next(keys), shape, jnp.float32) * scale

    zeros = lambda n: jnp.zeros((n,), jnp.float32)
    ones = lambda n: jnp.ones((n,), jnp.float32)

    # ---- raw parameters (stored (in, out), used as x @ W) ----
    enc1_w, enc1_b = w((ENC_IN, ENC_HIDDEN)), zeros(ENC_HIDDEN)
    enc2_w, enc2_b = w((ENC_HIDDEN, ENC_HIDDEN)), zeros(ENC_HIDDEN)
    enc3_w, enc3_b = w((ENC_HIDDEN, LATENT_DIM)), zeros(LATENT_DIM)
    act_w, act_b = w((ACTION_DIM, ACTION_EMB_DIM)), zeros(ACTION_EMB_DIM)
    proj_w, proj_b = w((LATENT_DIM + ACTION_EMB_DIM, DEC_DIM)), zeros(DEC_DIM)
    query_tokens = jax.random.normal(next(keys), (NUM_PATCHES, DEC_DIM), jnp.float32)
    pix_w, pix_b = w((DEC_DIM, OUT_PATCH_DIM)), zeros(OUT_PATCH_DIM)

    def layer():
        return dict(
            wq=w((DEC_DIM, DEC_DIM)), bq=zeros(DEC_DIM),
            wk=w((DEC_DIM, DEC_DIM)), bk=zeros(DEC_DIM),
            wv=w((DEC_DIM, DEC_DIM)), bv=zeros(DEC_DIM),
            wo=w((DEC_DIM, DEC_DIM)), bo=zeros(DEC_DIM),
            ca_wv=w((DEC_DIM, DEC_DIM)), ca_bv=zeros(DEC_DIM),
            ca_wo=w((DEC_DIM, DEC_DIM)), ca_bo=zeros(DEC_DIM),
            ff1_w=w((DEC_DIM, DEC_MLP_DIM)), ff1_b=zeros(DEC_MLP_DIM),
            ff2_w=w((DEC_MLP_DIM, DEC_DIM)), ff2_b=zeros(DEC_DIM),
            ln1_g=ones(DEC_DIM), ln1_b=zeros(DEC_DIM),
            ln2_g=ones(DEC_DIM), ln2_b=zeros(DEC_DIM),
            ln3_g=ones(DEC_DIM), ln3_b=zeros(DEC_DIM),
        )

    layers = [layer() for _ in range(DEC_DEPTH)]

    # ---- offline folding (exact algebra, one-time) ----
    proj_w_lat, proj_w_act = proj_w[:LATENT_DIM], proj_w[LATENT_DIM:]
    enc3p_w = enc3_w @ proj_w_lat                                 # (64, 32)
    actp_w = act_w @ proj_w_act                                   # (4, 32)
    mem_b = enc3_b @ proj_w_lat + act_b @ proj_w_act + proj_b     # (32,)
    ca_w = [l_["ca_wv"] @ l_["ca_wo"] for l_ in layers]           # cross-attn V·O folded
    ca_b = [l_["ca_bv"] @ l_["ca_wo"] + l_["ca_bo"] for l_ in layers]
    tgt0 = _layer0_self_attention(query_tokens, layers[0])        # (16, 32)

    # ---- pack into slabs (5 kernel operands total instead of ~30) ----
    l1 = layers[1]
    w64 = jnp.concatenate([
        enc1_w, enc2_w, layers[0]["ff1_w"], layers[1]["ff1_w"],
        jnp.pad(pix_w, ((0, 0), (0, VEC_WIDTH - OUT_PATCH_DIM))),
    ], axis=0)
    w32 = jnp.concatenate([
        enc3p_w,
        jnp.pad(actp_w, ((0, ACTP_PAD_ROWS - ACTION_DIM), (0, 0))),
        ca_w[0], ca_w[1], layers[0]["ff2_w"], layers[1]["ff2_w"],
        l1["wq"], l1["wk"], l1["wv"], l1["wo"], tgt0,
    ], axis=0)

    def row(vv):
        vv = jnp.asarray(vv, jnp.float32).reshape(-1)
        return jnp.pad(vv, (0, VEC_WIDTH - vv.shape[0]))[None, :]

    vec_rows = [row(enc1_b), row(enc2_b), row(mem_b), row(pix_b),
                row(l1["bq"]), row(l1["bk"]), row(l1["bv"]), row(l1["bo"]),
                row(l1["ln1_g"]), row(l1["ln1_b"])]
    for li, l_ in enumerate(layers):
        vec_rows += [row(ca_b[li]), row(l_["ff1_b"]), row(l_["ff2_b"]),
                     row(l_["ln2_g"]), row(l_["ln2_b"]), row(l_["ln3_g"]), row(l_["ln3_b"])]
    vec = jnp.concatenate(vec_rows, axis=0)

    assert w64.shape == (W64_ROWS, VEC_WIDTH), w64.shape
    assert w32.shape == (W32_ROWS, DEC_DIM), w32.shape
    assert vec.shape == (VEC_ROWS, VEC_WIDTH), vec.shape
    return {"w64": w64, "w32": w32, "vec": vec}


# --------------------------------- forward -----------------------------------
def forward(params, img, action):
    b = img.shape[0]
    img_flat = img.reshape(b, -1)                                 # NCHW flatten, like nn.Flatten

    patches = pl.pallas_call(
        _fused_forward_kernel,
        out_shape=jax.ShapeDtypeStruct((b * NUM_PATCHES, OUT_PATCH_DIM), jnp.float32),
        in_specs=[pl.BlockSpec(memory_space=pltpu.MemorySpace.VMEM)] * 5,
        out_specs=pl.BlockSpec(memory_space=pltpu.MemorySpace.VMEM),
    )(img_flat, action, params["w64"], params["w32"], params["vec"])

    # Rearrange '(b ph pw) (p1 p2 c) -> b c (ph p1) (pw p2)' (pure layout, in JAX)
    x = patches.reshape(b, NP_H, NP_W, DEC_PATCH, DEC_PATCH, OUT_CH)
    x = jnp.transpose(x, (0, 5, 1, 3, 2, 4))                      # b c ph p1 pw p2
    return x.reshape(b, OUT_CH, NP_H * DEC_PATCH, NP_W * DEC_PATCH)


if __name__ == "__main__":
    key = jax.random.PRNGKey(0)
    k_params, k_img, k_act = jax.random.split(key, 3)
    params = init_params(k_params)
    current_state_img = jax.random.normal(
        k_img, (BATCH, IN_CH, IMG_SIZE, IMG_SIZE), jnp.float32)
    action = jax.random.normal(k_act, (BATCH, ACTION_DIM), jnp.float32)

    out = jax.jit(forward)(params, current_state_img, action)
    jax.block_until_ready(out)
    assert out.shape == (BATCH, OUT_CH, OUT_IMG_SIZE, OUT_IMG_SIZE), out.shape
    assert out.dtype == jnp.float32
    print("KERNEL_OK")
</pallas_src>

<mosaic_0001>
module attributes {stable_mosaic.version = 11 : i64} {
  func.func @_fused_forward_kernel(%arg0: memref<2x768xf32, #tpu.memory_space<vmem>>, %arg1: memref<2x4xf32, #tpu.memory_space<vmem>>, %arg2: memref<928x64xf32, #tpu.memory_space<vmem>>, %arg3: memref<408x32xf32, #tpu.memory_space<vmem>>, %arg4: memref<24x64xf32, #tpu.memory_space<vmem>>, %arg5: memref<32x48xf32, #tpu.memory_space<vmem>>) attributes {dimension_semantics = [], scalar_prefetch = 0 : i64, scratch_operands = 0 : i64, tpu.core_type = #tpu.core_type<tc>} {
    %c0 = arith.constant 0 : index
    %c0_0 = arith.constant 0 : index
    %0 = vector.load %arg0[%c0, %c0_0] : memref<2x768xf32, #tpu.memory_space<vmem>>, vector<2x768xf32>
    %c0_1 = arith.constant 0 : index
    %c0_2 = arith.constant 0 : index
    %1 = vector.load %arg2[%c0_1, %c0_2] : memref<928x64xf32, #tpu.memory_space<vmem>>, vector<768x64xf32>
    %cst = arith.constant dense<0.000000e+00> : vector<2x64xf32>
    %2 = tpu.matmul %0, %1, %cst {dimension_numbers = #tpu.dot_dimension_numbers<[1], [0], [0], [1], [0, 0, 1, 1], [], []>} : vector<2x768xf32>, vector<768x64xf32>, vector<2x64xf32> -> vector<2x64xf32>
    %c0_3 = arith.constant 0 : index
    %c0_4 = arith.constant 0 : index
    %3 = vector.load %arg4[%c0_3, %c0_4] : memref<24x64xf32, #tpu.memory_space<vmem>>, vector<1x64xf32>
    %4 = vector.broadcast %3 : vector<1x64xf32> to vector<2x64xf32>
    %5 = arith.addf %2, %4 : vector<2x64xf32>
    %cst_5 = arith.constant 0.000000e+00 : f32
    %6 = vector.broadcast %cst_5 : f32 to vector<2x64xf32>
    %7 = arith.maximumf %5, %6 : vector<2x64xf32>
    %c768 = arith.constant 768 : index
    %c0_6 = arith.constant 0 : index
    %8 = vector.load %arg2[%c768, %c0_6] : memref<928x64xf32, #tpu.memory_space<vmem>>, vector<64x64xf32>
    %cst_7 = arith.constant dense<0.000000e+00> : vector<2x64xf32>
    %9 = tpu.matmul %7, %8, %cst_7 {dimension_numbers = #tpu.dot_dimension_numbers<[1], [0], [0], [1], [0, 0, 1, 1], [], []>} : vector<2x64xf32>, vector<64x64xf32>, vector<2x64xf32> -> vector<2x64xf32>
    %c1 = arith.constant 1 : index
    %c0_8 = arith.constant 0 : index
    %10 = vector.load %arg4[%c1, %c0_8] : memref<24x64xf32, #tpu.memory_space<vmem>>, vector<1x64xf32>
    %11 = vector.broadcast %10 : vector<1x64xf32> to vector<2x64xf32>
    %12 = arith.addf %9, %11 : vector<2x64xf32>
    %cst_9 = arith.constant 0.000000e+00 : f32
    %13 = vector.broadcast %cst_9 : f32 to vector<2x64xf32>
    %14 = arith.maximumf %12, %13 : vector<2x64xf32>
    %c0_10 = arith.constant 0 : index
    %c0_11 = arith.constant 0 : index
    %15 = vector.load %arg3[%c0_10, %c0_11] : memref<408x32xf32, #tpu.memory_space<vmem>>, vector<64x32xf32>
    %cst_12 = arith.constant dense<0.000000e+00> : vector<2x32xf32>
    %16 = tpu.matmul %14, %15, %cst_12 {dimension_numbers = #tpu.dot_dimension_numbers<[1], [0], [0], [1], [0, 0, 1, 1], [], []>} : vector<2x64xf32>, vector<64x32xf32>, vector<2x32xf32> -> vector<2x32xf32>
    %c0_13 = arith.constant 0 : index
    %c0_14 = arith.constant 0 : index
    %17 = vector.load %arg1[%c0_13, %c0_14] : memref<2x4xf32, #tpu.memory_space<vmem>>, vector<2x4xf32>
    %c64 = arith.constant 64 : index
    %c0_15 = arith.constant 0 : index
    %18 = vector.load %arg3[%c64, %c0_15] : memref<408x32xf32, #tpu.memory_space<vmem>>, vector<4x32xf32>
    %cst_16 = arith.constant dense<0.000000e+00> : vector<2x32xf32>
    %19 = tpu.matmul %17, %18, %cst_16 {dimension_numbers = #tpu.dot_dimension_numbers<[1], [0], [0], [1], [0, 0, 1, 1], [], []>} : vector<2x4xf32>, vector<4x32xf32>, vector<2x32xf32> -> vector<2x32xf32>
    %20 = arith.addf %16, %19 : vector<2x32xf32>
    %c2 = arith.constant 2 : index
    %c0_17 = arith.constant 0 : index
    %21 = vector.load %arg4[%c2, %c0_17] : memref<24x64xf32, #tpu.memory_space<vmem>>, vector<1x32xf32>
    %22 = vector.broadcast %21 : vector<1x32xf32> to vector<2x32xf32>
    %23 = arith.addf %20, %22 : vector<2x32xf32>
    %c392 = arith.constant 392 : index
    %c0_18 = arith.constant 0 : index
    %24 = vector.load %arg3[%c392, %c0_18] : memref<408x32xf32, #tpu.memory_space<vmem>>, vector<16x32xf32>
    %25 = vector.shape_cast %24 : vector<16x32xf32> to vector<1x16x32xf32>
    %c72 = arith.constant 72 : index
    %c0_19 = arith.constant 0 : index
    %26 = vector.load %arg3[%c72, %c0_19] : memref<408x32xf32, #tpu.memory_space<vmem>>, vector<32x32xf32>
    %cst_20 = arith.constant dense<0.000000e+00> : vector<2x32xf32>
    %27 = tpu.matmul %23, %26, %cst_20 {dimension_numbers = #tpu.dot_dimension_numbers<[1], [0], [0], [1], [0, 0, 1, 1], [], []>} : vector<2x32xf32>, vector<32x32xf32>, vector<2x32xf32> -> vector<2x32xf32>
    %c10 = arith.constant 10 : index
    %c0_21 = arith.constant 0 : index
    %28 = vector.load %arg4[%c10, %c0_21] : memref<24x64xf32, #tpu.memory_space<vmem>>, vector<1x32xf32>
    %29 = vector.broadcast %28 : vector<1x32xf32> to vector<2x32xf32>
    %30 = arith.addf %27, %29 : vector<2x32xf32>
    %31 = vector.shape_cast %30 : vector<2x32xf32> to vector<2x1x32xf32>
    %32 = vector.broadcast %31 : vector<2x1x32xf32> to vector<2x16x32xf32>
    %33 = vector.broadcast %25 : vector<1x16x32xf32> to vector<2x16x32xf32>
    %34 = arith.addf %32, %33 : vector<2x16x32xf32>
    %cst_22 = arith.constant dense<0.000000e+00> : vector<2x16xf32>
    %35 = vector.multi_reduction <add>, %34, %cst_22 [2] : vector<2x16x32xf32> to vector<2x16xf32>
    %36 = vector.shape_cast %35 : vector<2x16xf32> to vector<2x16x1xf32>
    %cst_23 = arith.constant 3.200000e+01 : f32
    %37 = vector.broadcast %cst_23 : f32 to vector<2x16x1xf32>
    %38 = arith.divf %36, %37 : vector<2x16x1xf32>
    %39 = arith.mulf %34, %34 : vector<2x16x32xf32>
    %cst_24 = arith.constant dense<0.000000e+00> : vector<2x16xf32>
    %40 = vector.multi_reduction <add>, %39, %cst_24 [2] : vector<2x16x32xf32> to vector<2x16xf32>
    %41 = vector.shape_cast %40 : vector<2x16xf32> to vector<2x16x1xf32>
    %cst_25 = arith.constant 3.200000e+01 : f32
    %42 = vector.broadcast %cst_25 : f32 to vector<2x16x1xf32>
    %43 = arith.divf %41, %42 : vector<2x16x1xf32>
    %44 = arith.mulf %38, %38 : vector<2x16x1xf32>
    %45 = arith.subf %43, %44 : vector<2x16x1xf32>
    %cst_26 = arith.constant 9.99999974E-6 : f32
    %46 = vector.broadcast %cst_26 : f32 to vector<2x16x1xf32>
    %47 = arith.addf %45, %46 : vector<2x16x1xf32>
    %48 = math.rsqrt %47 : vector<2x16x1xf32>
    %49 = vector.broadcast %38 : vector<2x16x1xf32> to vector<2x16x32xf32>
    %50 = arith.subf %34, %49 : vector<2x16x32xf32>
    %51 = vector.broadcast %48 : vector<2x16x1xf32> to vector<2x16x32xf32>
    %52 = arith.mulf %50, %51 : vector<2x16x32xf32>
    %c13 = arith.constant 13 : index
    %c0_27 = arith.constant 0 : index
    %53 = vector.load %arg4[%c13, %c0_27] : memref<24x64xf32, #tpu.memory_space<vmem>>, vector<1x32xf32>
    %54 = vector.shape_cast %53 : vector<1x32xf32> to vector<1x1x32xf32>
    %55 = vector.broadcast %54 : vector<1x1x32xf32> to vector<2x16x32xf32>
    %56 = arith.mulf %52, %55 : vector<2x16x32xf32>
    %c14 = arith.constant 14 : index
    %c0_28 = arith.constant 0 : index
    %57 = vector.load %arg4[%c14, %c0_28] : memref<24x64xf32, #tpu.memory_space<vmem>>, vector<1x32xf32>
    %58 = vector.shape_cast %57 : vector<1x32xf32> to vector<1x1x32xf32>
    %59 = vector.broadcast %58 : vector<1x1x32xf32> to vector<2x16x32xf32>
    %60 = arith.addf %56, %59 : vector<2x16x32xf32>
    %61 = vector.shape_cast %60 : vector<2x16x32xf32> to vector<32x32xf32>
    %c832 = arith.constant 832 : index
    %c0_29 = arith.constant 0 : index
    %62 = vector.load %arg2[%c832, %c0_29] : memref<928x64xf32, #tpu.memory_space<vmem>>, vector<32x64xf32>
    %cst_30 = arith.constant dense<0.000000e+00> : vector<32x64xf32>
    %63 = tpu.matmul %61, %62, %cst_30 {dimension_numbers = #tpu.dot_dimension_numbers<[1], [0], [0], [1], [0, 0, 1, 1], [], []>} : vector<32x32xf32>, vector<32x64xf32>, vector<32x64xf32> -> vector<32x64xf32>
    %c11 = arith.constant 11 : index
    %c0_31 = arith.constant 0 : index
    %64 = vector.load %arg4[%c11, %c0_31] : memref<24x64xf32, #tpu.memory_space<vmem>>, vector<1x64xf32>
    %65 = vector.broadcast %64 : vector<1x64xf32> to vector<32x64xf32>
    %66 = arith.addf %63, %65 : vector<32x64xf32>
    %cst_32 = arith.constant 0.000000e+00 : f32
    %67 = vector.broadcast %cst_32 : f32 to vector<32x64xf32>
    %68 = arith.maximumf %66, %67 : vector<32x64xf32>
    %c136 = arith.constant 136 : index
    %c0_33 = arith.constant 0 : index
    %69 = vector.load %arg3[%c136, %c0_33] : memref<408x32xf32, #tpu.memory_space<vmem>>, vector<64x32xf32>
    %cst_34 = arith.constant dense<0.000000e+00> : vector<32x32xf32>
    %70 = tpu.matmul %68, %69, %cst_34 {dimension_numbers = #tpu.dot_dimension_numbers<[1], [0], [0], [1], [0, 0, 1, 1], [], []>} : vector<32x64xf32>, vector<64x32xf32>, vector<32x32xf32> -> vector<32x32xf32>
    %c12 = arith.constant 12 : index
    %c0_35 = arith.constant 0 : index
    %71 = vector.load %arg4[%c12, %c0_35] : memref<24x64xf32, #tpu.memory_space<vmem>>, vector<1x32xf32>
    %72 = vector.broadcast %71 : vector<1x32xf32> to vector<32x32xf32>
    %73 = arith.addf %70, %72 : vector<32x32xf32>
    %74 = arith.addf %73, %61 : vector<32x32xf32>
    %cst_36 = arith.constant dense<0.000000e+00> : vector<32xf32>
    %75 = vector.multi_reduction <add>, %74, %cst_36 [1] : vector<32x32xf32> to vector<32xf32>
    %76 = vector.shape_cast %75 : vector<32xf32> to vector<32x1xf32>
    %cst_37 = arith.constant 3.200000e+01 : f32
    %77 = vector.broadcast %cst_37 : f32 to vector<32x1xf32>
    %78 = arith.divf %76, %77 : vector<32x1xf32>
    %79 = arith.mulf %74, %74 : vector<32x32xf32>
    %cst_38 = arith.constant dense<0.000000e+00> : vector<32xf32>
    %80 = vector.multi_reduction <add>, %79, %cst_38 [1] : vector<32x32xf32> to vector<32xf32>
    %81 = vector.shape_cast %80 : vector<32xf32> to vector<32x1xf32>
    %cst_39 = arith.constant 3.200000e+01 : f32
    %82 = vector.broadcast %cst_39 : f32 to vector<32x1xf32>
    %83 = arith.divf %81, %82 : vector<32x1xf32>
    %84 = arith.mulf %78, %78 : vector<32x1xf32>
    %85 = arith.subf %83, %84 : vector<32x1xf32>
    %cst_40 = arith.constant 9.99999974E-6 : f32
    %86 = vector.broadcast %cst_40 : f32 to vector<32x1xf32>
    %87 = arith.addf %85, %86 : vector<32x1xf32>
    %88 = math.rsqrt %87 : vector<32x1xf32>
    %89 = vector.broadcast %78 : vector<32x1xf32> to vector<32x32xf32>
    %90 = arith.subf %74, %89 : vector<32x32xf32>
    %91 = vector.broadcast %88 : vector<32x1xf32> to vector<32x32xf32>
    %92 = arith.mulf %90, %91 : vector<32x32xf32>
    %c15 = arith.constant 15 : index
    %c0_41 = arith.constant 0 : index
    %93 = vector.load %arg4[%c15, %c0_41] : memref<24x64xf32, #tpu.memory_space<vmem>>, vector<1x32xf32>
    %94 = vector.broadcast %93 : vector<1x32xf32> to vector<32x32xf32>
    %95 = arith.mulf %92, %94 : vector<32x32xf32>
    %c16 = arith.constant 16 : index
    %c0_42 = arith.constant 0 : index
    %96 = vector.load %arg4[%c16, %c0_42] : memref<24x64xf32, #tpu.memory_space<vmem>>, vector<1x32xf32>
    %97 = vector.broadcast %96 : vector<1x32xf32> to vector<32x32xf32>
    %98 = arith.addf %95, %97 : vector<32x32xf32>
    %c264 = arith.constant 264 : index
    %c0_43 = arith.constant 0 : index
    %99 = vector.load %arg3[%c264, %c0_43] : memref<408x32xf32, #tpu.memory_space<vmem>>, vector<32x32xf32>
    %cst_44 = arith.constant dense<0.000000e+00> : vector<32x32xf32>
    %100 = tpu.matmul %98, %99, %cst_44 {dimension_numbers = #tpu.dot_dimension_numbers<[1], [0], [0], [1], [0, 0, 1, 1], [], []>} : vector<32x32xf32>, vector<32x32xf32>, vector<32x32xf32> -> vector<32x32xf32>
    %c4 = arith.constant 4 : index
    %c0_45 = arith.constant 0 : index
    %101 = vector.load %arg4[%c4, %c0_45] : memref<24x64xf32, #tpu.memory_space<vmem>>, vector<1x32xf32>
    %102 = vector.broadcast %101 : vector<1x32xf32> to vector<32x32xf32>
    %103 = arith.addf %100, %102 : vector<32x32xf32>
    %c296 = arith.constant 296 : index
    %c0_46 = arith.constant 0 : index
    %104 = vector.load %arg3[%c296, %c0_46] : memref<408x32xf32, #tpu.memory_space<vmem>>, vector<32x32xf32>
    %cst_47 = arith.constant dense<0.000000e+00> : vector<32x32xf32>
    %105 = tpu.matmul %98, %104, %cst_47 {dimension_numbers = #tpu.dot_dimension_numbers<[1], [0], [0], [1], [0, 0, 1, 1], [], []>} : vector<32x32xf32>, vector<32x32xf32>, vector<32x32xf32> -> vector<32x32xf32>
    %c5 = arith.constant 5 : index
    %c0_48 = arith.constant 0 : index
    %106 = vector.load %arg4[%c5, %c0_48] : memref<24x64xf32, #tpu.memory_space<vmem>>, vector<1x32xf32>
    %107 = vector.broadcast %106 : vector<1x32xf32> to vector<32x32xf32>
    %108 = arith.addf %105, %107 : vector<32x32xf32>
    %c328 = arith.constant 328 : index
    %c0_49 = arith.constant 0 : index
    %109 = vector.load %arg3[%c328, %c0_49] : memref<408x32xf32, #tpu.memory_space<vmem>>, vector<32x32xf32>
    %cst_50 = arith.constant dense<0.000000e+00> : vector<32x32xf32>
    %110 = tpu.matmul %98, %109, %cst_50 {dimension_numbers = #tpu.dot_dimension_numbers<[1], [0], [0], [1], [0, 0, 1, 1], [], []>} : vector<32x32xf32>, vector<32x32xf32>, vector<32x32xf32> -> vector<32x32xf32>
    %c6 = arith.constant 6 : index
    %c0_51 = arith.constant 0 : index
    %111 = vector.load %arg4[%c6, %c0_51] : memref<24x64xf32, #tpu.memory_space<vmem>>, vector<1x32xf32>
    %112 = vector.broadcast %111 : vector<1x32xf32> to vector<32x32xf32>
    %113 = arith.addf %110, %112 : vector<32x32xf32>
    %114 = vector.shape_cast %103 : vector<32x32xf32> to vector<2x16x32xf32>
    %115 = vector.shape_cast %108 : vector<32x32xf32> to vector<2x16x32xf32>
    %116 = vector.shape_cast %113 : vector<32x32xf32> to vector<2x16x32xf32>
    %117 = vector.extract_strided_slice %114 {offsets = [0, 0, 0], sizes = [2, 16, 8], strides = [1, 1, 1]} : vector<2x16x32xf32> to vector<2x16x8xf32>
    %118 = vector.extract_strided_slice %115 {offsets = [0, 0, 0], sizes = [2, 16, 8], strides = [1, 1, 1]} : vector<2x16x32xf32> to vector<2x16x8xf32>
    "tpu.trace_start"() <{level = 10 : i32, message = "bqd,bkd->bqk"}> : () -> ()
    %cst_52 = arith.constant dense<0.000000e+00> : vector<2x16x16xf32>
    %119 = tpu.matmul %117, %118, %cst_52 {dimension_numbers = #tpu.dot_dimension_numbers<[2], [2], [1], [1], [0, 0, 0, 1, 1, 1], [0], [0]>} : vector<2x16x8xf32>, vector<2x16x8xf32>, vector<2x16x16xf32> -> vector<2x16x16xf32>
    "tpu.trace_stop"() : () -> ()
    %cst_53 = arith.constant 0.353553385 : f32
    %120 = vector.broadcast %cst_53 : f32 to vector<2x16x16xf32>
    %121 = arith.mulf %119, %120 : vector<2x16x16xf32>
    %cst_54 = arith.constant dense<0xFF800000> : vector<2x16xf32>
    %122 = vector.multi_reduction <maximumf>, %121, %cst_54 [2] : vector<2x16x16xf32> to vector<2x16xf32>
    %123 = vector.shape_cast %122 : vector<2x16xf32> to vector<2x16x1xf32>
    %124 = vector.broadcast %123 : vector<2x16x1xf32> to vector<2x16x16xf32>
    %125 = arith.subf %121, %124 : vector<2x16x16xf32>
    %126 = math.exp %125 : vector<2x16x16xf32>
    %cst_55 = arith.constant dense<0.000000e+00> : vector<2x16xf32>
    %127 = vector.multi_reduction <add>, %126, %cst_55 [2] : vector<2x16x16xf32> to vector<2x16xf32>
    %128 = vector.shape_cast %127 : vector<2x16xf32> to vector<2x16x1xf32>
    %129 = vector.broadcast %128 : vector<2x16x1xf32> to vector<2x16x16xf32>
    %130 = arith.divf %126, %129 : vector<2x16x16xf32>
    %131 = vector.extract_strided_slice %116 {offsets = [0, 0, 0], sizes = [2, 16, 8], strides = [1, 1, 1]} : vector<2x16x32xf32> to vector<2x16x8xf32>
    "tpu.trace_start"() <{level = 10 : i32, message = "bqk,bkd->bqd"}> : () -> ()
    %cst_56 = arith.constant dense<0.000000e+00> : vector<2x16x8xf32>
    %132 = tpu.matmul %130, %131, %cst_56 {dimension_numbers = #tpu.dot_dimension_numbers<[2], [1], [1], [2], [0, 0, 0, 1, 1, 2], [0], [0]>} : vector<2x16x16xf32>, vector<2x16x8xf32>, vector<2x16x8xf32> -> vector<2x16x8xf32>
    "tpu.trace_stop"() : () -> ()
    %133 = vector.shape_cast %132 : vector<2x16x8xf32> to vector<32x8xf32>
    %c360 = arith.constant 360 : index
    %c0_57 = arith.constant 0 : index
    %134 = vector.load %arg3[%c360, %c0_57] : memref<408x32xf32, #tpu.memory_space<vmem>>, vector<8x32xf32>
    %cst_58 = arith.constant dense<0.000000e+00> : vector<32x32xf32>
    %135 = tpu.matmul %133, %134, %cst_58 {dimension_numbers = #tpu.dot_dimension_numbers<[1], [0], [0], [1], [0, 0, 1, 1], [], []>} : vector<32x8xf32>, vector<8x32xf32>, vector<32x32xf32> -> vector<32x32xf32>
    %136 = vector.extract_strided_slice %114 {offsets = [0, 0, 8], sizes = [2, 16, 8], strides = [1, 1, 1]} : vector<2x16x32xf32> to vector<2x16x8xf32>
    %137 = vector.extract_strided_slice %115 {offsets = [0, 0, 8], sizes = [2, 16, 8], strides = [1, 1, 1]} : vector<2x16x32xf32> to vector<2x16x8xf32>
    "tpu.trace_start"() <{level = 10 : i32, message = "bqd,bkd->bqk"}> : () -> ()
    %cst_59 = arith.constant dense<0.000000e+00> : vector<2x16x16xf32>
    %138 = tpu.matmul %136, %137, %cst_59 {dimension_numbers = #tpu.dot_dimension_numbers<[2], [2], [1], [1], [0, 0, 0, 1, 1, 1], [0], [0]>} : vector<2x16x8xf32>, vector<2x16x8xf32>, vector<2x16x16xf32> -> vector<2x16x16xf32>
    "tpu.trace_stop"() : () -> ()
    %cst_60 = arith.constant 0.353553385 : f32
    %139 = vector.broadcast %cst_60 : f32 to vector<2x16x16xf32>
    %140 = arith.mulf %138, %139 : vector<2x16x16xf32>
    %cst_61 = arith.constant dense<0xFF800000> : vector<2x16xf32>
    %141 = vector.multi_reduction <maximumf>, %140, %cst_61 [2] : vector<2x16x16xf32> to vector<2x16xf32>
    %142 = vector.shape_cast %141 : vector<2x16xf32> to vector<2x16x1xf32>
    %143 = vector.broadcast %142 : vector<2x16x1xf32> to vector<2x16x16xf32>
    %144 = arith.subf %140, %143 : vector<2x16x16xf32>
    %145 = math.exp %144 : vector<2x16x16xf32>
    %cst_62 = arith.constant dense<0.000000e+00> : vector<2x16xf32>
    %146 = vector.multi_reduction <add>, %145, %cst_62 [2] : vector<2x16x16xf32> to vector<2x16xf32>
    %147 = vector.shape_cast %146 : vector<2x16xf32> to vector<2x16x1xf32>
    %148 = vector.broadcast %147 : vector<2x16x1xf32> to vector<2x16x16xf32>
    %149 = arith.divf %145, %148 : vector<2x16x16xf32>
    %150 = vector.extract_strided_slice %116 {offsets = [0, 0, 8], sizes = [2, 16, 8], strides = [1, 1, 1]} : vector<2x16x32xf32> to vector<2x16x8xf32>
    "tpu.trace_start"() <{level = 10 : i32, message = "bqk,bkd->bqd"}> : () -> ()
    %cst_63 = arith.constant dense<0.000000e+00> : vector<2x16x8xf32>
    %151 = tpu.matmul %149, %150, %cst_63 {dimension_numbers = #tpu.dot_dimension_numbers<[2], [1], [1], [2], [0, 0, 0, 1, 1, 2], [0], [0]>} : vector<2x16x16xf32>, vector<2x16x8xf32>, vector<2x16x8xf32> -> vector<2x16x8xf32>
    "tpu.trace_stop"() : () -> ()
    %152 = vector.shape_cast %151 : vector<2x16x8xf32> to vector<32x8xf32>
    %c368 = arith.constant 368 : index
    %c0_64 = arith.constant 0 : index
    %153 = vector.load %arg3[%c368, %c0_64] : memref<408x32xf32, #tpu.memory_space<vmem>>, vector<8x32xf32>
    %cst_65 = arith.constant dense<0.000000e+00> : vector<32x32xf32>
    %154 = tpu.matmul %152, %153, %cst_65 {dimension_numbers = #tpu.dot_dimension_numbers<[1], [0], [0], [1], [0, 0, 1, 1], [], []>} : vector<32x8xf32>, vector<8x32xf32>, vector<32x32xf32> -> vector<32x32xf32>
    %155 = arith.addf %135, %154 : vector<32x32xf32>
    %156 = vector.extract_strided_slice %114 {offsets = [0, 0, 16], sizes = [2, 16, 8], strides = [1, 1, 1]} : vector<2x16x32xf32> to vector<2x16x8xf32>
    %157 = vector.extract_strided_slice %115 {offsets = [0, 0, 16], sizes = [2, 16, 8], strides = [1, 1, 1]} : vector<2x16x32xf32> to vector<2x16x8xf32>
    "tpu.trace_start"() <{level = 10 : i32, message = "bqd,bkd->bqk"}> : () -> ()
    %cst_66 = arith.constant dense<0.000000e+00> : vector<2x16x16xf32>
    %158 = tpu.matmul %156, %157, %cst_66 {dimension_numbers = #tpu.dot_dimension_numbers<[2], [2], [1], [1], [0, 0, 0, 1, 1, 1], [0], [0]>} : vector<2x16x8xf32>, vector<2x16x8xf32>, vector<2x16x16xf32> -> vector<2x16x16xf32>
    "tpu.trace_stop"() : () -> ()
    %cst_67 = arith.constant 0.353553385 : f32
    %159 = vector.broadcast %cst_67 : f32 to vector<2x16x16xf32>
    %160 = arith.mulf %158, %159 : vector<2x16x16xf32>
    %cst_68 = arith.constant dense<0xFF800000> : vector<2x16xf32>
    %161 = vector.multi_reduction <maximumf>, %160, %cst_68 [2] : vector<2x16x16xf32> to vector<2x16xf32>
    %162 = vector.shape_cast %161 : vector<2x16xf32> to vector<2x16x1xf32>
    %163 = vector.broadcast %162 : vector<2x16x1xf32> to vector<2x16x16xf32>
    %164 = arith.subf %160, %163 : vector<2x16x16xf32>
    %165 = math.exp %164 : vector<2x16x16xf32>
    %cst_69 = arith.constant dense<0.000000e+00> : vector<2x16xf32>
    %166 = vector.multi_reduction <add>, %165, %cst_69 [2] : vector<2x16x16xf32> to vector<2x16xf32>
    %167 = vector.shape_cast %166 : vector<2x16xf32> to vector<2x16x1xf32>
    %168 = vector.broadcast %167 : vector<2x16x1xf32> to vector<2x16x16xf32>
    %169 = arith.divf %165, %168 : vector<2x16x16xf32>
    %170 = vector.extract_strided_slice %116 {offsets = [0, 0, 16], sizes = [2, 16, 8], strides = [1, 1, 1]} : vector<2x16x32xf32> to vector<2x16x8xf32>
    "tpu.trace_start"() <{level = 10 : i32, message = "bqk,bkd->bqd"}> : () -> ()
    %cst_70 = arith.constant dense<0.000000e+00> : vector<2x16x8xf32>
    %171 = tpu.matmul %169, %170, %cst_70 {dimension_numbers = #tpu.dot_dimension_numbers<[2], [1], [1], [2], [0, 0, 0, 1, 1, 2], [0], [0]>} : vector<2x16x16xf32>, vector<2x16x8xf32>, vector<2x16x8xf32> -> vector<2x16x8xf32>
    "tpu.trace_stop"() : () -> ()
    %172 = vector.shape_cast %171 : vector<2x16x8xf32> to vector<32x8xf32>
    %c376 = arith.constant 376 : index
    %c0_71 = arith.constant 0 : index
    %173 = vector.load %arg3[%c376, %c0_71] : memref<408x32xf32, #tpu.memory_space<vmem>>, vector<8x32xf32>
    %cst_72 = arith.constant dense<0.000000e+00> : vector<32x32xf32>
    %174 = tpu.matmul %172, %173, %cst_72 {dimension_numbers = #tpu.dot_dimension_numbers<[1], [0], [0], [1], [0, 0, 1, 1], [], []>} : vector<32x8xf32>, vector<8x32xf32>, vector<32x32xf32> -> vector<32x32xf32>
    %175 = arith.addf %155, %174 : vector<32x32xf32>
    %176 = vector.extract_strided_slice %114 {offsets = [0, 0, 24], sizes = [2, 16, 8], strides = [1, 1, 1]} : vector<2x16x32xf32> to vector<2x16x8xf32>
    %177 = vector.extract_strided_slice %115 {offsets = [0, 0, 24], sizes = [2, 16, 8], strides = [1, 1, 1]} : vector<2x16x32xf32> to vector<2x16x8xf32>
    "tpu.trace_start"() <{level = 10 : i32, message = "bqd,bkd->bqk"}> : () -> ()
    %cst_73 = arith.constant dense<0.000000e+00> : vector<2x16x16xf32>
    %178 = tpu.matmul %176, %177, %cst_73 {dimension_numbers = #tpu.dot_dimension_numbers<[2], [2], [1], [1], [0, 0, 0, 1, 1, 1], [0], [0]>} : vector<2x16x8xf32>, vector<2x16x8xf32>, vector<2x16x16xf32> -> vector<2x16x16xf32>
    "tpu.trace_stop"() : () -> ()
    %cst_74 = arith.constant 0.353553385 : f32
    %179 = vector.broadcast %cst_74 : f32 to vector<2x16x16xf32>
    %180 = arith.mulf %178, %179 : vector<2x16x16xf32>
    %cst_75 = arith.constant dense<0xFF800000> : vector<2x16xf32>
    %181 = vector.multi_reduction <maximumf>, %180, %cst_75 [2] : vector<2x16x16xf32> to vector<2x16xf32>
    %182 = vector.shape_cast %181 : vector<2x16xf32> to vector<2x16x1xf32>
    %183 = vector.broadcast %182 : vector<2x16x1xf32> to vector<2x16x16xf32>
    %184 = arith.subf %180, %183 : vector<2x16x16xf32>
    %185 = math.exp %184 : vector<2x16x16xf32>
    %cst_76 = arith.constant dense<0.000000e+00> : vector<2x16xf32>
    %186 = vector.multi_reduction <add>, %185, %cst_76 [2] : vector<2x16x16xf32> to vector<2x16xf32>
    %187 = vector.shape_cast %186 : vector<2x16xf32> to vector<2x16x1xf32>
    %188 = vector.broadcast %187 : vector<2x16x1xf32> to vector<2x16x16xf32>
    %189 = arith.divf %185, %188 : vector<2x16x16xf32>
    %190 = vector.extract_strided_slice %116 {offsets = [0, 0, 24], sizes = [2, 16, 8], strides = [1, 1, 1]} : vector<2x16x32xf32> to vector<2x16x8xf32>
    "tpu.trace_start"() <{level = 10 : i32, message = "bqk,bkd->bqd"}> : () -> ()
    %cst_77 = arith.constant dense<0.000000e+00> : vector<2x16x8xf32>
    %191 = tpu.matmul %189, %190, %cst_77 {dimension_numbers = #tpu.dot_dimension_numbers<[2], [1], [1], [2], [0, 0, 0, 1, 1, 2], [0], [0]>} : vector<2x16x16xf32>, vector<2x16x8xf32>, vector<2x16x8xf32> -> vector<2x16x8xf32>
    "tpu.trace_stop"() : () -> ()
    %192 = vector.shape_cast %191 : vector<2x16x8xf32> to vector<32x8xf32>
    %c384 = arith.constant 384 : index
    %c0_78 = arith.constant 0 : index
    %193 = vector.load %arg3[%c384, %c0_78] : memref<408x32xf32, #tpu.memory_space<vmem>>, vector<8x32xf32>
    %cst_79 = arith.constant dense<0.000000e+00> : vector<32x32xf32>
    %194 = tpu.matmul %192, %193, %cst_79 {dimension_numbers = #tpu.dot_dimension_numbers<[1], [0], [0], [1], [0, 0, 1, 1], [], []>} : vector<32x8xf32>, vector<8x32xf32>, vector<32x32xf32> -> vector<32x32xf32>
    %195 = arith.addf %175, %194 : vector<32x32xf32>
    %c7 = arith.constant 7 : index
    %c0_80 = arith.constant 0 : index
    %196 = vector.load %arg4[%c7, %c0_80] : memref<24x64xf32, #tpu.memory_space<vmem>>, vector<1x32xf32>
    %197 = vector.broadcast %196 : vector<1x32xf32> to vector<32x32xf32>
    %198 = arith.addf %195, %197 : vector<32x32xf32>
    %199 = arith.addf %198, %98 : vector<32x32xf32>
    %cst_81 = arith.constant dense<0.000000e+00> : vector<32xf32>
    %200 = vector.multi_reduction <add>, %199, %cst_81 [1] : vector<32x32xf32> to vector<32xf32>
    %201 = vector.shape_cast %200 : vector<32xf32> to vector<32x1xf32>
    %cst_82 = arith.constant 3.200000e+01 : f32
    %202 = vector.broadcast %cst_82 : f32 to vector<32x1xf32>
    %203 = arith.divf %201, %202 : vector<32x1xf32>
    %204 = arith.mulf %199, %199 : vector<32x32xf32>
    %cst_83 = arith.constant dense<0.000000e+00> : vector<32xf32>
    %205 = vector.multi_reduction <add>, %204, %cst_83 [1] : vector<32x32xf32> to vector<32xf32>
    %206 = vector.shape_cast %205 : vector<32xf32> to vector<32x1xf32>
    %cst_84 = arith.constant 3.200000e+01 : f32
    %207 = vector.broadcast %cst_84 : f32 to vector<32x1xf32>
    %208 = arith.divf %206, %207 : vector<32x1xf32>
    %209 = arith.mulf %203, %203 : vector<32x1xf32>
    %210 = arith.subf %208, %209 : vector<32x1xf32>
    %cst_85 = arith.constant 9.99999974E-6 : f32
    %211 = vector.broadcast %cst_85 : f32 to vector<32x1xf32>
    %212 = arith.addf %210, %211 : vector<32x1xf32>
    %213 = math.rsqrt %212 : vector<32x1xf32>
    %214 = vector.broadcast %203 : vector<32x1xf32> to vector<32x32xf32>
    %215 = arith.subf %199, %214 : vector<32x32xf32>
    %216 = vector.broadcast %213 : vector<32x1xf32> to vector<32x32xf32>
    %217 = arith.mulf %215, %216 : vector<32x32xf32>
    %c8 = arith.constant 8 : index
    %c0_86 = arith.constant 0 : index
    %218 = vector.load %arg4[%c8, %c0_86] : memref<24x64xf32, #tpu.memory_space<vmem>>, vector<1x32xf32>
    %219 = vector.broadcast %218 : vector<1x32xf32> to vector<32x32xf32>
    %220 = arith.mulf %217, %219 : vector<32x32xf32>
    %c9 = arith.constant 9 : index
    %c0_87 = arith.constant 0 : index
    %221 = vector.load %arg4[%c9, %c0_87] : memref<24x64xf32, #tpu.memory_space<vmem>>, vector<1x32xf32>
    %222 = vector.broadcast %221 : vector<1x32xf32> to vector<32x32xf32>
    %223 = arith.addf %220, %222 : vector<32x32xf32>
    %224 = vector.shape_cast %223 : vector<32x32xf32> to vector<2x16x32xf32>
    %c104 = arith.constant 104 : index
    %c0_88 = arith.constant 0 : index
    %225 = vector.load %arg3[%c104, %c0_88] : memref<408x32xf32, #tpu.memory_space<vmem>>, vector<32x32xf32>
    %cst_89 = arith.constant dense<0.000000e+00> : vector<2x32xf32>
    %226 = tpu.matmul %23, %225, %cst_89 {dimension_numbers = #tpu.dot_dimension_numbers<[1], [0], [0], [1], [0, 0, 1, 1], [], []>} : vector<2x32xf32>, vector<32x32xf32>, vector<2x32xf32> -> vector<2x32xf32>
    %c17 = arith.constant 17 : index
    %c0_90 = arith.constant 0 : index
    %227 = vector.load %arg4[%c17, %c0_90] : memref<24x64xf32, #tpu.memory_space<vmem>>, vector<1x32xf32>
    %228 = vector.broadcast %227 : vector<1x32xf32> to vector<2x32xf32>
    %229 = arith.addf %226, %228 : vector<2x32xf32>
    %230 = vector.shape_cast %229 : vector<2x32xf32> to vector<2x1x32xf32>
    %231 = vector.broadcast %230 : vector<2x1x32xf32> to vector<2x16x32xf32>
    %232 = arith.addf %231, %224 : vector<2x16x32xf32>
    %cst_91 = arith.constant dense<0.000000e+00> : vector<2x16xf32>
    %233 = vector.multi_reduction <add>, %232, %cst_91 [2] : vector<2x16x32xf32> to vector<2x16xf32>
    %234 = vector.shape_cast %233 : vector<2x16xf32> to vector<2x16x1xf32>
    %cst_92 = arith.constant 3.200000e+01 : f32
    %235 = vector.broadcast %cst_92 : f32 to vector<2x16x1xf32>
    %236 = arith.divf %234, %235 : vector<2x16x1xf32>
    %237 = arith.mulf %232, %232 : vector<2x16x32xf32>
    %cst_93 = arith.constant dense<0.000000e+00> : vector<2x16xf32>
    %238 = vector.multi_reduction <add>, %237, %cst_93 [2] : vector<2x16x32xf32> to vector<2x16xf32>
    %239 = vector.shape_cast %238 : vector<2x16xf32> to vector<2x16x1xf32>
    %cst_94 = arith.constant 3.200000e+01 : f32
    %240 = vector.broadcast %cst_94 : f32 to vector<2x16x1xf32>
    %241 = arith.divf %239, %240 : vector<2x16x1xf32>
    %242 = arith.mulf %236, %236 : vector<2x16x1xf32>
    %243 = arith.subf %241, %242 : vector<2x16x1xf32>
    %cst_95 = arith.constant 9.99999974E-6 : f32
    %244 = vector.broadcast %cst_95 : f32 to vector<2x16x1xf32>
    %245 = arith.addf %243, %244 : vector<2x16x1xf32>
    %246 = math.rsqrt %245 : vector<2x16x1xf32>
    %247 = vector.broadcast %236 : vector<2x16x1xf32> to vector<2x16x32xf32>
    %248 = arith.subf %232, %247 : vector<2x16x32xf32>
    %249 = vector.broadcast %246 : vector<2x16x1xf32> to vector<2x16x32xf32>
    %250 = arith.mulf %248, %249 : vector<2x16x32xf32>
    %c20 = arith.constant 20 : index
    %c0_96 = arith.constant 0 : index
    %251 = vector.load %arg4[%c20, %c0_96] : memref<24x64xf32, #tpu.memory_space<vmem>>, vector<1x32xf32>
    %252 = vector.shape_cast %251 : vector<1x32xf32> to vector<1x1x32xf32>
    %253 = vector.broadcast %252 : vector<1x1x32xf32> to vector<2x16x32xf32>
    %254 = arith.mulf %250, %253 : vector<2x16x32xf32>
    %c21 = arith.constant 21 : index
    %c0_97 = arith.constant 0 : index
    %255 = vector.load %arg4[%c21, %c0_97] : memref<24x64xf32, #tpu.memory_space<vmem>>, vector<1x32xf32>
    %256 = vector.shape_cast %255 : vector<1x32xf32> to vector<1x1x32xf32>
    %257 = vector.broadcast %256 : vector<1x1x32xf32> to vector<2x16x32xf32>
    %258 = arith.addf %254, %257 : vector<2x16x32xf32>
    %259 = vector.shape_cast %258 : vector<2x16x32xf32> to vector<32x32xf32>
    %c864 = arith.constant 864 : index
    %c0_98 = arith.constant 0 : index
    %260 = vector.load %arg2[%c864, %c0_98] : memref<928x64xf32, #tpu.memory_space<vmem>>, vector<32x64xf32>
    %cst_99 = arith.constant dense<0.000000e+00> : vector<32x64xf32>
    %261 = tpu.matmul %259, %260, %cst_99 {dimension_numbers = #tpu.dot_dimension_numbers<[1], [0], [0], [1], [0, 0, 1, 1], [], []>} : vector<32x32xf32>, vector<32x64xf32>, vector<32x64xf32> -> vector<32x64xf32>
    %c18 = arith.constant 18 : index
    %c0_100 = arith.constant 0 : index
    %262 = vector.load %arg4[%c18, %c0_100] : memref<24x64xf32, #tpu.memory_space<vmem>>, vector<1x64xf32>
    %263 = vector.broadcast %262 : vector<1x64xf32> to vector<32x64xf32>
    %264 = arith.addf %261, %263 : vector<32x64xf32>
    %cst_101 = arith.constant 0.000000e+00 : f32
    %265 = vector.broadcast %cst_101 : f32 to vector<32x64xf32>
    %266 = arith.maximumf %264, %265 : vector<32x64xf32>
    %c200 = arith.constant 200 : index
    %c0_102 = arith.constant 0 : index
    %267 = vector.load %arg3[%c200, %c0_102] : memref<408x32xf32, #tpu.memory_space<vmem>>, vector<64x32xf32>
    %cst_103 = arith.constant dense<0.000000e+00> : vector<32x32xf32>
    %268 = tpu.matmul %266, %267, %cst_103 {dimension_numbers = #tpu.dot_dimension_numbers<[1], [0], [0], [1], [0, 0, 1, 1], [], []>} : vector<32x64xf32>, vector<64x32xf32>, vector<32x32xf32> -> vector<32x32xf32>
    %c19 = arith.constant 19 : index
    %c0_104 = arith.constant 0 : index
    %269 = vector.load %arg4[%c19, %c0_104] : memref<24x64xf32, #tpu.memory_space<vmem>>, vector<1x32xf32>
    %270 = vector.broadcast %269 : vector<1x32xf32> to vector<32x32xf32>
    %271 = arith.addf %268, %270 : vector<32x32xf32>
    %272 = arith.addf %271, %259 : vector<32x32xf32>
    %cst_105 = arith.constant dense<0.000000e+00> : vector<32xf32>
    %273 = vector.multi_reduction <add>, %272, %cst_105 [1] : vector<32x32xf32> to vector<32xf32>
    %274 = vector.shape_cast %273 : vector<32xf32> to vector<32x1xf32>
    %cst_106 = arith.constant 3.200000e+01 : f32
    %275 = vector.broadcast %cst_106 : f32 to vector<32x1xf32>
    %276 = arith.divf %274, %275 : vector<32x1xf32>
    %277 = arith.mulf %272, %272 : vector<32x32xf32>
    %cst_107 = arith.constant dense<0.000000e+00> : vector<32xf32>
    %278 = vector.multi_reduction <add>, %277, %cst_107 [1] : vector<32x32xf32> to vector<32xf32>
    %279 = vector.shape_cast %278 : vector<32xf32> to vector<32x1xf32>
    %cst_108 = arith.constant 3.200000e+01 : f32
    %280 = vector.broadcast %cst_108 : f32 to vector<32x1xf32>
    %281 = arith.divf %279, %280 : vector<32x1xf32>
    %282 = arith.mulf %276, %276 : vector<32x1xf32>
    %283 = arith.subf %281, %282 : vector<32x1xf32>
    %cst_109 = arith.constant 9.99999974E-6 : f32
    %284 = vector.broadcast %cst_109 : f32 to vector<32x1xf32>
    %285 = arith.addf %283, %284 : vector<32x1xf32>
    %286 = math.rsqrt %285 : vector<32x1xf32>
    %287 = vector.broadcast %276 : vector<32x1xf32> to vector<32x32xf32>
    %288 = arith.subf %272, %287 : vector<32x32xf32>
    %289 = vector.broadcast %286 : vector<32x1xf32> to vector<32x32xf32>
    %290 = arith.mulf %288, %289 : vector<32x32xf32>
    %c22 = arith.constant 22 : index
    %c0_110 = arith.constant 0 : index
    %291 = vector.load %arg4[%c22, %c0_110] : memref<24x64xf32, #tpu.memory_space<vmem>>, vector<1x32xf32>
    %292 = vector.broadcast %291 : vector<1x32xf32> to vector<32x32xf32>
    %293 = arith.mulf %290, %292 : vector<32x32xf32>
    %c23 = arith.constant 23 : index
    %c0_111 = arith.constant 0 : index
    %294 = vector.load %arg4[%c23, %c0_111] : memref<24x64xf32, #tpu.memory_space<vmem>>, vector<1x32xf32>
    %295 = vector.broadcast %294 : vector<1x32xf32> to vector<32x32xf32>
    %296 = arith.addf %293, %295 : vector<32x32xf32>
    %c896 = arith.constant 896 : index
    %c0_112 = arith.constant 0 : index
    %297 = vector.load %arg2[%c896, %c0_112] : memref<928x64xf32, #tpu.memory_space<vmem>>, vector<32x64xf32>
    %cst_113 = arith.constant dense<0.000000e+00> : vector<32x64xf32>
    %298 = tpu.matmul %296, %297, %cst_113 {dimension_numbers = #tpu.dot_dimension_numbers<[1], [0], [0], [1], [0, 0, 1, 1], [], []>} : vector<32x32xf32>, vector<32x64xf32>, vector<32x64xf32> -> vector<32x64xf32>
    %299 = vector.extract_strided_slice %298 {offsets = [0, 0], sizes = [32, 48], strides = [1, 1]} : vector<32x64xf32> to vector<32x48xf32>
    %c3 = arith.constant 3 : index
    %c0_114 = arith.constant 0 : index
    %300 = vector.load %arg4[%c3, %c0_114] : memref<24x64xf32, #tpu.memory_space<vmem>>, vector<1x48xf32>
    %301 = vector.broadcast %300 : vector<1x48xf32> to vector<32x48xf32>
    %302 = arith.addf %299, %301 : vector<32x48xf32>
    %c0_115 = arith.constant 0 : index
    %c0_116 = arith.constant 0 : index
    %303 = vector.load %arg5[%c0_115, %c0_116] : memref<32x48xf32, #tpu.memory_space<vmem>>, vector<32x48xf32>
    tpu.vector_store %arg5[%c0_115, %c0_116], %302 {strides = array<i32>} : memref<32x48xf32, #tpu.memory_space<vmem>>, vector<32x48xf32>,
    return
  }
}

</mosaic_0001>

<llo_original>
// kernel: forward.1
$region0: #{forward.1}
  #allocation0 [shape = 'u32[]', space=smem, size = 0x4, offset = 0x4, fixed_abs, tag = 'smem constant byte address 0x4 - core index']
  #allocation1 [shape = 'u32[144,128]{1,0:T(1,128)}', space=vmem, size = 0x12000, scoped, tag = 'internal scratch']
  %s0 = inlined_call_operand.vmem [shape: f32[2,768], index: 0, kind: input, shape index: {}]
  %s1 = inlined_call_operand.vmem [shape: f32[2,4], index: 1, kind: input, shape index: {}]
  %s2 = inlined_call_operand.vmem [shape: f32[928,64], index: 2, kind: input, shape index: {}]
  %s3 = inlined_call_operand.vmem [shape: f32[408,32], index: 3, kind: input, shape index: {}]
  %s4 = inlined_call_operand.vmem [shape: f32[24,64], index: 4, kind: input, shape index: {}]
  %s5 = inlined_call_operand.vmem [shape: f32[32,48], index: 5, kind: output, shape index: {}]
  %s6 = sld [smem:[#allocation0]]
  $region30: #{forward.1} parent=0
    _
  %s8 = ssub.s32 1, %s6
  %s9 = scalar_select 0, %s8, %s6
  // Predicated region
  $region2: #{forward.1} parent=0 // pred_check
    _
  $region3: #{forward.1} parent=0 // pred_check_branch
    %11 = sbr.rel (0) target = $region5
  $region4: #{forward.1} parent=0 // pred_region
    _
  $region5: #{forward.1} parent=0 // pred_fallthru
    _
  // Predicated region
  $region6: #{forward.1} parent=0 // pred_check
    _
  $region7: #{forward.1} parent=0 // pred_check_branch
    %13 = sbr.rel (0) target = $region9
  $region8: #{forward.1} parent=0 // pred_region
    _
  $region9: #{forward.1} parent=0 // pred_fallthru
    _
  // Predicated region
  $region10: #{forward.1} parent=0 // pred_check
    _
  $region11: #{forward.1} parent=0 // pred_check_branch
    %15 = sbr.rel (0) target = $region13
  $region12: #{forward.1} parent=0 // pred_region
    _
  $region13: #{forward.1} parent=0 // pred_fallthru
    _
  // Predicated region
  $region14: #{forward.1} parent=0 // pred_check
    _
  $region15: #{forward.1} parent=0 // pred_check_branch
    %17 = sbr.rel (0) target = $region17
  $region16: #{forward.1} parent=0 // pred_region
    _
  $region17: #{forward.1} parent=0 // pred_fallthru
    _
  // Predicated region
  $region18: #{forward.1} parent=0 // pred_check
    _
  $region19: #{forward.1} parent=0 // pred_check_branch
    %19 = sbr.rel (0) target = $region21
  $region20: #{forward.1} parent=0 // pred_region
    _
  $region21: #{forward.1} parent=0 // pred_fallthru
    _
  %v20 = vld [vmem:[%s0] sm:$0xff]
  %v21 = vld [vmem:[%s0 + $0x8] sm:$0xf]
  %v22 = vld [vmem:[%s2] sm:$0xff]
  %v23 = vld [vmem:[%s2 + $0x8] sm:$0xff]
  %v24 = vld [vmem:[%s2 + $0x10] sm:$0xff]
  %v25 = vld [vmem:[%s2 + $0x18] sm:$0xff]
  %v26 = vld [vmem:[%s2 + $0x20] sm:$0xff]
  %v27 = vld [vmem:[%s2 + $0x28] sm:$0xff]
  %v28 = vld [vmem:[%s2 + $0x30] sm:$0xff]
  %v29 = vld [vmem:[%s2 + $0x38] sm:$0xff]
  %v30 = vld [vmem:[%s2 + $0x40] sm:$0xff]
  %v31 = vld [vmem:[%s2 + $0x48] sm:$0xff]
  %v32 = vld [vmem:[%s2 + $0x50] sm:$0xff]
  %v33 = vld [vmem:[%s2 + $0x58] sm:$0xff]
  %v34 = vld [vmem:[%s2 + $0x60] sm:$0xff]
  %v35 = vld [vmem:[%s2 + $0x68] sm:$0xff]
  %v36 = vld [vmem:[%s2 + $0x70] sm:$0xff]
  %v37 = vld [vmem:[%s2 + $0x78] sm:$0xff]
  %v38 = vld [vmem:[%s2 + $0x80] sm:$0xff]
  %v39 = vld [vmem:[%s2 + $0x88] sm:$0xff]
  %v40 = vld [vmem:[%s2 + $0x90] sm:$0xff]
  %v41 = vld [vmem:[%s2 + $0x98] sm:$0xff]
  %v42 = vld [vmem:[%s2 + $0xa0] sm:$0xff]
  %v43 = vld [vmem:[%s2 + $0xa8] sm:$0xff]
  %v44 = vld [vmem:[%s2 + $0xb0] sm:$0xff]
  %v45 = vld [vmem:[%s2 + $0xb8] sm:$0xff]
  %v46 = vld [vmem:[%s2 + $0xc0] sm:$0xff]
  %v47 = vld [vmem:[%s2 + $0xc8] sm:$0xff]
  %v48 = vld [vmem:[%s2 + $0xd0] sm:$0xff]
  %v49 = vld [vmem:[%s2 + $0xd8] sm:$0xff]
  %v50 = vld [vmem:[%s2 + $0xe0] sm:$0xff]
  %v51 = vld [vmem:[%s2 + $0xe8] sm:$0xff]
  %v52 = vld [vmem:[%s2 + $0xf0] sm:$0xff]
  %v53 = vld [vmem:[%s2 + $0xf8] sm:$0xff]
  %v54 = vld [vmem:[%s2 + $0x100] sm:$0xff]
  %v55 = vld [vmem:[%s2 + $0x108] sm:$0xff]
  %v56 = vld [vmem:[%s2 + $0x110] sm:$0xff]
  %v57 = vld [vmem:[%s2 + $0x118] sm:$0xff]
  %v58 = vld [vmem:[%s2 + $0x120] sm:$0xff]
  %v59 = vld [vmem:[%s2 + $0x128] sm:$0xff]
  %v60 = vld [vmem:[%s2 + $0x130] sm:$0xff]
  %v61 = vld [vmem:[%s2 + $0x138] sm:$0xff]
  %v62 = vld [vmem:[%s2 + $0x140] sm:$0xff]
  %v63 = vld [vmem:[%s2 + $0x148] sm:$0xff]
  %v64 = vld [vmem:[%s2 + $0x150] sm:$0xff]
  %v65 = vld [vmem:[%s2 + $0x158] sm:$0xff]
  %v66 = vld [vmem:[%s2 + $0x160] sm:$0xff]
  %v67 = vld [vmem:[%s2 + $0x168] sm:$0xff]
  %v68 = vld [vmem:[%s2 + $0x170] sm:$0xff]
  %v69 = vld [vmem:[%s2 + $0x178] sm:$0xff]
  %v70 = vld [vmem:[%s2 + $0x180] sm:$0xff]
  %v71 = vld [vmem:[%s2 + $0x188] sm:$0xff]
  %v72 = vld [vmem:[%s2 + $0x190] sm:$0xff]
  %v73 = vld [vmem:[%s2 + $0x198] sm:$0xff]
  %v74 = vld [vmem:[%s2 + $0x1a0] sm:$0xff]
  %v75 = vld [vmem:[%s2 + $0x1a8] sm:$0xff]
  %v76 = vld [vmem:[%s2 + $0x1b0] sm:$0xff]
  %v77 = vld [vmem:[%s2 + $0x1b8] sm:$0xff]
  %v78 = vld [vmem:[%s2 + $0x1c0] sm:$0xff]
  %v79 = vld [vmem:[%s2 + $0x1c8] sm:$0xff]
  %v80 = vld [vmem:[%s2 + $0x1d0] sm:$0xff]
  %v81 = vld [vmem:[%s2 + $0x1d8] sm:$0xff]
  %v82 = vld [vmem:[%s2 + $0x1e0] sm:$0xff]
  %v83 = vld [vmem:[%s2 + $0x1e8] sm:$0xff]
  %v84 = vld [vmem:[%s2 + $0x1f0] sm:$0xff]
  %v85 = vld [vmem:[%s2 + $0x1f8] sm:$0xff]
  %v86 = vld [vmem:[%s2 + $0x200] sm:$0xff]
  %v87 = vld [vmem:[%s2 + $0x208] sm:$0xff]
  %v88 = vld [vmem:[%s2 + $0x210] sm:$0xff]
  %v89 = vld [vmem:[%s2 + $0x218] sm:$0xff]
  %v90 = vld [vmem:[%s2 + $0x220] sm:$0xff]
  %v91 = vld [vmem:[%s2 + $0x228] sm:$0xff]
  %v92 = vld [vmem:[%s2 + $0x230] sm:$0xff]
  %v93 = vld [vmem:[%s2 + $0x238] sm:$0xff]
  %v94 = vld [vmem:[%s2 + $0x240] sm:$0xff]
  %v95 = vld [vmem:[%s2 + $0x248] sm:$0xff]
  %v96 = vld [vmem:[%s2 + $0x250] sm:$0xff]
  %v97 = vld [vmem:[%s2 + $0x258] sm:$0xff]
  %v98 = vld [vmem:[%s2 + $0x260] sm:$0xff]
  %v99 = vld [vmem:[%s2 + $0x268] sm:$0xff]
  %v100 = vld [vmem:[%s2 + $0x270] sm:$0xff]
  %v101 = vld [vmem:[%s2 + $0x278] sm:$0xff]
  %v102 = vld [vmem:[%s2 + $0x280] sm:$0xff]
  %v103 = vld [vmem:[%s2 + $0x288] sm:$0xff]
  %v104 = vld [vmem:[%s2 + $0x290] sm:$0xff]
  %v105 = vld [vmem:[%s2 + $0x298] sm:$0xff]
  %v106 = vld [vmem:[%s2 + $0x2a0] sm:$0xff]
  %v107 = vld [vmem:[%s2 + $0x2a8] sm:$0xff]
  %v108 = vld [vmem:[%s2 + $0x2b0] sm:$0xff]
  %v109 = vld [vmem:[%s2 + $0x2b8] sm:$0xff]
  %v110 = vld [vmem:[%s2 + $0x2c0] sm:$0xff]
  %v111 = vld [vmem:[%s2 + $0x2c8] sm:$0xff]
  %v112 = vld [vmem:[%s2 + $0x2d0] sm:$0xff]
  %v113 = vld [vmem:[%s2 + $0x2d8] sm:$0xff]
  %v114 = vld [vmem:[%s2 + $0x2e0] sm:$0xff]
  %v115 = vld [vmem:[%s2 + $0x2e8] sm:$0xff]
  %v116 = vld [vmem:[%s2 + $0x2f0] sm:$0xff]
  %v117 = vld [vmem:[%s2 + $0x2f8] sm:$0xff]
  %v118 = vld [vmem:[%s4] sm:$0x1]
  %v119 = vlaneseq
  %v120 = vshrl.u32 %v119, 7
  %v121 = vsub.s32 0, %v120
  %v122 = vrot.slane %v118, %v121
  %v125 = vcombine.high %v20, %v20
  %v127 = vunpack.c.l.s4 1983009808
  %v128 = vunpack.c.0.s8 %v127
  %v129 = vlaneseq
  %v130 = vshrl.u32 %v129, 7
  %v131 = vsub.s32 %v128, %v130
  %v132 = vrot.slane %v20, %v131
  %v134 = vunpack.c.l.s4 1983009808
  %v135 = vunpack.c.0.s8 %v134
  %v136 = vlaneseq
  %v137 = vshrl.u32 %v136, 7
  %v138 = vsub.s32 %v135, %v137
  %v139 = vrot.slane %v125, %v138
  %v140 = vcombine.high %v132, %v132
  %v141 = vcombine.high %v139, %v139
  %v143 = vunpack.c.l.s4 1983009808
  %v144 = vunpack.c.0.s8 %v143
  %v145 = vlaneseq
  %v146 = vshrl.u32 %v145, 7
  %v147 = vsub.s32 %v144, %v146
  %v148 = vrot.slane %v21, %v147
  %v149 = vcombine.high %v148, %v148
  %156 = vmatprep.subr.mxu0 0.0
  %157 = vmatpush1.msra.mxu0 %v37
  %158 = vmatprep.subr.mxu0 0.0
  %159 = vmatpush1.msra.mxu0 %v36
  %160 = vmatprep.subr.mxu0 0.0
  %161 = vmatpush1.msra.mxu0 %v35
  %162 = vmatprep.subr.mxu0 0.0
  %163 = vmatpush1.msra.mxu0 %v34
  %164 = vmatprep.subr.mxu0 0.0
  %165 = vmatpush1.msra.mxu0 %v33
  %166 = vmatprep.subr.mxu0 0.0
  %167 = vmatpush1.msra.mxu0 %v32
  %168 = vmatprep.subr.mxu0 0.0
  %169 = vmatpush1.msra.mxu0 %v31
  %170 = vmatprep.subr.mxu0 0.0
  %171 = vmatpush1.msra.mxu0 %v30
  %172 = vmatprep.subr.mxu0 0.0
  %173 = vmatpush1.msra.mxu0 %v29
  %174 = vmatprep.subr.mxu0 0.0
  %175 = vmatpush1.msra.mxu0 %v28
  %176 = vmatprep.subr.mxu0 0.0
  %177 = vmatpush1.msra.mxu0 %v27
  %178 = vmatprep.subr.mxu0 0.0
  %179 = vmatpush1.msra.mxu0 %v26
  %180 = vmatprep.subr.mxu0 0.0
  %181 = vmatpush1.msra.mxu0 %v25
  %182 = vmatprep.subr.mxu0 0.0
  %183 = vmatpush1.msra.mxu0 %v24
  %184 = vmatprep.subr.mxu0 0.0
  %185 = vmatpush1.msra.mxu0 %v23
  %186 = vmatprep.subr.mxu0 0.0
  %187 = vmatpush1.msra.mxu0 %v22
  %188 = vmatprep.subr.mxu0 0.0
  %189 = vmatpush2.msra.mxu0 %v53
  %190 = vmatprep.subr.mxu0 0.0
  %191 = vmatpush2.msra.mxu0 %v52
  %192 = vmatprep.subr.mxu0 0.0
  %193 = vmatpush2.msra.mxu0 %v51
  %194 = vmatprep.subr.mxu0 0.0
  %195 = vmatpush2.msra.mxu0 %v50
  %196 = vmatprep.subr.mxu0 0.0
  %197 = vmatpush2.msra.mxu0 %v49
  %198 = vmatprep.subr.mxu0 0.0
  %199 = vmatpush2.msra.mxu0 %v48
  %200 = vmatprep.subr.mxu0 0.0
  %201 = vmatpush2.msra.mxu0 %v47
  %202 = vmatprep.subr.mxu0 0.0
  %203 = vmatpush2.msra.mxu0 %v46
  %204 = vmatprep.subr.mxu0 0.0
  %205 = vmatpush2.msra.mxu0 %v45
  %206 = vmatprep.subr.mxu0 0.0
  %207 = vmatpush2.msra.mxu0 %v44
  %208 = vmatprep.subr.mxu0 0.0
  %209 = vmatpush2.msra.mxu0 %v43
  %210 = vmatprep.subr.mxu0 0.0
  %211 = vmatpush2.msra.mxu0 %v42
  %212 = vmatprep.subr.mxu0 0.0
  %213 = vmatpush2.msra.mxu0 %v41
  %214 = vmatprep.subr.mxu0 0.0
  %215 = vmatpush2.msra.mxu0 %v40
  %216 = vmatprep.subr.mxu0 0.0
  %217 = vmatpush2.msra.mxu0 %v39
  %218 = vmatprep.subr.mxu0 0.0
  %219 = vmatpush2.msra.mxu0 %v38
  %220 = vmatprep.mubr.f32.mxu0 %v140
  %221 = vmatmul.mubr.f32.gmra.mxu0 %v132
  %v222 = vpop.f32.mrf.mxu0
  %v223 = vadd.f32 %v122, %v222
  %v224 = vpop.f32.mrf.mxu0
  %225 = vdwg.mxu0
  %226 = vmatprep.subr.mxu0 0.0
  %227 = vmatpush1.msra.mxu0 %v69
  %228 = vmatprep.subr.mxu0 0.0
  %229 = vmatpush1.msra.mxu0 %v68
  %230 = vmatprep.subr.mxu0 0.0
  %231 = vmatpush1.msra.mxu0 %v67
  %232 = vmatprep.subr.mxu0 0.0
  %233 = vmatpush1.msra.mxu0 %v66
  %234 = vmatprep.subr.mxu0 0.0
  %235 = vmatpush1.msra.mxu0 %v65
  %236 = vmatprep.subr.mxu0 0.0
  %237 = vmatpush1.msra.mxu0 %v64
  %238 = vmatprep.subr.mxu0 0.0
  %239 = vmatpush1.msra.mxu0 %v63
  %240 = vmatprep.subr.mxu0 0.0
  %241 = vmatpush1.msra.mxu0 %v62
  %242 = vmatprep.subr.mxu0 0.0
  %243 = vmatpush1.msra.mxu0 %v61
  %244 = vmatprep.subr.mxu0 0.0
  %245 = vmatpush1.msra.mxu0 %v60
  %246 = vmatprep.subr.mxu0 0.0
  %247 = vmatpush1.msra.mxu0 %v59
  %248 = vmatprep.subr.mxu0 0.0
  %249 = vmatpush1.msra.mxu0 %v58
  %250 = vmatprep.subr.mxu0 0.0
  %251 = vmatpush1.msra.mxu0 %v57
  %252 = vmatprep.subr.mxu0 0.0
  %253 = vmatpush1.msra.mxu0 %v56
  %254 = vmatprep.subr.mxu0 0.0
  %255 = vmatpush1.msra.mxu0 %v55
  %256 = vmatprep.subr.mxu0 0.0
  %257 = vmatpush1.msra.mxu0 %v54
  %258 = vmatprep.subr.mxu0 0.0
  %259 = vmatpush2.msra.mxu0 %v85
  %260 = vmatprep.subr.mxu0 0.0
  %261 = vmatpush2.msra.mxu0 %v84
  %262 = vmatprep.subr.mxu0 0.0
  %263 = vmatpush2.msra.mxu0 %v83
  %264 = vmatprep.subr.mxu0 0.0
  %265 = vmatpush2.msra.mxu0 %v82
  %266 = vmatprep.subr.mxu0 0.0
  %267 = vmatpush2.msra.mxu0 %v81
  %268 = vmatprep.subr.mxu0 0.0
  %269 = vmatpush2.msra.mxu0 %v80
  %270 = vmatprep.subr.mxu0 0.0
  %271 = vmatpush2.msra.mxu0 %v79
  %272 = vmatprep.subr.mxu0 0.0
  %273 = vmatpush2.msra.mxu0 %v78
  %274 = vmatprep.subr.mxu0 0.0
  %275 = vmatpush2.msra.mxu0 %v77
  %276 = vmatprep.subr.mxu0 0.0
  %277 = vmatpush2.msra.mxu0 %v76
  %278 = vmatprep.subr.mxu0 0.0
  %279 = vmatpush2.msra.mxu0 %v75
  %280 = vmatprep.subr.mxu0 0.0
  %281 = vmatpush2.msra.mxu0 %v74
  %282 = vmatprep.subr.mxu0 0.0
  %283 = vmatpush2.msra.mxu0 %v73
  %284 = vmatprep.subr.mxu0 0.0
  %285 = vmatpush2.msra.mxu0 %v72
  %286 = vmatprep.subr.mxu0 0.0
  %287 = vmatpush2.msra.mxu0 %v71
  %288 = vmatprep.subr.mxu0 0.0
  %289 = vmatpush2.msra.mxu0 %v70
  %290 = vmatprep.mubr.f32.mxu0 %v141
  %291 = vmatmul.mubr.f32.gmra.mxu0 %v139
  %v292 = vpop.f32.mrf.mxu0
  %v293 = vadd.f32 %v223, %v292
  %v294 = vpop.f32.mrf.mxu0
  %295 = vdwg.mxu0
  %296 = vmatprep.subr.mxu0 0.0
  %297 = vmatpush1.msra.mxu0 %v101
  %298 = vmatprep.subr.mxu0 0.0
  %299 = vmatpush1.msra.mxu0 %v100
  %300 = vmatprep.subr.mxu0 0.0
  %301 = vmatpush1.msra.mxu0 %v99
  %302 = vmatprep.subr.mxu0 0.0
  %303 = vmatpush1.msra.mxu0 %v98
  %304 = vmatprep.subr.mxu0 0.0
  %305 = vmatpush1.msra.mxu0 %v97
  %306 = vmatprep.subr.mxu0 0.0
  %307 = vmatpush1.msra.mxu0 %v96
  %308 = vmatprep.subr.mxu0 0.0
  %309 = vmatpush1.msra.mxu0 %v95
  %310 = vmatprep.subr.mxu0 0.0
  %311 = vmatpush1.msra.mxu0 %v94
  %312 = vmatprep.subr.mxu0 0.0
  %313 = vmatpush1.msra.mxu0 %v93
  %314 = vmatprep.subr.mxu0 0.0
  %315 = vmatpush1.msra.mxu0 %v92
  %316 = vmatprep.subr.mxu0 0.0
  %317 = vmatpush1.msra.mxu0 %v91
  %318 = vmatprep.subr.mxu0 0.0
  %319 = vmatpush1.msra.mxu0 %v90
  %320 = vmatprep.subr.mxu0 0.0
  %321 = vmatpush1.msra.mxu0 %v89
  %322 = vmatprep.subr.mxu0 0.0
  %323 = vmatpush1.msra.mxu0 %v88
  %324 = vmatprep.subr.mxu0 0.0
  %325 = vmatpush1.msra.mxu0 %v87
  %326 = vmatprep.subr.mxu0 0.0
  %327 = vmatpush1.msra.mxu0 %v86
  %328 = vmatprep.subr.mxu0 0.0
  %329 = vmatpush2.msra.mxu0 %v117
  %330 = vmatprep.subr.mxu0 0.0
  %331 = vmatpush2.msra.mxu0 %v116
  %332 = vmatprep.subr.mxu0 0.0
  %333 = vmatpush2.msra.mxu0 %v115
  %334 = vmatprep.subr.mxu0 0.0
  %335 = vmatpush2.msra.mxu0 %v114
  %336 = vmatprep.subr.mxu0 0.0
  %337 = vmatpush2.msra.mxu0 %v113
  %338 = vmatprep.subr.mxu0 0.0
  %339 = vmatpush2.msra.mxu0 %v112
  %340 = vmatprep.subr.mxu0 0.0
  %341 = vmatpush2.msra.mxu0 %v111
  %342 = vmatprep.subr.mxu0 0.0
  %343 = vmatpush2.msra.mxu0 %v110
  %344 = vmatprep.subr.mxu0 0.0
  %345 = vmatpush2.msra.mxu0 %v109
  %346 = vmatprep.subr.mxu0 0.0
  %347 = vmatpush2.msra.mxu0 %v108
  %348 = vmatprep.subr.mxu0 0.0
  %349 = vmatpush2.msra.mxu0 %v107
  %350 = vmatprep.subr.mxu0 0.0
  %351 = vmatpush2.msra.mxu0 %v106
  %352 = vmatprep.subr.mxu0 0.0
  %353 = vmatpush2.msra.mxu0 %v105
  %354 = vmatprep.subr.mxu0 0.0
  %355 = vmatpush2.msra.mxu0 %v104
  %356 = vmatprep.subr.mxu0 0.0
  %357 = vmatpush2.msra.mxu0 %v103
  %358 = vmatprep.subr.mxu0 0.0
  %359 = vmatpush2.msra.mxu0 %v102
  %360 = vmatprep.mubr.f32.mxu0 %v149
  %361 = vmatmul.mubr.f32.gmra.mxu0 %v148
  %v362 = vpop.f32.mrf.mxu0
  %v363 = vadd.f32 %v293, %v362
  %v364 = vpop.f32.mrf.mxu0
  %365 = vdwg.mxu0
  %v366 = vmax.f32 %v363, 0.0
  %v367 = vld [vmem:[%s2 + $0x300] sm:$0xff]
  %v368 = vld [vmem:[%s2 + $0x308] sm:$0xff]
  %v369 = vld [vmem:[%s2 + $0x310] sm:$0xff]
  %v370 = vld [vmem:[%s2 + $0x318] sm:$0xff]
  %v371 = vld [vmem:[%s2 + $0x320] sm:$0xff]
  %v372 = vld [vmem:[%s2 + $0x328] sm:$0xff]
  %v373 = vld [vmem:[%s2 + $0x330] sm:$0xff]
  %v374 = vld [vmem:[%s2 + $0x338] sm:$0xff]
  %v375 = vld [vmem:[%s4 + $0x1] sm:$0x1]
  %v376 = vlaneseq
  %v377 = vshrl.u32 %v376, 7
  %v378 = vsub.s32 0, %v377
  %v379 = vrot.slane %v375, %v378
  %vm380 = vcmask 523264
  %v382 = vsel %vm380, %v366, 0
  %384 = vmatprep.subr.mxu0 0.0
  %385 = vmatpush1.msra.mxu0 0.0
  %386 = vmatprep.subr.mxu0 0.0
  %387 = vmatpush1.msra.mxu0 0.0
  %388 = vmatprep.subr.mxu0 0.0
  %389 = vmatpush1.msra.mxu0 0.0
  %390 = vmatprep.subr.mxu0 0.0
  %391 = vmatpush1.msra.mxu0 0.0
  %392 = vmatprep.subr.mxu0 0.0
  %393 = vmatpush1.msra.mxu0 0.0
  %394 = vmatprep.subr.mxu0 0.0
  %395 = vmatpush1.msra.mxu0 0.0
  %396 = vmatprep.subr.mxu0 0.0
  %397 = vmatpush1.msra.mxu0 0.0
  %398 = vmatprep.subr.mxu0 0.0
  %399 = vmatpush1.msra.mxu0 0.0
  %400 = vmatprep.subr.mxu0 0.0
  %401 = vmatpush1.msra.mxu0 %v374
  %402 = vmatprep.subr.mxu0 0.0
  %403 = vmatpush1.msra.mxu0 %v373
  %404 = vmatprep.subr.mxu0 0.0
  %405 = vmatpush1.msra.mxu0 %v372
  %406 = vmatprep.subr.mxu0 0.0
  %407 = vmatpush1.msra.mxu0 %v371
  %408 = vmatprep.subr.mxu0 0.0
  %409 = vmatpush1.msra.mxu0 %v370
  %410 = vmatprep.subr.mxu0 0.0
  %411 = vmatpush1.msra.mxu0 %v369
  %412 = vmatprep.subr.mxu0 0.0
  %413 = vmatpush1.msra.mxu0 %v368
  %414 = vmatprep.subr.mxu0 0.0
  %415 = vmatpush1.msra.mxu0 %v367
  %416 = vmatprep.subr.mxu0 0.0
  %417 = vmatpush2.msra.mxu0 0.0
  %418 = vmatprep.subr.mxu0 0.0
  %419 = vmatpush2.msra.mxu0 0.0
  %420 = vmatprep.subr.mxu0 0.0
  %421 = vmatpush2.msra.mxu0 0.0
  %422 = vmatprep.subr.mxu0 0.0
  %423 = vmatpush2.msra.mxu0 0.0
  %424 = vmatprep.subr.mxu0 0.0
  %425 = vmatpush2.msra.mxu0 0.0
  %426 = vmatprep.subr.mxu0 0.0
  %427 = vmatpush2.msra.mxu0 0.0
  %428 = vmatprep.subr.mxu0 0.0
  %429 = vmatpush2.msra.mxu0 0.0
  %430 = vmatprep.subr.mxu0 0.0
  %431 = vmatpush2.msra.mxu0 0.0
  %432 = vmatprep.subr.mxu0 0.0
  %433 = vmatpush2.msra.mxu0 0.0
  %434 = vmatprep.subr.mxu0 0.0
  %435 = vmatpush2.msra.mxu0 0.0
  %436 = vmatprep.subr.mxu0 0.0
  %437 = vmatpush2.msra.mxu0 0.0
  %438 = vmatprep.subr.mxu0 0.0
  %439 = vmatpush2.msra.mxu0 0.0
  %440 = vmatprep.subr.mxu0 0.0
  %441 = vmatpush2.msra.mxu0 0.0
  %442 = vmatprep.subr.mxu0 0.0
  %443 = vmatpush2.msra.mxu0 0.0
  %444 = vmatprep.subr.mxu0 0.0
  %445 = vmatpush2.msra.mxu0 0.0
  %446 = vmatprep.subr.mxu0 0.0
  %447 = vmatpush2.msra.mxu0 0.0
  %448 = vmatprep.mubr.f32.mxu0 0.0
  %449 = vmatmul.mubr.f32.gmra.mxu0 %v382
  %v450 = vpop.f32.mrf.mxu0
  %v451 = vadd.f32 %v379, %v450
  %v452 = vpop.f32.mrf.mxu0
  %453 = vdwg.mxu0
  %v454 = vmax.f32 %v451, 0.0
  %v455 = vld [vmem:[%s3] sm:$0xff]
  %v456 = vld [vmem:[%s3 + $0x8] sm:$0xff]
  %v457 = vld [vmem:[%s3 + $0x10] sm:$0xff]
  %v458 = vld [vmem:[%s3 + $0x18] sm:$0xff]
  %v459 = vld [vmem:[%s3 + $0x20] sm:$0xff]
  %v460 = vld [vmem:[%s3 + $0x28] sm:$0xff]
  %v461 = vld [vmem:[%s3 + $0x30] sm:$0xff]
  %v462 = vld [vmem:[%s3 + $0x38] sm:$0xff]
  %v463 = vld [vmem:[%s1] sm:$0x3]
  %v464 = vld [vmem:[%s3 + $0x40] sm:$0xf]
  %vm465 = vcmask 31744
  %v467 = vsel %vm465, %v463, 0
  %vm469 = vcmask 1043456
  %v471 = vsel %vm469, %v464, 0
  %473 = vmatprep.subr.mxu0 0.0
  %474 = vmatpush1.msra.mxu0 0.0
  %475 = vmatprep.subr.mxu0 0.0
  %476 = vmatpush1.msra.mxu0 0.0
  %477 = vmatprep.subr.mxu0 0.0
  %478 = vmatpush1.msra.mxu0 0.0
  %479 = vmatprep.subr.mxu0 0.0
  %480 = vmatpush1.msra.mxu0 0.0
  %481 = vmatprep.subr.mxu0 0.0
  %482 = vmatpush1.msra.mxu0 0.0
  %483 = vmatprep.subr.mxu0 0.0
  %484 = vmatpush1.msra.mxu0 0.0
  %485 = vmatprep.subr.mxu0 0.0
  %486 = vmatpush1.msra.mxu0 0.0
  %487 = vmatprep.subr.mxu0 0.0
  %488 = vmatpush1.msra.mxu0 0.0
  %489 = vmatprep.subr.mxu0 0.0
  %490 = vmatpush1.msra.mxu0 0.0
  %491 = vmatprep.subr.mxu0 0.0
  %492 = vmatpush1.msra.mxu0 0.0
  %493 = vmatprep.subr.mxu0 0.0
  %494 = vmatpush1.msra.mxu0 0.0
  %495 = vmatprep.subr.mxu0 0.0
  %496 = vmatpush1.msra.mxu0 0.0
  %497 = vmatprep.subr.mxu0 0.0
  %498 = vmatpush1.msra.mxu0 0.0
  %499 = vmatprep.subr.mxu0 0.0
  %500 = vmatpush1.msra.mxu0 0.0
  %501 = vmatprep.subr.mxu0 0.0
  %502 = vmatpush1.msra.mxu0 0.0
  %503 = vmatprep.subr.mxu0 0.0
  %504 = vmatpush1.msra.mxu0 %v471
  %505 = vmatprep.subr.mxu0 0.0
  %506 = vmatpush2.msra.mxu0 0.0
  %507 = vmatprep.subr.mxu0 0.0
  %508 = vmatpush2.msra.mxu0 0.0
  %509 = vmatprep.subr.mxu0 0.0
  %510 = vmatpush2.msra.mxu0 0.0
  %511 = vmatprep.subr.mxu0 0.0
  %512 = vmatpush2.msra.mxu0 0.0
  %513 = vmatprep.subr.mxu0 0.0
  %514 = vmatpush2.msra.mxu0 0.0
  %515 = vmatprep.subr.mxu0 0.0
  %516 = vmatpush2.msra.mxu0 0.0
  %517 = vmatprep.subr.mxu0 0.0
  %518 = vmatpush2.msra.mxu0 0.0
  %519 = vmatprep.subr.mxu0 0.0
  %520 = vmatpush2.msra.mxu0 0.0
  %521 = vmatprep.subr.mxu0 0.0
  %522 = vmatpush2.msra.mxu0 0.0
  %523 = vmatprep.subr.mxu0 0.0
  %524 = vmatpush2.msra.mxu0 0.0
  %525 = vmatprep.subr.mxu0 0.0
  %526 = vmatpush2.msra.mxu0 0.0
  %527 = vmatprep.subr.mxu0 0.0
  %528 = vmatpush2.msra.mxu0 0.0
  %529 = vmatprep.subr.mxu0 0.0
  %530 = vmatpush2.msra.mxu0 0.0
  %531 = vmatprep.subr.mxu0 0.0
  %532 = vmatpush2.msra.mxu0 0.0
  %533 = vmatprep.subr.mxu0 0.0
  %534 = vmatpush2.msra.mxu0 0.0
  %535 = vmatprep.subr.mxu0 0.0
  %536 = vmatpush2.msra.mxu0 0.0
  %537 = vmatprep.mubr.f32.mxu0 0.0
  %538 = vmatmul.mubr.f32.gmra.mxu0 %v467
  %v539 = vpop.f32.mrf.mxu0
  %v540 = vadd.f32 0.0, %v539
  %v541 = vpop.f32.mrf.mxu0
  %542 = vdwg.mxu0
  %v544 = vsel %vm380, %v454, 0
  %546 = vmatprep.subr.mxu0 0.0
  %547 = vmatpush1.msra.mxu0 0.0
  %548 = vmatprep.subr.mxu0 0.0
  %549 = vmatpush1.msra.mxu0 0.0
  %550 = vmatprep.subr.mxu0 0.0
  %551 = vmatpush1.msra.mxu0 0.0
  %552 = vmatprep.subr.mxu0 0.0
  %553 = vmatpush1.msra.mxu0 0.0
  %554 = vmatprep.subr.mxu0 0.0
  %555 = vmatpush1.msra.mxu0 0.0
  %556 = vmatprep.subr.mxu0 0.0
  %557 = vmatpush1.msra.mxu0 0.0
  %558 = vmatprep.subr.mxu0 0.0
  %559 = vmatpush1.msra.mxu0 0.0
  %560 = vmatprep.subr.mxu0 0.0
  %561 = vmatpush1.msra.mxu0 0.0
  %562 = vmatprep.subr.mxu0 0.0
  %563 = vmatpush1.msra.mxu0 %v462
  %564 = vmatprep.subr.mxu0 0.0
  %565 = vmatpush1.msra.mxu0 %v461
  %566 = vmatprep.subr.mxu0 0.0
  %567 = vmatpush1.msra.mxu0 %v460
  %568 = vmatprep.subr.mxu0 0.0
  %569 = vmatpush1.msra.mxu0 %v459
  %570 = vmatprep.subr.mxu0 0.0
  %571 = vmatpush1.msra.mxu0 %v458
  %572 = vmatprep.subr.mxu0 0.0
  %573 = vmatpush1.msra.mxu0 %v457
  %574 = vmatprep.subr.mxu0 0.0
  %575 = vmatpush1.msra.mxu0 %v456
  %576 = vmatprep.subr.mxu0 0.0
  %577 = vmatpush1.msra.mxu0 %v455
  %578 = vmatprep.subr.mxu0 0.0
  %579 = vmatpush2.msra.mxu0 0.0
  %580 = vmatprep.subr.mxu0 0.0
  %581 = vmatpush2.msra.mxu0 0.0
  %582 = vmatprep.subr.mxu0 0.0
  %583 = vmatpush2.msra.mxu0 0.0
  %584 = vmatprep.subr.mxu0 0.0
  %585 = vmatpush2.msra.mxu0 0.0
  %586 = vmatprep.subr.mxu0 0.0
  %587 = vmatpush2.msra.mxu0 0.0
  %588 = vmatprep.subr.mxu0 0.0
  %589 = vmatpush2.msra.mxu0 0.0
  %590 = vmatprep.subr.mxu0 0.0
  %591 = vmatpush2.msra.mxu0 0.0
  %592 = vmatprep.subr.mxu0 0.0
  %593 = vmatpush2.msra.mxu0 0.0
  %594 = vmatprep.subr.mxu0 0.0
  %595 = vmatpush2.msra.mxu0 0.0
  %596 = vmatprep.subr.mxu0 0.0
  %597 = vmatpush2.msra.mxu0 0.0
  %598 = vmatprep.subr.mxu0 0.0
  %599 = vmatpush2.msra.mxu0 0.0
  %600 = vmatprep.subr.mxu0 0.0
  %601 = vmatpush2.msra.mxu0 0.0
  %602 = vmatprep.subr.mxu0 0.0
  %603 = vmatpush2.msra.mxu0 0.0
  %604 = vmatprep.subr.mxu0 0.0
  %605 = vmatpush2.msra.mxu0 0.0
  %606 = vmatprep.subr.mxu0 0.0
  %607 = vmatpush2.msra.mxu0 0.0
  %608 = vmatprep.subr.mxu0 0.0
  %609 = vmatpush2.msra.mxu0 0.0
  %610 = vmatprep.mubr.f32.mxu0 0.0
  %611 = vmatmul.mubr.f32.gmra.mxu0 %v544
  %v612 = vpop.f32.mrf.mxu0
  %v613 = vadd.f32 %v540, %v612
  %v614 = vpop.f32.mrf.mxu0
  %615 = vdwg.mxu0
  %v616 = vld [vmem:[%s4 + $0x2] sm:$0x1]
  %v617 = vlaneseq
  %v618 = vshrl.u32 %v617, 7
  %v619 = vsub.s32 0, %v618
  %v620 = vrot.slane %v616, %v619
  %v621 = vadd.f32 %v613, %v620
  %v622 = vld [vmem:[%s3 + $0x188] sm:$0xff]
  %v623 = vld [vmem:[%s3 + $0x190] sm:$0xff]
  %v624 = vld [vmem:[%s3 + $0x48] sm:$0xff]
  %v625 = vld [vmem:[%s3 + $0x50] sm:$0xff]
  %v626 = vld [vmem:[%s3 + $0x58] sm:$0xff]
  %v627 = vld [vmem:[%s3 + $0x60] sm:$0xff]
  %v628 = vld [vmem:[%s4 + $0xa] sm:$0x1]
  %v629 = vlaneseq
  %v630 = vshrl.u32 %v629, 7
  %v631 = vsub.s32 0, %v630
  %v632 = vrot.slane %v628, %v631
  %vm633 = vcmask 261120
  %v635 = vsel %vm633, %v621, 0
  %637 = vmatprep.subr.mxu0 0.0
  %638 = vmatpush1.msra.mxu0 0.0
  %639 = vmatprep.subr.mxu0 0.0
  %640 = vmatpush1.msra.mxu0 0.0
  %641 = vmatprep.subr.mxu0 0.0
  %642 = vmatpush1.msra.mxu0 0.0
  %643 = vmatprep.subr.mxu0 0.0
  %644 = vmatpush1.msra.mxu0 0.0
  %645 = vmatprep.subr.mxu0 0.0
  %646 = vmatpush1.msra.mxu0 0.0
  %647 = vmatprep.subr.mxu0 0.0
  %648 = vmatpush1.msra.mxu0 0.0
  %649 = vmatprep.subr.mxu0 0.0
  %650 = vmatpush1.msra.mxu0 0.0
  %651 = vmatprep.subr.mxu0 0.0
  %652 = vmatpush1.msra.mxu0 0.0
  %653 = vmatprep.subr.mxu0 0.0
  %654 = vmatpush1.msra.mxu0 0.0
  %655 = vmatprep.subr.mxu0 0.0
  %656 = vmatpush1.msra.mxu0 0.0
  %657 = vmatprep.subr.mxu0 0.0
  %658 = vmatpush1.msra.mxu0 0.0
  %659 = vmatprep.subr.mxu0 0.0
  %660 = vmatpush1.msra.mxu0 0.0
  %661 = vmatprep.subr.mxu0 0.0
  %662 = vmatpush1.msra.mxu0 %v627
  %663 = vmatprep.subr.mxu0 0.0
  %664 = vmatpush1.msra.mxu0 %v626
  %665 = vmatprep.subr.mxu0 0.0
  %666 = vmatpush1.msra.mxu0 %v625
  %667 = vmatprep.subr.mxu0 0.0
  %668 = vmatpush1.msra.mxu0 %v624
  %669 = vmatprep.subr.mxu0 0.0
  %670 = vmatpush2.msra.mxu0 0.0
  %671 = vmatprep.subr.mxu0 0.0
  %672 = vmatpush2.msra.mxu0 0.0
  %673 = vmatprep.subr.mxu0 0.0
  %674 = vmatpush2.msra.mxu0 0.0
  %675 = vmatprep.subr.mxu0 0.0
  %676 = vmatpush2.msra.mxu0 0.0
  %677 = vmatprep.subr.mxu0 0.0
  %678 = vmatpush2.msra.mxu0 0.0
  %679 = vmatprep.subr.mxu0 0.0
  %680 = vmatpush2.msra.mxu0 0.0
  %681 = vmatprep.subr.mxu0 0.0
  %682 = vmatpush2.msra.mxu0 0.0
  %683 = vmatprep.subr.mxu0 0.0
  %684 = vmatpush2.msra.mxu0 0.0
  %685 = vmatprep.subr.mxu0 0.0
  %686 = vmatpush2.msra.mxu0 0.0
  %687 = vmatprep.subr.mxu0 0.0
  %688 = vmatpush2.msra.mxu0 0.0
  %689 = vmatprep.subr.mxu0 0.0
  %690 = vmatpush2.msra.mxu0 0.0
  %691 = vmatprep.subr.mxu0 0.0
  %692 = vmatpush2.msra.mxu0 0.0
  %693 = vmatprep.subr.mxu0 0.0
  %694 = vmatpush2.msra.mxu0 0.0
  %695 = vmatprep.subr.mxu0 0.0
  %696 = vmatpush2.msra.mxu0 0.0
  %697 = vmatprep.subr.mxu0 0.0
  %698 = vmatpush2.msra.mxu0 0.0
  %699 = vmatprep.subr.mxu0 0.0
  %700 = vmatpush2.msra.mxu0 0.0
  %701 = vmatprep.mubr.f32.mxu0 0.0
  %702 = vmatmul.mubr.f32.gmra.mxu0 %v635
  %v703 = vpop.f32.mrf.mxu0
  %v704 = vadd.f32 %v632, %v703
  %v705 = vpop.f32.mrf.mxu0
  %706 = vdwg.mxu0
  %v709 = vunpack.c.l.s4 1966171168
  %v710 = vunpack.c.0.s8 %v709
  %v711 = vlaneseq
  %v712 = vshrl.u32 %v711, 7
  %v713 = vsub.s32 %v710, %v712
  %v714 = vrot.slane %v704, %v713
  %v715 = vcombine.high %v714, %v714
  %v717 = vunpack.c.l.s4 1966171168
  %v718 = vunpack.c.0.s8 %v717
  %v719 = vlaneseq
  %v720 = vshrl.u32 %v719, 7
  %v721 = vsub.s32 %v718, %v720
  %v722 = vrot.slane %v714, %v721
  %v724 = vunpack.c.l.s4 1966171168
  %v725 = vunpack.c.0.s8 %v724
  %v726 = vlaneseq
  %v727 = vshrl.u32 %v726, 7
  %v728 = vsub.s32 %v725, %v727
  %v729 = vrot.slane %v715, %v728
  %v730 = vlaneseq
  %v731 = vshrl.u32 %v730, 7
  %v732 = vsub.s32 0, %v731
  %v733 = vrot.slane %v722, %v732
  %v734 = vlaneseq
  %v735 = vshrl.u32 %v734, 7
  %v736 = vsub.s32 0, %v735
  %v737 = vrot.slane %v729, %v736
  %v740 = vadd.f32 %v733, %v622
  %v741 = vadd.f32 %v733, %v623
  %v742 = vadd.f32 %v737, %v622
  %v743 = vadd.f32 %v737, %v623
  %v744 = vsel %vm633, %v740, 0.0
  %745 = vadd.xlane.f32.xlu0 %v744
  %v746 = vpop.xlane.xlu0 %745
  %v747 = vsel %vm633, %v741, 0.0
  %748 = vadd.xlane.f32.xlu0 %v747
  %v749 = vpop.xlane.xlu0 %748
  %v750 = vsel %vm633, %v742, 0.0
  %751 = vadd.xlane.f32.xlu0 %v750
  %v752 = vpop.xlane.xlu0 %751
  %v753 = vsel %vm633, %v743, 0.0
  %754 = vadd.xlane.f32.xlu0 %v753
  %v755 = vpop.xlane.xlu0 %754
  %v756 = vrcp.pop 32.0
  %v757 = vmul.f32 %v746, %v756
  %v758 = vmul.f32 %v749, %v756
  %v759 = vmul.f32 %v752, %v756
  %v760 = vmul.f32 %v755, %v756
  %v761 = vmul.f32 %v740, %v740
  %v762 = vmul.f32 %v741, %v741
  %v763 = vmul.f32 %v742, %v742
  %v764 = vmul.f32 %v743, %v743
  %v765 = vsel %vm633, %v761, 0.0
  %766 = vadd.xlane.f32.xlu0 %v765
  %v767 = vpop.xlane.xlu0 %766
  %v768 = vsel %vm633, %v762, 0.0
  %769 = vadd.xlane.f32.xlu0 %v768
  %v770 = vpop.xlane.xlu0 %769
  %v771 = vsel %vm633, %v763, 0.0
  %772 = vadd.xlane.f32.xlu0 %v771
  %v773 = vpop.xlane.xlu0 %772
  %v774 = vsel %vm633, %v764, 0.0
  %775 = vadd.xlane.f32.xlu0 %v774
  %v776 = vpop.xlane.xlu0 %775
  %v777 = vmul.f32 %v767, %v756
  %v778 = vmul.f32 %v770, %v756
  %v779 = vmul.f32 %v773, %v756
  %v780 = vmul.f32 %v776, %v756
  %v781 = vmul.f32 %v757, %v757
  %v782 = vmul.f32 %v758, %v758
  %v783 = vmul.f32 %v759, %v759
  %v784 = vmul.f32 %v760, %v760
  %v785 = vsub.f32 %v777, %v781
  %v786 = vsub.f32 %v778, %v782
  %v787 = vsub.f32 %v779, %v783
  %v788 = vsub.f32 %v780, %v784
  %v789 = vadd.f32 %v785, 1e-05
  %v790 = vadd.f32 %v786, 1e-05
  %v791 = vadd.f32 %v787, 1e-05
  %v792 = vadd.f32 %v788, 1e-05
  %v793 = vrsqrt.pop %v789
  %v794 = vrsqrt.pop %v790
  %v795 = vrsqrt.pop %v791
  %v796 = vrsqrt.pop %v792
  %v797 = vsub.f32 %v740, %v757
  %v798 = vsub.f32 %v741, %v758
  %v799 = vsub.f32 %v742, %v759
  %v800 = vsub.f32 %v743, %v760
  %v801 = vmul.f32 %v797, %v793
  %v802 = vmul.f32 %v798, %v794
  %v803 = vmul.f32 %v799, %v795
  %v804 = vmul.f32 %v800, %v796
  %v805 = vld [vmem:[%s4 + $0xd] sm:$0x1]
  %v806 = vlaneseq
  %v807 = vshrl.u32 %v806, 7
  %v808 = vsub.s32 0, %v807
  %v809 = vrot.slane %v805, %v808
  %v810 = vmul.f32 %v801, %v809
  %v811 = vmul.f32 %v802, %v809
  %v812 = vmul.f32 %v803, %v809
  %v813 = vmul.f32 %v804, %v809
  %v814 = vld [vmem:[%s4 + $0xe] sm:$0x1]
  %v815 = vlaneseq
  %v816 = vshrl.u32 %v815, 7
  %v817 = vsub.s32 0, %v816
  %v818 = vrot.slane %v814, %v817
  %v819 = vadd.f32 %v810, %v818
  %v820 = vadd.f32 %v811, %v818
  %v821 = vadd.f32 %v812, %v818
  %v822 = vadd.f32 %v813, %v818
  %v823 = vld [vmem:[%s2 + $0x340] sm:$0xff]
  %v824 = vld [vmem:[%s2 + $0x348] sm:$0xff]
  %v825 = vld [vmem:[%s2 + $0x350] sm:$0xff]
  %v826 = vld [vmem:[%s2 + $0x358] sm:$0xff]
  %v827 = vld [vmem:[%s4 + $0xb] sm:$0x1]
  %v828 = vlaneseq
  %v829 = vshrl.u32 %v828, 7
  %v830 = vsub.s32 0, %v829
  %v831 = vrot.slane %v827, %v830
  %v833 = vsel %vm633, %v819, 0
  %v836 = vsel %vm633, %v820, 0
  %v839 = vsel %vm633, %v821, 0
  %v842 = vsel %vm633, %v822, 0
  %844 = vmatprep.subr.mxu0 0.0
  %845 = vmatpush1.msra.mxu0 0.0
  %846 = vmatprep.subr.mxu0 0.0
  %847 = vmatpush1.msra.mxu0 0.0
  %848 = vmatprep.subr.mxu0 0.0
  %849 = vmatpush1.msra.mxu0 0.0
  %850 = vmatprep.subr.mxu0 0.0
  %851 = vmatpush1.msra.mxu0 0.0
  %852 = vmatprep.subr.mxu0 0.0
  %853 = vmatpush1.msra.mxu0 0.0
  %854 = vmatprep.subr.mxu0 0.0
  %855 = vmatpush1.msra.mxu0 0.0
  %856 = vmatprep.subr.mxu0 0.0
  %857 = vmatpush1.msra.mxu0 0.0
  %858 = vmatprep.subr.mxu0 0.0
  %859 = vmatpush1.msra.mxu0 0.0
  %860 = vmatprep.subr.mxu0 0.0
  %861 = vmatpush1.msra.mxu0 0.0
  %862 = vmatprep.subr.mxu0 0.0
  %863 = vmatpush1.msra.mxu0 0.0
  %864 = vmatprep.subr.mxu0 0.0
  %865 = vmatpush1.msra.mxu0 0.0
  %866 = vmatprep.subr.mxu0 0.0
  %867 = vmatpush1.msra.mxu0 0.0
  %868 = vmatprep.subr.mxu0 0.0
  %869 = vmatpush1.msra.mxu0 %v826
  %870 = vmatprep.subr.mxu0 0.0
  %871 = vmatpush1.msra.mxu0 %v825
  %872 = vmatprep.subr.mxu0 0.0
  %873 = vmatpush1.msra.mxu0 %v824
  %874 = vmatprep.subr.mxu0 0.0
  %875 = vmatpush1.msra.mxu0 %v823
  %876 = vmatprep.subr.mxu0 0.0
  %877 = vmatpush2.msra.mxu0 0.0
  %878 = vmatprep.subr.mxu0 0.0
  %879 = vmatpush2.msra.mxu0 0.0
  %880 = vmatprep.subr.mxu0 0.0
  %881 = vmatpush2.msra.mxu0 0.0
  %882 = vmatprep.subr.mxu0 0.0
  %883 = vmatpush2.msra.mxu0 0.0
  %884 = vmatprep.subr.mxu0 0.0
  %885 = vmatpush2.msra.mxu0 0.0
  %886 = vmatprep.subr.mxu0 0.0
  %887 = vmatpush2.msra.mxu0 0.0
  %888 = vmatprep.subr.mxu0 0.0
  %889 = vmatpush2.msra.mxu0 0.0
  %890 = vmatprep.subr.mxu0 0.0
  %891 = vmatpush2.msra.mxu0 0.0
  %892 = vmatprep.subr.mxu0 0.0
  %893 = vmatpush2.msra.mxu0 0.0
  %894 = vmatprep.subr.mxu0 0.0
  %895 = vmatpush2.msra.mxu0 0.0
  %896 = vmatprep.subr.mxu0 0.0
  %897 = vmatpush2.msra.mxu0 0.0
  %898 = vmatprep.subr.mxu0 0.0
  %899 = vmatpush2.msra.mxu0 0.0
  %900 = vmatprep.subr.mxu0 0.0
  %901 = vmatpush2.msra.mxu0 0.0
  %902 = vmatprep.subr.mxu0 0.0
  %903 = vmatpush2.msra.mxu0 0.0
  %904 = vmatprep.subr.mxu0 0.0
  %905 = vmatpush2.msra.mxu0 0.0
  %906 = vmatprep.subr.mxu0 0.0
  %907 = vmatpush2.msra.mxu0 0.0
  %908 = vmatprep.mubr.f32.mxu0 0.0
  %909 = vmatmul.mubr.f32.gmra.mxu0 %v833
  %v910 = vpop.f32.mrf.mxu0
  %v911 = vadd.f32 %v831, %v910
  %v912 = vpop.f32.mrf.mxu0
  %913 = vmatprep.mubr.f32.mxu0 0.0
  %914 = vmatmul.mubr.f32.gmra.mxu0 %v836
  %v915 = vpop.f32.mrf.mxu0
  %v916 = vadd.f32 %v831, %v915
  %v917 = vpop.f32.mrf.mxu0
  %918 = vmatprep.mubr.f32.mxu0 0.0
  %919 = vmatmul.mubr.f32.gmra.mxu0 %v839
  %v920 = vpop.f32.mrf.mxu0
  %v921 = vadd.f32 %v831, %v920
  %v922 = vpop.f32.mrf.mxu0
  %923 = vmatprep.mubr.f32.mxu0 0.0
  %924 = vmatmul.mubr.f32.gmra.mxu0 %v842
  %v925 = vpop.f32.mrf.mxu0
  %v926 = vadd.f32 %v831, %v925
  %v927 = vpop.f32.mrf.mxu0
  %928 = vdwg.mxu0
  %v929 = vmax.f32 %v911, 0.0
  %v930 = vmax.f32 %v916, 0.0
  %v931 = vmax.f32 %v921, 0.0
  %v932 = vmax.f32 %v926, 0.0
  %v933 = vld [vmem:[%s3 + $0x88] sm:$0xff]
  %v934 = vld [vmem:[%s3 + $0x90] sm:$0xff]
  %v935 = vld [vmem:[%s3 + $0x98] sm:$0xff]
  %v936 = vld [vmem:[%s3 + $0xa0] sm:$0xff]
  %v937 = vld [vmem:[%s3 + $0xa8] sm:$0xff]
  %v938 = vld [vmem:[%s3 + $0xb0] sm:$0xff]
  %v939 = vld [vmem:[%s3 + $0xb8] sm:$0xff]
  %v940 = vld [vmem:[%s3 + $0xc0] sm:$0xff]
  %v941 = vld [vmem:[%s4 + $0xc] sm:$0x1]
  %v942 = vlaneseq
  %v943 = vshrl.u32 %v942, 7
  %v944 = vsub.s32 0, %v943
  %v945 = vrot.slane %v941, %v944
  %v947 = vsel %vm380, %v929, 0
  %v950 = vsel %vm380, %v930, 0
  %v953 = vsel %vm380, %v931, 0
  %v956 = vsel %vm380, %v932, 0
  %958 = vmatprep.subr.mxu0 0.0
  %959 = vmatpush1.msra.mxu0 0.0
  %960 = vmatprep.subr.mxu0 0.0
  %961 = vmatpush1.msra.mxu0 0.0
  %962 = vmatprep.subr.mxu0 0.0
  %963 = vmatpush1.msra.mxu0 0.0
  %964 = vmatprep.subr.mxu0 0.0
  %965 = vmatpush1.msra.mxu0 0.0
  %966 = vmatprep.subr.mxu0 0.0
  %967 = vmatpush1.msra.mxu0 0.0
  %968 = vmatprep.subr.mxu0 0.0
  %969 = vmatpush1.msra.mxu0 0.0
  %970 = vmatprep.subr.mxu0 0.0
  %971 = vmatpush1.msra.mxu0 0.0
  %972 = vmatprep.subr.mxu0 0.0
  %973 = vmatpush1.msra.mxu0 0.0
  %974 = vmatprep.subr.mxu0 0.0
  %975 = vmatpush1.msra.mxu0 %v940
  %976 = vmatprep.subr.mxu0 0.0
  %977 = vmatpush1.msra.mxu0 %v939
  %978 = vmatprep.subr.mxu0 0.0
  %979 = vmatpush1.msra.mxu0 %v938
  %980 = vmatprep.subr.mxu0 0.0
  %981 = vmatpush1.msra.mxu0 %v937
  %982 = vmatprep.subr.mxu0 0.0
  %983 = vmatpush1.msra.mxu0 %v936
  %984 = vmatprep.subr.mxu0 0.0
  %985 = vmatpush1.msra.mxu0 %v935
  %986 = vmatprep.subr.mxu0 0.0
  %987 = vmatpush1.msra.mxu0 %v934
  %988 = vmatprep.subr.mxu0 0.0
  %989 = vmatpush1.msra.mxu0 %v933
  %990 = vmatprep.subr.mxu0 0.0
  %991 = vmatpush2.msra.mxu0 0.0
  %992 = vmatprep.subr.mxu0 0.0
  %993 = vmatpush2.msra.mxu0 0.0
  %994 = vmatprep.subr.mxu0 0.0
  %995 = vmatpush2.msra.mxu0 0.0
  %996 = vmatprep.subr.mxu0 0.0
  %997 = vmatpush2.msra.mxu0 0.0
  %998 = vmatprep.subr.mxu0 0.0
  %999 = vmatpush2.msra.mxu0 0.0
  %1000 = vmatprep.subr.mxu0 0.0
  %1001 = vmatpush2.msra.mxu0 0.0
  %1002 = vmatprep.subr.mxu0 0.0
  %1003 = vmatpush2.msra.mxu0 0.0
  %1004 = vmatprep.subr.mxu0 0.0
  %1005 = vmatpush2.msra.mxu0 0.0
  %1006 = vmatprep.subr.mxu0 0.0
  %1007 = vmatpush2.msra.mxu0 0.0
  %1008 = vmatprep.subr.mxu0 0.0
  %1009 = vmatpush2.msra.mxu0 0.0
  %1010 = vmatprep.subr.mxu0 0.0
  %1011 = vmatpush2.msra.mxu0 0.0
  %1012 = vmatprep.subr.mxu0 0.0
  %1013 = vmatpush2.msra.mxu0 0.0
  %1014 = vmatprep.subr.mxu0 0.0
  %1015 = vmatpush2.msra.mxu0 0.0
  %1016 = vmatprep.subr.mxu0 0.0
  %1017 = vmatpush2.msra.mxu0 0.0
  %1018 = vmatprep.subr.mxu0 0.0
  %1019 = vmatpush2.msra.mxu0 0.0
  %1020 = vmatprep.subr.mxu0 0.0
  %1021 = vmatpush2.msra.mxu0 0.0
  %1022 = vmatprep.mubr.f32.mxu0 0.0
  %1023 = vmatmul.mubr.f32.gmra.mxu0 %v947
  %v1024 = vpop.f32.mrf.mxu0
  %v1025 = vadd.f32 %v945, %v1024
  %v1026 = vpop.f32.mrf.mxu0
  %1027 = vmatprep.mubr.f32.mxu0 0.0
  %1028 = vmatmul.mubr.f32.gmra.mxu0 %v950
  %v1029 = vpop.f32.mrf.mxu0
  %v1030 = vadd.f32 %v945, %v1029
  %v1031 = vpop.f32.mrf.mxu0
  %1032 = vmatprep.mubr.f32.mxu0 0.0
  %1033 = vmatmul.mubr.f32.gmra.mxu0 %v953
  %v1034 = vpop.f32.mrf.mxu0
  %v1035 = vadd.f32 %v945, %v1034
  %v1036 = vpop.f32.mrf.mxu0
  %1037 = vmatprep.mubr.f32.mxu0 0.0
  %1038 = vmatmul.mubr.f32.gmra.mxu0 %v956
  %v1039 = vpop.f32.mrf.mxu0
  %v1040 = vadd.f32 %v945, %v1039
  %v1041 = vpop.f32.mrf.mxu0
  %1042 = vdwg.mxu0
  %v1043 = vadd.f32 %v1025, %v819
  %v1044 = vadd.f32 %v1030, %v820
  %v1045 = vadd.f32 %v1035, %v821
  %v1046 = vadd.f32 %v1040, %v822
  %v1047 = vsel %vm633, %v1043, 0.0
  %1048 = vadd.xlane.f32.xlu0 %v1047
  %v1049 = vpop.xlane.xlu0 %1048
  %v1050 = vsel %vm633, %v1044, 0.0
  %1051 = vadd.xlane.f32.xlu0 %v1050
  %v1052 = vpop.xlane.xlu0 %1051
  %v1053 = vsel %vm633, %v1045, 0.0
  %1054 = vadd.xlane.f32.xlu0 %v1053
  %v1055 = vpop.xlane.xlu0 %1054
  %v1056 = vsel %vm633, %v1046, 0.0
  %1057 = vadd.xlane.f32.xlu0 %v1056
  %v1058 = vpop.xlane.xlu0 %1057
  %v1059 = vmul.f32 %v1049, %v756
  %v1060 = vmul.f32 %v1052, %v756
  %v1061 = vmul.f32 %v1055, %v756
  %v1062 = vmul.f32 %v1058, %v756
  %v1063 = vmul.f32 %v1043, %v1043
  %v1064 = vmul.f32 %v1044, %v1044
  %v1065 = vmul.f32 %v1045, %v1045
  %v1066 = vmul.f32 %v1046, %v1046
  %v1067 = vsel %vm633, %v1063, 0.0
  %1068 = vadd.xlane.f32.xlu0 %v1067
  %v1069 = vpop.xlane.xlu0 %1068
  %v1070 = vsel %vm633, %v1064, 0.0
  %1071 = vadd.xlane.f32.xlu0 %v1070
  %v1072 = vpop.xlane.xlu0 %1071
  %v1073 = vsel %vm633, %v1065, 0.0
  %1074 = vadd.xlane.f32.xlu0 %v1073
  %v1075 = vpop.xlane.xlu0 %1074
  %v1076 = vsel %vm633, %v1066, 0.0
  %1077 = vadd.xlane.f32.xlu0 %v1076
  %v1078 = vpop.xlane.xlu0 %1077
  %v1079 = vmul.f32 %v1069, %v756
  %v1080 = vmul.f32 %v1072, %v756
  %v1081 = vmul.f32 %v1075, %v756
  %v1082 = vmul.f32 %v1078, %v756
  %v1083 = vmul.f32 %v1059, %v1059
  %v1084 = vmul.f32 %v1060, %v1060
  %v1085 = vmul.f32 %v1061, %v1061
  %v1086 = vmul.f32 %v1062, %v1062
  %v1087 = vsub.f32 %v1079, %v1083
  %v1088 = vsub.f32 %v1080, %v1084
  %v1089 = vsub.f32 %v1081, %v1085
  %v1090 = vsub.f32 %v1082, %v1086
  %v1091 = vadd.f32 %v1087, 1e-05
  %v1092 = vadd.f32 %v1088, 1e-05
  %v1093 = vadd.f32 %v1089, 1e-05
  %v1094 = vadd.f32 %v1090, 1e-05
  %v1095 = vrsqrt.pop %v1091
  %v1096 = vrsqrt.pop %v1092
  %v1097 = vrsqrt.pop %v1093
  %v1098 = vrsqrt.pop %v1094
  %v1099 = vsub.f32 %v1043, %v1059
  %v1100 = vsub.f32 %v1044, %v1060
  %v1101 = vsub.f32 %v1045, %v1061
  %v1102 = vsub.f32 %v1046, %v1062
  %v1103 = vmul.f32 %v1099, %v1095
  %v1104 = vmul.f32 %v1100, %v1096
  %v1105 = vmul.f32 %v1101, %v1097
  %v1106 = vmul.f32 %v1102, %v1098
  %v1107 = vld [vmem:[%s4 + $0xf] sm:$0x1]
  %v1108 = vlaneseq
  %v1109 = vshrl.u32 %v1108, 7
  %v1110 = vsub.s32 0, %v1109
  %v1111 = vrot.slane %v1107, %v1110
  %v1112 = vmul.f32 %v1103, %v1111
  %v1113 = vmul.f32 %v1104, %v1111
  %v1114 = vmul.f32 %v1105, %v1111
  %v1115 = vmul.f32 %v1106, %v1111
  %v1116 = vld [vmem:[%s4 + $0x10] sm:$0x1]
  %v1117 = vlaneseq
  %v1118 = vshrl.u32 %v1117, 7
  %v1119 = vsub.s32 0, %v1118
  %v1120 = vrot.slane %v1116, %v1119
  %v1121 = vadd.f32 %v1112, %v1120
  %v1122 = vadd.f32 %v1113, %v1120
  %v1123 = vadd.f32 %v1114, %v1120
  %v1124 = vadd.f32 %v1115, %v1120
  %v1125 = vld [vmem:[%s3 + $0x108] sm:$0xff]
  %v1126 = vld [vmem:[%s3 + $0x110] sm:$0xff]
  %v1127 = vld [vmem:[%s3 + $0x118] sm:$0xff]
  %v1128 = vld [vmem:[%s3 + $0x120] sm:$0xff]
  %v1129 = vld [vmem:[%s4 + $0x4] sm:$0x1]
  %v1130 = vlaneseq
  %v1131 = vshrl.u32 %v1130, 7
  %v1132 = vsub.s32 0, %v1131
  %v1133 = vrot.slane %v1129, %v1132
  %v1135 = vsel %vm633, %v1121, 0
  %v1138 = vsel %vm633, %v1122, 0
  %v1141 = vsel %vm633, %v1123, 0
  %v1144 = vsel %vm633, %v1124, 0
  %1146 = vmatprep.subr.mxu0 0.0
  %1147 = vmatpush1.msra.mxu0 0.0
  %1148 = vmatprep.subr.mxu0 0.0
  %1149 = vmatpush1.msra.mxu0 0.0
  %1150 = vmatprep.subr.mxu0 0.0
  %1151 = vmatpush1.msra.mxu0 0.0
  %1152 = vmatprep.subr.mxu0 0.0
  %1153 = vmatpush1.msra.mxu0 0.0
  %1154 = vmatprep.subr.mxu0 0.0
  %1155 = vmatpush1.msra.mxu0 0.0
  %1156 = vmatprep.subr.mxu0 0.0
  %1157 = vmatpush1.msra.mxu0 0.0
  %1158 = vmatprep.subr.mxu0 0.0
  %1159 = vmatpush1.msra.mxu0 0.0
  %1160 = vmatprep.subr.mxu0 0.0
  %1161 = vmatpush1.msra.mxu0 0.0
  %1162 = vmatprep.subr.mxu0 0.0
  %1163 = vmatpush1.msra.mxu0 0.0
  %1164 = vmatprep.subr.mxu0 0.0
  %1165 = vmatpush1.msra.mxu0 0.0
  %1166 = vmatprep.subr.mxu0 0.0
  %1167 = vmatpush1.msra.mxu0 0.0
  %1168 = vmatprep.subr.mxu0 0.0
  %1169 = vmatpush1.msra.mxu0 0.0
  %1170 = vmatprep.subr.mxu0 0.0
  %1171 = vmatpush1.msra.mxu0 %v1128
  %1172 = vmatprep.subr.mxu0 0.0
  %1173 = vmatpush1.msra.mxu0 %v1127
  %1174 = vmatprep.subr.mxu0 0.0
  %1175 = vmatpush1.msra.mxu0 %v1126
  %1176 = vmatprep.subr.mxu0 0.0
  %1177 = vmatpush1.msra.mxu0 %v1125
  %1178 = vmatprep.subr.mxu0 0.0
  %1179 = vmatpush2.msra.mxu0 0.0
  %1180 = vmatprep.subr.mxu0 0.0
  %1181 = vmatpush2.msra.mxu0 0.0
  %1182 = vmatprep.subr.mxu0 0.0
  %1183 = vmatpush2.msra.mxu0 0.0
  %1184 = vmatprep.subr.mxu0 0.0
  %1185 = vmatpush2.msra.mxu0 0.0
  %1186 = vmatprep.subr.mxu0 0.0
  %1187 = vmatpush2.msra.mxu0 0.0
  %1188 = vmatprep.subr.mxu0 0.0
  %1189 = vmatpush2.msra.mxu0 0.0
  %1190 = vmatprep.subr.mxu0 0.0
  %1191 = vmatpush2.msra.mxu0 0.0
  %1192 = vmatprep.subr.mxu0 0.0
  %1193 = vmatpush2.msra.mxu0 0.0
  %1194 = vmatprep.subr.mxu0 0.0
  %1195 = vmatpush2.msra.mxu0 0.0
  %1196 = vmatprep.subr.mxu0 0.0
  %1197 = vmatpush2.msra.mxu0 0.0
  %1198 = vmatprep.subr.mxu0 0.0
  %1199 = vmatpush2.msra.mxu0 0.0
  %1200 = vmatprep.subr.mxu0 0.0
  %1201 = vmatpush2.msra.mxu0 0.0
  %1202 = vmatprep.subr.mxu0 0.0
  %1203 = vmatpush2.msra.mxu0 0.0
  %1204 = vmatprep.subr.mxu0 0.0
  %1205 = vmatpush2.msra.mxu0 0.0
  %1206 = vmatprep.subr.mxu0 0.0
  %1207 = vmatpush2.msra.mxu0 0.0
  %1208 = vmatprep.subr.mxu0 0.0
  %1209 = vmatpush2.msra.mxu0 0.0
  %1210 = vmatprep.mubr.f32.mxu0 0.0
  %1211 = vmatmul.mubr.f32.gmra.mxu0 %v1135
  %v1212 = vpop.f32.mrf.mxu0
  %v1213 = vadd.f32 %v1133, %v1212
  %v1214 = vpop.f32.mrf.mxu0
  %1215 = vmatprep.mubr.f32.mxu0 0.0
  %1216 = vmatmul.mubr.f32.gmra.mxu0 %v1138
  %v1217 = vpop.f32.mrf.mxu0
  %v1218 = vadd.f32 %v1133, %v1217
  %v1219 = vpop.f32.mrf.mxu0
  %1220 = vmatprep.mubr.f32.mxu0 0.0
  %1221 = vmatmul.mubr.f32.gmra.mxu0 %v1141
  %v1222 = vpop.f32.mrf.mxu0
  %v1223 = vadd.f32 %v1133, %v1222
  %v1224 = vpop.f32.mrf.mxu0
  %1225 = vmatprep.mubr.f32.mxu0 0.0
  %1226 = vmatmul.mubr.f32.gmra.mxu0 %v1144
  %v1227 = vpop.f32.mrf.mxu0
  %v1228 = vadd.f32 %v1133, %v1227
  %v1229 = vpop.f32.mrf.mxu0
  %1230 = vdwg.mxu0
  %v1231 = vld [vmem:[%s3 + $0x128] sm:$0xff]
  %v1232 = vld [vmem:[%s3 + $0x130] sm:$0xff]
  %v1233 = vld [vmem:[%s3 + $0x138] sm:$0xff]
  %v1234 = vld [vmem:[%s3 + $0x140] sm:$0xff]
  %v1235 = vld [vmem:[%s4 + $0x5] sm:$0x1]
  %v1236 = vlaneseq
  %v1237 = vshrl.u32 %v1236, 7
  %v1238 = vsub.s32 0, %v1237
  %v1239 = vrot.slane %v1235, %v1238
  %1240 = vmatprep.subr.mxu0 0.0
  %1241 = vmatpush1.msra.mxu0 0.0
  %1242 = vmatprep.subr.mxu0 0.0
  %1243 = vmatpush1.msra.mxu0 0.0
  %1244 = vmatprep.subr.mxu0 0.0
  %1245 = vmatpush1.msra.mxu0 0.0
  %1246 = vmatprep.subr.mxu0 0.0
  %1247 = vmatpush1.msra.mxu0 0.0
  %1248 = vmatprep.subr.mxu0 0.0
  %1249 = vmatpush1.msra.mxu0 0.0
  %1250 = vmatprep.subr.mxu0 0.0
  %1251 = vmatpush1.msra.mxu0 0.0
  %1252 = vmatprep.subr.mxu0 0.0
  %1253 = vmatpush1.msra.mxu0 0.0
  %1254 = vmatprep.subr.mxu0 0.0
  %1255 = vmatpush1.msra.mxu0 0.0
  %1256 = vmatprep.subr.mxu0 0.0
  %1257 = vmatpush1.msra.mxu0 0.0
  %1258 = vmatprep.subr.mxu0 0.0
  %1259 = vmatpush1.msra.mxu0 0.0
  %1260 = vmatprep.subr.mxu0 0.0
  %1261 = vmatpush1.msra.mxu0 0.0
  %1262 = vmatprep.subr.mxu0 0.0
  %1263 = vmatpush1.msra.mxu0 0.0
  %1264 = vmatprep.subr.mxu0 0.0
  %1265 = vmatpush1.msra.mxu0 %v1234
  %1266 = vmatprep.subr.mxu0 0.0
  %1267 = vmatpush1.msra.mxu0 %v1233
  %1268 = vmatprep.subr.mxu0 0.0
  %1269 = vmatpush1.msra.mxu0 %v1232
  %1270 = vmatprep.subr.mxu0 0.0
  %1271 = vmatpush1.msra.mxu0 %v1231
  %1272 = vmatprep.subr.mxu0 0.0
  %1273 = vmatpush2.msra.mxu0 0.0
  %1274 = vmatprep.subr.mxu0 0.0
  %1275 = vmatpush2.msra.mxu0 0.0
  %1276 = vmatprep.subr.mxu0 0.0
  %1277 = vmatpush2.msra.mxu0 0.0
  %1278 = vmatprep.subr.mxu0 0.0
  %1279 = vmatpush2.msra.mxu0 0.0
  %1280 = vmatprep.subr.mxu0 0.0
  %1281 = vmatpush2.msra.mxu0 0.0
  %1282 = vmatprep.subr.mxu0 0.0
  %1283 = vmatpush2.msra.mxu0 0.0
  %1284 = vmatprep.subr.mxu0 0.0
  %1285 = vmatpush2.msra.mxu0 0.0
  %1286 = vmatprep.subr.mxu0 0.0
  %1287 = vmatpush2.msra.mxu0 0.0
  %1288 = vmatprep.subr.mxu0 0.0
  %1289 = vmatpush2.msra.mxu0 0.0
  %1290 = vmatprep.subr.mxu0 0.0
  %1291 = vmatpush2.msra.mxu0 0.0
  %1292 = vmatprep.subr.mxu0 0.0
  %1293 = vmatpush2.msra.mxu0 0.0
  %1294 = vmatprep.subr.mxu0 0.0
  %1295 = vmatpush2.msra.mxu0 0.0
  %1296 = vmatprep.subr.mxu0 0.0
  %1297 = vmatpush2.msra.mxu0 0.0
  %1298 = vmatprep.subr.mxu0 0.0
  %1299 = vmatpush2.msra.mxu0 0.0
  %1300 = vmatprep.subr.mxu0 0.0
  %1301 = vmatpush2.msra.mxu0 0.0
  %1302 = vmatprep.subr.mxu0 0.0
  %1303 = vmatpush2.msra.mxu0 0.0
  %1304 = vmatprep.mubr.f32.mxu0 0.0
  %1305 = vmatmul.mubr.f32.gmra.mxu0 %v1135
  %v1306 = vpop.f32.mrf.mxu0
  %v1307 = vadd.f32 %v1239, %v1306
  %v1308 = vpop.f32.mrf.mxu0
  %1309 = vmatprep.mubr.f32.mxu0 0.0
  %1310 = vmatmul.mubr.f32.gmra.mxu0 %v1138
  %v1311 = vpop.f32.mrf.mxu0
  %v1312 = vadd.f32 %v1239, %v1311
  %v1313 = vpop.f32.mrf.mxu0
  %1314 = vmatprep.mubr.f32.mxu0 0.0
  %1315 = vmatmul.mubr.f32.gmra.mxu0 %v1141
  %v1316 = vpop.f32.mrf.mxu0
  %v1317 = vadd.f32 %v1239, %v1316
  %v1318 = vpop.f32.mrf.mxu0
  %1319 = vmatprep.mubr.f32.mxu0 0.0
  %1320 = vmatmul.mubr.f32.gmra.mxu0 %v1144
  %v1321 = vpop.f32.mrf.mxu0
  %v1322 = vadd.f32 %v1239, %v1321
  %v1323 = vpop.f32.mrf.mxu0
  %1324 = vdwg.mxu0
  %v1325 = vld [vmem:[%s3 + $0x148] sm:$0xff]
  %v1326 = vld [vmem:[%s3 + $0x150] sm:$0xff]
  %v1327 = vld [vmem:[%s3 + $0x158] sm:$0xff]
  %v1328 = vld [vmem:[%s3 + $0x160] sm:$0xff]
  %v1329 = vld [vmem:[%s4 + $0x6] sm:$0x1]
  %v1330 = vlaneseq
  %v1331 = vshrl.u32 %v1330, 7
  %v1332 = vsub.s32 0, %v1331
  %v1333 = vrot.slane %v1329, %v1332
  %1334 = vmatprep.subr.mxu0 0.0
  %1335 = vmatpush1.msra.mxu0 0.0
  %1336 = vmatprep.subr.mxu0 0.0
  %1337 = vmatpush1.msra.mxu0 0.0
  %1338 = vmatprep.subr.mxu0 0.0
  %1339 = vmatpush1.msra.mxu0 0.0
  %1340 = vmatprep.subr.mxu0 0.0
  %1341 = vmatpush1.msra.mxu0 0.0
  %1342 = vmatprep.subr.mxu0 0.0
  %1343 = vmatpush1.msra.mxu0 0.0
  %1344 = vmatprep.subr.mxu0 0.0
  %1345 = vmatpush1.msra.mxu0 0.0
  %1346 = vmatprep.subr.mxu0 0.0
  %1347 = vmatpush1.msra.mxu0 0.0
  %1348 = vmatprep.subr.mxu0 0.0
  %1349 = vmatpush1.msra.mxu0 0.0
  %1350 = vmatprep.subr.mxu0 0.0
  %1351 = vmatpush1.msra.mxu0 0.0
  %1352 = vmatprep.subr.mxu0 0.0
  %1353 = vmatpush1.msra.mxu0 0.0
  %1354 = vmatprep.subr.mxu0 0.0
  %1355 = vmatpush1.msra.mxu0 0.0
  %1356 = vmatprep.subr.mxu0 0.0
  %1357 = vmatpush1.msra.mxu0 0.0
  %1358 = vmatprep.subr.mxu0 0.0
  %1359 = vmatpush1.msra.mxu0 %v1328
  %1360 = vmatprep.subr.mxu0 0.0
  %1361 = vmatpush1.msra.mxu0 %v1327
  %1362 = vmatprep.subr.mxu0 0.0
  %1363 = vmatpush1.msra.mxu0 %v1326
  %1364 = vmatprep.subr.mxu0 0.0
  %1365 = vmatpush1.msra.mxu0 %v1325
  %1366 = vmatprep.subr.mxu0 0.0
  %1367 = vmatpush2.msra.mxu0 0.0
  %1368 = vmatprep.subr.mxu0 0.0
  %1369 = vmatpush2.msra.mxu0 0.0
  %1370 = vmatprep.subr.mxu0 0.0
  %1371 = vmatpush2.msra.mxu0 0.0
  %1372 = vmatprep.subr.mxu0 0.0
  %1373 = vmatpush2.msra.mxu0 0.0
  %1374 = vmatprep.subr.mxu0 0.0
  %1375 = vmatpush2.msra.mxu0 0.0
  %1376 = vmatprep.subr.mxu0 0.0
  %1377 = vmatpush2.msra.mxu0 0.0
  %1378 = vmatprep.subr.mxu0 0.0
  %1379 = vmatpush2.msra.mxu0 0.0
  %1380 = vmatprep.subr.mxu0 0.0
  %1381 = vmatpush2.msra.mxu0 0.0
  %1382 = vmatprep.subr.mxu0 0.0
  %1383 = vmatpush2.msra.mxu0 0.0
  %1384 = vmatprep.subr.mxu0 0.0
  %1385 = vmatpush2.msra.mxu0 0.0
  %1386 = vmatprep.subr.mxu0 0.0
  %1387 = vmatpush2.msra.mxu0 0.0
  %1388 = vmatprep.subr.mxu0 0.0
  %1389 = vmatpush2.msra.mxu0 0.0
  %1390 = vmatprep.subr.mxu0 0.0
  %1391 = vmatpush2.msra.mxu0 0.0
  %1392 = vmatprep.subr.mxu0 0.0
  %1393 = vmatpush2.msra.mxu0 0.0
  %1394 = vmatprep.subr.mxu0 0.0
  %1395 = vmatpush2.msra.mxu0 0.0
  %1396 = vmatprep.subr.mxu0 0.0
  %1397 = vmatpush2.msra.mxu0 0.0
  %1398 = vmatprep.mubr.f32.mxu0 0.0
  %1399 = vmatmul.mubr.f32.gmra.mxu0 %v1135
  %v1400 = vpop.f32.mrf.mxu0
  %v1401 = vadd.f32 %v1333, %v1400
  %v1402 = vpop.f32.mrf.mxu0
  %1403 = vmatprep.mubr.f32.mxu0 0.0
  %1404 = vmatmul.mubr.f32.gmra.mxu0 %v1138
  %v1405 = vpop.f32.mrf.mxu0
  %v1406 = vadd.f32 %v1333, %v1405
  %v1407 = vpop.f32.mrf.mxu0
  %1408 = vmatprep.mubr.f32.mxu0 0.0
  %1409 = vmatmul.mubr.f32.gmra.mxu0 %v1141
  %v1410 = vpop.f32.mrf.mxu0
  %v1411 = vadd.f32 %v1333, %v1410
  %v1412 = vpop.f32.mrf.mxu0
  %1413 = vmatprep.mubr.f32.mxu0 0.0
  %1414 = vmatmul.mubr.f32.gmra.mxu0 %v1144
  %v1415 = vpop.f32.mrf.mxu0
  %v1416 = vadd.f32 %v1333, %v1415
  %v1417 = vpop.f32.mrf.mxu0
  %1418 = vdwg.mxu0
  %vm1419 = vcmask 64512
  %v1421 = vsel %vm1419, %v1213, 0
  %v1424 = vsel %vm1419, %v1218, 0
  %v1427 = vsel %vm1419, %v1307, 0
  %v1430 = vsel %vm1419, %v1312, 0
  %1432 = vmatprep.subr.mxu0 0.0
  %1433 = vmatpush1.xpose.msra.mxu0 0.0
  %1434 = vmatprep.subr.mxu0 0.0
  %1435 = vmatpush1.xpose.msra.mxu0 0.0
  %1436 = vmatprep.subr.mxu0 0.0
  %1437 = vmatpush1.xpose.msra.mxu0 0.0
  %1438 = vmatprep.subr.mxu0 0.0
  %1439 = vmatpush1.xpose.msra.mxu0 0.0
  %1440 = vmatprep.subr.mxu0 0.0
  %1441 = vmatpush1.xpose.msra.mxu0 0.0
  %1442 = vmatprep.subr.mxu0 0.0
  %1443 = vmatpush1.xpose.msra.mxu0 0.0
  %1444 = vmatprep.subr.mxu0 0.0
  %1445 = vmatpush1.xpose.msra.mxu0 0.0
  %1446 = vmatprep.subr.mxu0 0.0
  %1447 = vmatpush1.xpose.msra.mxu0 0.0
  %1448 = vmatprep.subr.mxu0 0.0
  %1449 = vmatpush1.xpose.msra.mxu0 0.0
  %1450 = vmatprep.subr.mxu0 0.0
  %1451 = vmatpush1.xpose.msra.mxu0 0.0
  %1452 = vmatprep.subr.mxu0 0.0
  %1453 = vmatpush1.xpose.msra.mxu0 0.0
  %1454 = vmatprep.subr.mxu0 0.0
  %1455 = vmatpush1.xpose.msra.mxu0 0.0
  %1456 = vmatprep.subr.mxu0 0.0
  %1457 = vmatpush1.xpose.msra.mxu0 0.0
  %1458 = vmatprep.subr.mxu0 0.0
  %1459 = vmatpush1.xpose.msra.mxu0 0.0
  %1460 = vmatprep.subr.mxu0 0.0
  %1461 = vmatpush1.xpose.msra.mxu0 %v1430
  %1462 = vmatprep.subr.mxu0 0.0
  %1463 = vmatpush1.xpose.msra.mxu0 %v1427
  %1464 = vmatprep.subr.mxu0 0.0
  %1465 = vmatpush2.xpose.msra.mxu0 0.0
  %1466 = vmatprep.subr.mxu0 0.0
  %1467 = vmatpush2.xpose.msra.mxu0 0.0
  %1468 = vmatprep.subr.mxu0 0.0
  %1469 = vmatpush2.xpose.msra.mxu0 0.0
  %1470 = vmatprep.subr.mxu0 0.0
  %1471 = vmatpush2.xpose.msra.mxu0 0.0
  %1472 = vmatprep.subr.mxu0 0.0
  %1473 = vmatpush2.xpose.msra.mxu0 0.0
  %1474 = vmatprep.subr.mxu0 0.0
  %1475 = vmatpush2.xpose.msra.mxu0 0.0
  %1476 = vmatprep.subr.mxu0 0.0
  %1477 = vmatpush2.xpose.msra.mxu0 0.0
  %1478 = vmatprep.subr.mxu0 0.0
  %1479 = vmatpush2.xpose.msra.mxu0 0.0
  %1480 = vmatprep.subr.mxu0 0.0
  %1481 = vmatpush2.xpose.msra.mxu0 0.0
  %1482 = vmatprep.subr.mxu0 0.0
  %1483 = vmatpush2.xpose.msra.mxu0 0.0
  %1484 = vmatprep.subr.mxu0 0.0
  %1485 = vmatpush2.xpose.msra.mxu0 0.0
  %1486 = vmatprep.subr.mxu0 0.0
  %1487 = vmatpush2.xpose.msra.mxu0 0.0
  %1488 = vmatprep.subr.mxu0 0.0
  %1489 = vmatpush2.xpose.msra.mxu0 0.0
  %1490 = vmatprep.subr.mxu0 0.0
  %1491 = vmatpush2.xpose.msra.mxu0 0.0
  %1492 = vmatprep.subr.mxu0 0.0
  %1493 = vmatpush2.xpose.msra.mxu0 0.0
  %1494 = vmatprep.subr.mxu0 0.0
  %1495 = vmatpush2.xpose.msra.mxu0 0.0
  %1496 = vmatprep.mubr.f32.mxu0 0.0
  %1497 = vmatmul.mubr.f32.gmra.mxu0 %v1421
  %v1498 = vpop.f32.mrf.mxu0
  %v1499 = vadd.f32 0.0, %v1498
  %v1500 = vpop.f32.mrf.mxu0
  %1501 = vmatprep.mubr.f32.mxu0 0.0
  %1502 = vmatmul.mubr.f32.gmra.mxu0 %v1424
  %v1503 = vpop.f32.mrf.mxu0
  %v1504 = vadd.f32 0.0, %v1503
  %v1505 = vpop.f32.mrf.mxu0
  %1506 = vdwg.mxu0
  %v1508 = vsel %vm1419, %v1223, 0
  %v1511 = vsel %vm1419, %v1228, 0
  %v1514 = vsel %vm1419, %v1317, 0
  %v1517 = vsel %vm1419, %v1322, 0
  %1519 = vmatprep.subr.mxu0 0.0
  %1520 = vmatpush1.xpose.msra.mxu0 0.0
  %1521 = vmatprep.subr.mxu0 0.0
  %1522 = vmatpush1.xpose.msra.mxu0 0.0
  %1523 = vmatprep.subr.mxu0 0.0
  %1524 = vmatpush1.xpose.msra.mxu0 0.0
  %1525 = vmatprep.subr.mxu0 0.0
  %1526 = vmatpush1.xpose.msra.mxu0 0.0
  %1527 = vmatprep.subr.mxu0 0.0
  %1528 = vmatpush1.xpose.msra.mxu0 0.0
  %1529 = vmatprep.subr.mxu0 0.0
  %1530 = vmatpush1.xpose.msra.mxu0 0.0
  %1531 = vmatprep.subr.mxu0 0.0
  %1532 = vmatpush1.xpose.msra.mxu0 0.0
  %1533 = vmatprep.subr.mxu0 0.0
  %1534 = vmatpush1.xpose.msra.mxu0 0.0
  %1535 = vmatprep.subr.mxu0 0.0
  %1536 = vmatpush1.xpose.msra.mxu0 0.0
  %1537 = vmatprep.subr.mxu0 0.0
  %1538 = vmatpush1.xpose.msra.mxu0 0.0
  %1539 = vmatprep.subr.mxu0 0.0
  %1540 = vmatpush1.xpose.msra.mxu0 0.0
  %1541 = vmatprep.subr.mxu0 0.0
  %1542 = vmatpush1.xpose.msra.mxu0 0.0
  %1543 = vmatprep.subr.mxu0 0.0
  %1544 = vmatpush1.xpose.msra.mxu0 0.0
  %1545 = vmatprep.subr.mxu0 0.0
  %1546 = vmatpush1.xpose.msra.mxu0 0.0
  %1547 = vmatprep.subr.mxu0 0.0
  %1548 = vmatpush1.xpose.msra.mxu0 %v1517
  %1549 = vmatprep.subr.mxu0 0.0
  %1550 = vmatpush1.xpose.msra.mxu0 %v1514
  %1551 = vmatprep.subr.mxu0 0.0
  %1552 = vmatpush2.xpose.msra.mxu0 0.0
  %1553 = vmatprep.subr.mxu0 0.0
  %1554 = vmatpush2.xpose.msra.mxu0 0.0
  %1555 = vmatprep.subr.mxu0 0.0
  %1556 = vmatpush2.xpose.msra.mxu0 0.0
  %1557 = vmatprep.subr.mxu0 0.0
  %1558 = vmatpush2.xpose.msra.mxu0 0.0
  %1559 = vmatprep.subr.mxu0 0.0
  %1560 = vmatpush2.xpose.msra.mxu0 0.0
  %1561 = vmatprep.subr.mxu0 0.0
  %1562 = vmatpush2.xpose.msra.mxu0 0.0
  %1563 = vmatprep.subr.mxu0 0.0
  %1564 = vmatpush2.xpose.msra.mxu0 0.0
  %1565 = vmatprep.subr.mxu0 0.0
  %1566 = vmatpush2.xpose.msra.mxu0 0.0
  %1567 = vmatprep.subr.mxu0 0.0
  %1568 = vmatpush2.xpose.msra.mxu0 0.0
  %1569 = vmatprep.subr.mxu0 0.0
  %1570 = vmatpush2.xpose.msra.mxu0 0.0
  %1571 = vmatprep.subr.mxu0 0.0
  %1572 = vmatpush2.xpose.msra.mxu0 0.0
  %1573 = vmatprep.subr.mxu0 0.0
  %1574 = vmatpush2.xpose.msra.mxu0 0.0
  %1575 = vmatprep.subr.mxu0 0.0
  %1576 = vmatpush2.xpose.msra.mxu0 0.0
  %1577 = vmatprep.subr.mxu0 0.0
  %1578 = vmatpush2.xpose.msra.mxu0 0.0
  %1579 = vmatprep.subr.mxu0 0.0
  %1580 = vmatpush2.xpose.msra.mxu0 0.0
  %1581 = vmatprep.subr.mxu0 0.0
  %1582 = vmatpush2.xpose.msra.mxu0 0.0
  %1583 = vmatprep.mubr.f32.mxu0 0.0
  %1584 = vmatmul.mubr.f32.gmra.mxu0 %v1508
  %v1585 = vpop.f32.mrf.mxu0
  %v1586 = vadd.f32 0.0, %v1585
  %v1587 = vpop.f32.mrf.mxu0
  %1588 = vmatprep.mubr.f32.mxu0 0.0
  %1589 = vmatmul.mubr.f32.gmra.mxu0 %v1511
  %v1590 = vpop.f32.mrf.mxu0
  %v1591 = vadd.f32 0.0, %v1590
  %v1592 = vpop.f32.mrf.mxu0
  %1593 = vdwg.mxu0
  %v1594 = vmul.f32 %v1499, 0.35355338
  %v1595 = vmul.f32 %v1504, 0.35355338
  %v1596 = vmul.f32 %v1586, 0.35355338
  %v1597 = vmul.f32 %v1591, 0.35355338
  %vm1598 = vcmask 130048
  %v1599 = vsel %vm1598, %v1594, -inf
  %1600 = vmax.xlane.f32.xlu0 %v1599
  %v1601 = vpop.xlane.xlu0 %1600
  %v1602 = vsel %vm1598, %v1595, -inf
  %1603 = vmax.xlane.f32.xlu0 %v1602
  %v1604 = vpop.xlane.xlu0 %1603
  %v1605 = vsel %vm1598, %v1596, -inf
  %1606 = vmax.xlane.f32.xlu0 %v1605
  %v1607 = vpop.xlane.xlu0 %1606
  %v1608 = vsel %vm1598, %v1597, -inf
  %1609 = vmax.xlane.f32.xlu0 %v1608
  %v1610 = vpop.xlane.xlu0 %1609
  %v1611 = vsub.f32 %v1594, %v1601
  %v1612 = vsub.f32 %v1595, %v1604
  %v1613 = vsub.f32 %v1596, %v1607
  %v1614 = vsub.f32 %v1597, %v1610
  %v1615 = vmul.f32 %v1611, 1.442695
  %v1616 = vpow.pop %v1615
  %v1617 = vmul.f32 %v1612, 1.442695
  %v1618 = vpow.pop %v1617
  %v1619 = vmul.f32 %v1613, 1.442695
  %v1620 = vpow.pop %v1619
  %v1621 = vmul.f32 %v1614, 1.442695
  %v1622 = vpow.pop %v1621
  %v1623 = vsel %vm1598, %v1616, 0.0
  %1624 = vadd.xlane.f32.xlu0 %v1623
  %v1625 = vpop.xlane.xlu0 %1624
  %v1626 = vsel %vm1598, %v1618, 0.0
  %1627 = vadd.xlane.f32.xlu0 %v1626
  %v1628 = vpop.xlane.xlu0 %1627
  %v1629 = vsel %vm1598, %v1620, 0.0
  %1630 = vadd.xlane.f32.xlu0 %v1629
  %v1631 = vpop.xlane.xlu0 %1630
  %v1632 = vsel %vm1598, %v1622, 0.0
  %1633 = vadd.xlane.f32.xlu0 %v1632
  %v1634 = vpop.xlane.xlu0 %1633
  %v1635 = vrcp.pop %v1625
  %v1636 = vmul.f32 %v1616, %v1635
  %v1637 = vrcp.pop %v1628
  %v1638 = vmul.f32 %v1618, %v1637
  %v1639 = vrcp.pop %v1631
  %v1640 = vmul.f32 %v1620, %v1639
  %v1641 = vrcp.pop %v1634
  %v1642 = vmul.f32 %v1622, %v1641
  %v1644 = vsel %vm1598, %v1636, 0
  %v1647 = vsel %vm1598, %v1638, 0
  %1649 = vmatprep.subr.mxu0 0.0
  %1650 = vmatpush1.msra.mxu0 0.0
  %1651 = vmatprep.subr.mxu0 0.0
  %1652 = vmatpush1.msra.mxu0 0.0
  %1653 = vmatprep.subr.mxu0 0.0
  %1654 = vmatpush1.msra.mxu0 0.0
  %1655 = vmatprep.subr.mxu0 0.0
  %1656 = vmatpush1.msra.mxu0 0.0
  %1657 = vmatprep.subr.mxu0 0.0
  %1658 = vmatpush1.msra.mxu0 0.0
  %1659 = vmatprep.subr.mxu0 0.0
  %1660 = vmatpush1.msra.mxu0 0.0
  %1661 = vmatprep.subr.mxu0 0.0
  %1662 = vmatpush1.msra.mxu0 0.0
  %1663 = vmatprep.subr.mxu0 0.0
  %1664 = vmatpush1.msra.mxu0 0.0
  %1665 = vmatprep.subr.mxu0 0.0
  %1666 = vmatpush1.msra.mxu0 0.0
  %1667 = vmatprep.subr.mxu0 0.0
  %1668 = vmatpush1.msra.mxu0 0.0
  %1669 = vmatprep.subr.mxu0 0.0
  %1670 = vmatpush1.msra.mxu0 0.0
  %1671 = vmatprep.subr.mxu0 0.0
  %1672 = vmatpush1.msra.mxu0 0.0
  %1673 = vmatprep.subr.mxu0 0.0
  %1674 = vmatpush1.msra.mxu0 0.0
  %1675 = vmatprep.subr.mxu0 0.0
  %1676 = vmatpush1.msra.mxu0 0.0
  %1677 = vmatprep.subr.mxu0 0.0
  %1678 = vmatpush1.msra.mxu0 %v1406
  %1679 = vmatprep.subr.mxu0 0.0
  %1680 = vmatpush1.msra.mxu0 %v1401
  %1681 = vmatprep.subr.mxu0 0.0
  %1682 = vmatpush2.msra.mxu0 0.0
  %1683 = vmatprep.subr.mxu0 0.0
  %1684 = vmatpush2.msra.mxu0 0.0
  %1685 = vmatprep.subr.mxu0 0.0
  %1686 = vmatpush2.msra.mxu0 0.0
  %1687 = vmatprep.subr.mxu0 0.0
  %1688 = vmatpush2.msra.mxu0 0.0
  %1689 = vmatprep.subr.mxu0 0.0
  %1690 = vmatpush2.msra.mxu0 0.0
  %1691 = vmatprep.subr.mxu0 0.0
  %1692 = vmatpush2.msra.mxu0 0.0
  %1693 = vmatprep.subr.mxu0 0.0
  %1694 = vmatpush2.msra.mxu0 0.0
  %1695 = vmatprep.subr.mxu0 0.0
  %1696 = vmatpush2.msra.mxu0 0.0
  %1697 = vmatprep.subr.mxu0 0.0
  %1698 = vmatpush2.msra.mxu0 0.0
  %1699 = vmatprep.subr.mxu0 0.0
  %1700 = vmatpush2.msra.mxu0 0.0
  %1701 = vmatprep.subr.mxu0 0.0
  %1702 = vmatpush2.msra.mxu0 0.0
  %1703 = vmatprep.subr.mxu0 0.0
  %1704 = vmatpush2.msra.mxu0 0.0
  %1705 = vmatprep.subr.mxu0 0.0
  %1706 = vmatpush2.msra.mxu0 0.0
  %1707 = vmatprep.subr.mxu0 0.0
  %1708 = vmatpush2.msra.mxu0 0.0
  %1709 = vmatprep.subr.mxu0 0.0
  %1710 = vmatpush2.msra.mxu0 0.0
  %1711 = vmatprep.subr.mxu0 0.0
  %1712 = vmatpush2.msra.mxu0 0.0
  %1713 = vmatprep.mubr.f32.mxu0 0.0
  %1714 = vmatmul.mubr.f32.gmra.mxu0 %v1644
  %v1715 = vpop.f32.mrf.mxu0
  %v1716 = vadd.f32 0.0, %v1715
  %v1717 = vpop.f32.mrf.mxu0
  %1718 = vmatprep.mubr.f32.mxu0 0.0
  %1719 = vmatmul.mubr.f32.gmra.mxu0 %v1647
  %v1720 = vpop.f32.mrf.mxu0
  %v1721 = vadd.f32 0.0, %v1720
  %v1722 = vpop.f32.mrf.mxu0
  %1723 = vdwg.mxu0
  %v1725 = vsel %vm1598, %v1640, 0
  %v1728 = vsel %vm1598, %v1642, 0
  %1730 = vmatprep.subr.mxu0 0.0
  %1731 = vmatpush1.msra.mxu0 0.0
  %1732 = vmatprep.subr.mxu0 0.0
  %1733 = vmatpush1.msra.mxu0 0.0
  %1734 = vmatprep.subr.mxu0 0.0
  %1735 = vmatpush1.msra.mxu0 0.0
  %1736 = vmatprep.subr.mxu0 0.0
  %1737 = vmatpush1.msra.mxu0 0.0
  %1738 = vmatprep.subr.mxu0 0.0
  %1739 = vmatpush1.msra.mxu0 0.0
  %1740 = vmatprep.subr.mxu0 0.0
  %1741 = vmatpush1.msra.mxu0 0.0
  %1742 = vmatprep.subr.mxu0 0.0
  %1743 = vmatpush1.msra.mxu0 0.0
  %1744 = vmatprep.subr.mxu0 0.0
  %1745 = vmatpush1.msra.mxu0 0.0
  %1746 = vmatprep.subr.mxu0 0.0
  %1747 = vmatpush1.msra.mxu0 0.0
  %1748 = vmatprep.subr.mxu0 0.0
  %1749 = vmatpush1.msra.mxu0 0.0
  %1750 = vmatprep.subr.mxu0 0.0
  %1751 = vmatpush1.msra.mxu0 0.0
  %1752 = vmatprep.subr.mxu0 0.0
  %1753 = vmatpush1.msra.mxu0 0.0
  %1754 = vmatprep.subr.mxu0 0.0
  %1755 = vmatpush1.msra.mxu0 0.0
  %1756 = vmatprep.subr.mxu0 0.0
  %1757 = vmatpush1.msra.mxu0 0.0
  %1758 = vmatprep.subr.mxu0 0.0
  %1759 = vmatpush1.msra.mxu0 %v1416
  %1760 = vmatprep.subr.mxu0 0.0
  %1761 = vmatpush1.msra.mxu0 %v1411
  %1762 = vmatprep.subr.mxu0 0.0
  %1763 = vmatpush2.msra.mxu0 0.0
  %1764 = vmatprep.subr.mxu0 0.0
  %1765 = vmatpush2.msra.mxu0 0.0
  %1766 = vmatprep.subr.mxu0 0.0
  %1767 = vmatpush2.msra.mxu0 0.0
  %1768 = vmatprep.subr.mxu0 0.0
  %1769 = vmatpush2.msra.mxu0 0.0
  %1770 = vmatprep.subr.mxu0 0.0
  %1771 = vmatpush2.msra.mxu0 0.0
  %1772 = vmatprep.subr.mxu0 0.0
  %1773 = vmatpush2.msra.mxu0 0.0
  %1774 = vmatprep.subr.mxu0 0.0
  %1775 = vmatpush2.msra.mxu0 0.0
  %1776 = vmatprep.subr.mxu0 0.0
  %1777 = vmatpush2.msra.mxu0 0.0
  %1778 = vmatprep.subr.mxu0 0.0
  %1779 = vmatpush2.msra.mxu0 0.0
  %1780 = vmatprep.subr.mxu0 0.0
  %1781 = vmatpush2.msra.mxu0 0.0
  %1782 = vmatprep.subr.mxu0 0.0
  %1783 = vmatpush2.msra.mxu0 0.0
  %1784 = vmatprep.subr.mxu0 0.0
  %1785 = vmatpush2.msra.mxu0 0.0
  %1786 = vmatprep.subr.mxu0 0.0
  %1787 = vmatpush2.msra.mxu0 0.0
  %1788 = vmatprep.subr.mxu0 0.0
  %1789 = vmatpush2.msra.mxu0 0.0
  %1790 = vmatprep.subr.mxu0 0.0
  %1791 = vmatpush2.msra.mxu0 0.0
  %1792 = vmatprep.subr.mxu0 0.0
  %1793 = vmatpush2.msra.mxu0 0.0
  %1794 = vmatprep.mubr.f32.mxu0 0.0
  %1795 = vmatmul.mubr.f32.gmra.mxu0 %v1725
  %v1796 = vpop.f32.mrf.mxu0
  %v1797 = vadd.f32 0.0, %v1796
  %v1798 = vpop.f32.mrf.mxu0
  %1799 = vmatprep.mubr.f32.mxu0 0.0
  %1800 = vmatmul.mubr.f32.gmra.mxu0 %v1728
  %v1801 = vpop.f32.mrf.mxu0
  %v1802 = vadd.f32 0.0, %v1801
  %v1803 = vpop.f32.mrf.mxu0
  %1804 = vdwg.mxu0
  %v1805 = vld [vmem:[%s3 + $0x168] sm:$0xff]
  %1806 = vrot.lane.b32.xlu0 %v1213, 120
  %v1807 = vpop.permute.xlu0 %1806
  %1808 = vrot.lane.b32.xlu0 %v1218, 120
  %v1809 = vpop.permute.xlu0 %1808
  %1810 = vrot.lane.b32.xlu0 %v1307, 120
  %v1811 = vpop.permute.xlu0 %1810
  %1812 = vrot.lane.b32.xlu0 %v1312, 120
  %v1813 = vpop.permute.xlu0 %1812
  %v1814 = vsel %vm1419, %v1807, 0
  %v1816 = vsel %vm1419, %v1809, 0
  %v1818 = vsel %vm1419, %v1811, 0
  %v1820 = vsel %vm1419, %v1813, 0
  %1822 = vmatprep.subr.mxu0 0.0
  %1823 = vmatpush1.xpose.msra.mxu0 0.0
  %1824 = vmatprep.subr.mxu0 0.0
  %1825 = vmatpush1.xpose.msra.mxu0 0.0
  %1826 = vmatprep.subr.mxu0 0.0
  %1827 = vmatpush1.xpose.msra.mxu0 0.0
  %1828 = vmatprep.subr.mxu0 0.0
  %1829 = vmatpush1.xpose.msra.mxu0 0.0
  %1830 = vmatprep.subr.mxu0 0.0
  %1831 = vmatpush1.xpose.msra.mxu0 0.0
  %1832 = vmatprep.subr.mxu0 0.0
  %1833 = vmatpush1.xpose.msra.mxu0 0.0
  %1834 = vmatprep.subr.mxu0 0.0
  %1835 = vmatpush1.xpose.msra.mxu0 0.0
  %1836 = vmatprep.subr.mxu0 0.0
  %1837 = vmatpush1.xpose.msra.mxu0 0.0
  %1838 = vmatprep.subr.mxu0 0.0
  %1839 = vmatpush1.xpose.msra.mxu0 0.0
  %1840 = vmatprep.subr.mxu0 0.0
  %1841 = vmatpush1.xpose.msra.mxu0 0.0
  %1842 = vmatprep.subr.mxu0 0.0
  %1843 = vmatpush1.xpose.msra.mxu0 0.0
  %1844 = vmatprep.subr.mxu0 0.0
  %1845 = vmatpush1.xpose.msra.mxu0 0.0
  %1846 = vmatprep.subr.mxu0 0.0
  %1847 = vmatpush1.xpose.msra.mxu0 0.0
  %1848 = vmatprep.subr.mxu0 0.0
  %1849 = vmatpush1.xpose.msra.mxu0 0.0
  %1850 = vmatprep.subr.mxu0 0.0
  %1851 = vmatpush1.xpose.msra.mxu0 %v1820
  %1852 = vmatprep.subr.mxu0 0.0
  %1853 = vmatpush1.xpose.msra.mxu0 %v1818
  %1854 = vmatprep.subr.mxu0 0.0
  %1855 = vmatpush2.xpose.msra.mxu0 0.0
  %1856 = vmatprep.subr.mxu0 0.0
  %1857 = vmatpush2.xpose.msra.mxu0 0.0
  %1858 = vmatprep.subr.mxu0 0.0
  %1859 = vmatpush2.xpose.msra.mxu0 0.0
  %1860 = vmatprep.subr.mxu0 0.0
  %1861 = vmatpush2.xpose.msra.mxu0 0.0
  %1862 = vmatprep.subr.mxu0 0.0
  %1863 = vmatpush2.xpose.msra.mxu0 0.0
  %1864 = vmatprep.subr.mxu0 0.0
  %1865 = vmatpush2.xpose.msra.mxu0 0.0
  %1866 = vmatprep.subr.mxu0 0.0
  %1867 = vmatpush2.xpose.msra.mxu0 0.0
  %1868 = vmatprep.subr.mxu0 0.0
  %1869 = vmatpush2.xpose.msra.mxu0 0.0
  %1870 = vmatprep.subr.mxu0 0.0
  %1871 = vmatpush2.xpose.msra.mxu0 0.0
  %1872 = vmatprep.subr.mxu0 0.0
  %1873 = vmatpush2.xpose.msra.mxu0 0.0
  %1874 = vmatprep.subr.mxu0 0.0
  %1875 = vmatpush2.xpose.msra.mxu0 0.0
  %1876 = vmatprep.subr.mxu0 0.0
  %1877 = vmatpush2.xpose.msra.mxu0 0.0
  %1878 = vmatprep.subr.mxu0 0.0
  %1879 = vmatpush2.xpose.msra.mxu0 0.0
  %1880 = vmatprep.subr.mxu0 0.0
  %1881 = vmatpush2.xpose.msra.mxu0 0.0
  %1882 = vmatprep.subr.mxu0 0.0
  %1883 = vmatpush2.xpose.msra.mxu0 0.0
  %1884 = vmatprep.subr.mxu0 0.0
  %1885 = vmatpush2.xpose.msra.mxu0 0.0
  %1886 = vmatprep.mubr.f32.mxu0 0.0
  %1887 = vmatmul.mubr.f32.gmra.mxu0 %v1814
  %v1888 = vpop.f32.mrf.mxu0
  %v1889 = vadd.f32 0.0, %v1888
  %v1890 = vpop.f32.mrf.mxu0
  %1891 = vmatprep.mubr.f32.mxu0 0.0
  %1892 = vmatmul.mubr.f32.gmra.mxu0 %v1816
  %v1893 = vpop.f32.mrf.mxu0
  %v1894 = vadd.f32 0.0, %v1893
  %v1895 = vpop.f32.mrf.mxu0
  %1896 = vdwg.mxu0
  %1897 = vrot.lane.b32.xlu0 %v1223, 120
  %v1898 = vpop.permute.xlu0 %1897
  %1899 = vrot.lane.b32.xlu0 %v1228, 120
  %v1900 = vpop.permute.xlu0 %1899
  %1901 = vrot.lane.b32.xlu0 %v1317, 120
  %v1902 = vpop.permute.xlu0 %1901
  %1903 = vrot.lane.b32.xlu0 %v1322, 120
  %v1904 = vpop.permute.xlu0 %1903
  %v1905 = vsel %vm1419, %v1898, 0
  %v1907 = vsel %vm1419, %v1900, 0
  %v1909 = vsel %vm1419, %v1902, 0
  %v1911 = vsel %vm1419, %v1904, 0
  %1913 = vmatprep.subr.mxu0 0.0
  %1914 = vmatpush1.xpose.msra.mxu0 0.0
  %1915 = vmatprep.subr.mxu0 0.0
  %1916 = vmatpush1.xpose.msra.mxu0 0.0
  %1917 = vmatprep.subr.mxu0 0.0
  %1918 = vmatpush1.xpose.msra.mxu0 0.0
  %1919 = vmatprep.subr.mxu0 0.0
  %1920 = vmatpush1.xpose.msra.mxu0 0.0
  %1921 = vmatprep.subr.mxu0 0.0
  %1922 = vmatpush1.xpose.msra.mxu0 0.0
  %1923 = vmatprep.subr.mxu0 0.0
  %1924 = vmatpush1.xpose.msra.mxu0 0.0
  %1925 = vmatprep.subr.mxu0 0.0
  %1926 = vmatpush1.xpose.msra.mxu0 0.0
  %1927 = vmatprep.subr.mxu0 0.0
  %1928 = vmatpush1.xpose.msra.mxu0 0.0
  %1929 = vmatprep.subr.mxu0 0.0
  %1930 = vmatpush1.xpose.msra.mxu0 0.0
  %1931 = vmatprep.subr.mxu0 0.0
  %1932 = vmatpush1.xpose.msra.mxu0 0.0
  %1933 = vmatprep.subr.mxu0 0.0
  %1934 = vmatpush1.xpose.msra.mxu0 0.0
  %1935 = vmatprep.subr.mxu0 0.0
  %1936 = vmatpush1.xpose.msra.mxu0 0.0
  %1937 = vmatprep.subr.mxu0 0.0
  %1938 = vmatpush1.xpose.msra.mxu0 0.0
  %1939 = vmatprep.subr.mxu0 0.0
  %1940 = vmatpush1.xpose.msra.mxu0 0.0
  %1941 = vmatprep.subr.mxu0 0.0
  %1942 = vmatpush1.xpose.msra.mxu0 %v1911
  %1943 = vmatprep.subr.mxu0 0.0
  %1944 = vmatpush1.xpose.msra.mxu0 %v1909
  %1945 = vmatprep.subr.mxu0 0.0
  %1946 = vmatpush2.xpose.msra.mxu0 0.0
  %1947 = vmatprep.subr.mxu0 0.0
  %1948 = vmatpush2.xpose.msra.mxu0 0.0
  %1949 = vmatprep.subr.mxu0 0.0
  %1950 = vmatpush2.xpose.msra.mxu0 0.0
  %1951 = vmatprep.subr.mxu0 0.0
  %1952 = vmatpush2.xpose.msra.mxu0 0.0
  %1953 = vmatprep.subr.mxu0 0.0
  %1954 = vmatpush2.xpose.msra.mxu0 0.0
  %1955 = vmatprep.subr.mxu0 0.0
  %1956 = vmatpush2.xpose.msra.mxu0 0.0
  %1957 = vmatprep.subr.mxu0 0.0
  %1958 = vmatpush2.xpose.msra.mxu0 0.0
  %1959 = vmatprep.subr.mxu0 0.0
  %1960 = vmatpush2.xpose.msra.mxu0 0.0
  %1961 = vmatprep.subr.mxu0 0.0
  %1962 = vmatpush2.xpose.msra.mxu0 0.0
  %1963 = vmatprep.subr.mxu0 0.0
  %1964 = vmatpush2.xpose.msra.mxu0 0.0
  %1965 = vmatprep.subr.mxu0 0.0
  %1966 = vmatpush2.xpose.msra.mxu0 0.0
  %1967 = vmatprep.subr.mxu0 0.0
  %1968 = vmatpush2.xpose.msra.mxu0 0.0
  %1969 = vmatprep.subr.mxu0 0.0
  %1970 = vmatpush2.xpose.msra.mxu0 0.0
  %1971 = vmatprep.subr.mxu0 0.0
  %1972 = vmatpush2.xpose.msra.mxu0 0.0
  %1973 = vmatprep.subr.mxu0 0.0
  %1974 = vmatpush2.xpose.msra.mxu0 0.0
  %1975 = vmatprep.subr.mxu0 0.0
  %1976 = vmatpush2.xpose.msra.mxu0 0.0
  %1977 = vmatprep.mubr.f32.mxu0 0.0
  %1978 = vmatmul.mubr.f32.gmra.mxu0 %v1905
  %v1979 = vpop.f32.mrf.mxu0
  %v1980 = vadd.f32 0.0, %v1979
  %v1981 = vpop.f32.mrf.mxu0
  %1982 = vmatprep.mubr.f32.mxu0 0.0
  %1983 = vmatmul.mubr.f32.gmra.mxu0 %v1907
  %v1984 = vpop.f32.mrf.mxu0
  %v1985 = vadd.f32 0.0, %v1984
  %v1986 = vpop.f32.mrf.mxu0
  %1987 = vdwg.mxu0
  %v1988 = vmul.f32 %v1889, 0.35355338
  %v1989 = vmul.f32 %v1894, 0.35355338
  %v1990 = vmul.f32 %v1980, 0.35355338
  %v1991 = vmul.f32 %v1985, 0.35355338
  %v1992 = vsel %vm1598, %v1988, -inf
  %1993 = vmax.xlane.f32.xlu0 %v1992
  %v1994 = vpop.xlane.xlu0 %1993
  %v1995 = vsel %vm1598, %v1989, -inf
  %1996 = vmax.xlane.f32.xlu0 %v1995
  %v1997 = vpop.xlane.xlu0 %1996
  %v1998 = vsel %vm1598, %v1990, -inf
  %1999 = vmax.xlane.f32.xlu0 %v1998
  %v2000 = vpop.xlane.xlu0 %1999
  %v2001 = vsel %vm1598, %v1991, -inf
  %2002 = vmax.xlane.f32.xlu0 %v2001
  %v2003 = vpop.xlane.xlu0 %2002
  %v2004 = vsub.f32 %v1988, %v1994
  %v2005 = vsub.f32 %v1989, %v1997
  %v2006 = vsub.f32 %v1990, %v2000
  %v2007 = vsub.f32 %v1991, %v2003
  %v2008 = vmul.f32 %v2004, 1.442695
  %v2009 = vpow.pop %v2008
  %v2010 = vmul.f32 %v2005, 1.442695
  %v2011 = vpow.pop %v2010
  %v2012 = vmul.f32 %v2006, 1.442695
  %v2013 = vpow.pop %v2012
  %v2014 = vmul.f32 %v2007, 1.442695
  %v2015 = vpow.pop %v2014
  %v2016 = vsel %vm1598, %v2009, 0.0
  %2017 = vadd.xlane.f32.xlu0 %v2016
  %v2018 = vpop.xlane.xlu0 %2017
  %v2019 = vsel %vm1598, %v2011, 0.0
  %2020 = vadd.xlane.f32.xlu0 %v2019
  %v2021 = vpop.xlane.xlu0 %2020
  %v2022 = vsel %vm1598, %v2013, 0.0
  %2023 = vadd.xlane.f32.xlu0 %v2022
  %v2024 = vpop.xlane.xlu0 %2023
  %v2025 = vsel %vm1598, %v2015, 0.0
  %2026 = vadd.xlane.f32.xlu0 %v2025
  %v2027 = vpop.xlane.xlu0 %2026
  %v2028 = vrcp.pop %v2018
  %v2029 = vmul.f32 %v2009, %v2028
  %v2030 = vrcp.pop %v2021
  %v2031 = vmul.f32 %v2011, %v2030
  %v2032 = vrcp.pop %v2024
  %v2033 = vmul.f32 %v2013, %v2032
  %v2034 = vrcp.pop %v2027
  %v2035 = vmul.f32 %v2015, %v2034
  %2038 = vrot.lane.b32.xlu0 %v1401, 120
  %v2039 = vpop.permute.xlu0 %2038
  %2040 = vrot.lane.b32.xlu0 %v1406, 120
  %v2041 = vpop.permute.xlu0 %2040
  %v2045 = vsel %vm1598, %v2029, 0
  %v2048 = vsel %vm1598, %v2031, 0
  %2050 = vmatprep.subr.mxu0 0.0
  %2051 = vmatpush1.msra.mxu0 0.0
  %2052 = vmatprep.subr.mxu0 0.0
  %2053 = vmatpush1.msra.mxu0 0.0
  %2054 = vmatprep.subr.mxu0 0.0
  %2055 = vmatpush1.msra.mxu0 0.0
  %2056 = vmatprep.subr.mxu0 0.0
  %2057 = vmatpush1.msra.mxu0 0.0
  %2058 = vmatprep.subr.mxu0 0.0
  %2059 = vmatpush1.msra.mxu0 0.0
  %2060 = vmatprep.subr.mxu0 0.0
  %2061 = vmatpush1.msra.mxu0 0.0
  %2062 = vmatprep.subr.mxu0 0.0
  %2063 = vmatpush1.msra.mxu0 0.0
  %2064 = vmatprep.subr.mxu0 0.0
  %2065 = vmatpush1.msra.mxu0 0.0
  %2066 = vmatprep.subr.mxu0 0.0
  %2067 = vmatpush1.msra.mxu0 0.0
  %2068 = vmatprep.subr.mxu0 0.0
  %2069 = vmatpush1.msra.mxu0 0.0
  %2070 = vmatprep.subr.mxu0 0.0
  %2071 = vmatpush1.msra.mxu0 0.0
  %2072 = vmatprep.subr.mxu0 0.0
  %2073 = vmatpush1.msra.mxu0 0.0
  %2074 = vmatprep.subr.mxu0 0.0
  %2075 = vmatpush1.msra.mxu0 0.0
  %2076 = vmatprep.subr.mxu0 0.0
  %2077 = vmatpush1.msra.mxu0 0.0
  %2078 = vmatprep.subr.mxu0 0.0
  %2079 = vmatpush1.msra.mxu0 %v2041
  %2080 = vmatprep.subr.mxu0 0.0
  %2081 = vmatpush1.msra.mxu0 %v2039
  %2082 = vmatprep.subr.mxu0 0.0
  %2083 = vmatpush2.msra.mxu0 0.0
  %2084 = vmatprep.subr.mxu0 0.0
  %2085 = vmatpush2.msra.mxu0 0.0
  %2086 = vmatprep.subr.mxu0 0.0
  %2087 = vmatpush2.msra.mxu0 0.0
  %2088 = vmatprep.subr.mxu0 0.0
  %2089 = vmatpush2.msra.mxu0 0.0
  %2090 = vmatprep.subr.mxu0 0.0
  %2091 = vmatpush2.msra.mxu0 0.0
  %2092 = vmatprep.subr.mxu0 0.0
  %2093 = vmatpush2.msra.mxu0 0.0
  %2094 = vmatprep.subr.mxu0 0.0
  %2095 = vmatpush2.msra.mxu0 0.0
  %2096 = vmatprep.subr.mxu0 0.0
  %2097 = vmatpush2.msra.mxu0 0.0
  %2098 = vmatprep.subr.mxu0 0.0
  %2099 = vmatpush2.msra.mxu0 0.0
  %2100 = vmatprep.subr.mxu0 0.0
  %2101 = vmatpush2.msra.mxu0 0.0
  %2102 = vmatprep.subr.mxu0 0.0
  %2103 = vmatpush2.msra.mxu0 0.0
  %2104 = vmatprep.subr.mxu0 0.0
  %2105 = vmatpush2.msra.mxu0 0.0
  %2106 = vmatprep.subr.mxu0 0.0
  %2107 = vmatpush2.msra.mxu0 0.0
  %2108 = vmatprep.subr.mxu0 0.0
  %2109 = vmatpush2.msra.mxu0 0.0
  %2110 = vmatprep.subr.mxu0 0.0
  %2111 = vmatpush2.msra.mxu0 0.0
  %2112 = vmatprep.subr.mxu0 0.0
  %2113 = vmatpush2.msra.mxu0 0.0
  %2114 = vmatprep.mubr.f32.mxu0 0.0
  %2115 = vmatmul.mubr.f32.gmra.mxu0 %v2045
  %v2116 = vpop.f32.mrf.mxu0
  %v2117 = vadd.f32 0.0, %v2116
  %v2118 = vpop.f32.mrf.mxu0
  %2119 = vmatprep.mubr.f32.mxu0 0.0
  %2120 = vmatmul.mubr.f32.gmra.mxu0 %v2048
  %v2121 = vpop.f32.mrf.mxu0
  %v2122 = vadd.f32 0.0, %v2121
  %v2123 = vpop.f32.mrf.mxu0
  %2124 = vdwg.mxu0
  %2127 = vrot.lane.b32.xlu0 %v1411, 120
  %v2128 = vpop.permute.xlu0 %2127
  %2129 = vrot.lane.b32.xlu0 %v1416, 120
  %v2130 = vpop.permute.xlu0 %2129
  %v2134 = vsel %vm1598, %v2033, 0
  %v2137 = vsel %vm1598, %v2035, 0
  %2139 = vmatprep.subr.mxu0 0.0
  %2140 = vmatpush1.msra.mxu0 0.0
  %2141 = vmatprep.subr.mxu0 0.0
  %2142 = vmatpush1.msra.mxu0 0.0
  %2143 = vmatprep.subr.mxu0 0.0
  %2144 = vmatpush1.msra.mxu0 0.0
  %2145 = vmatprep.subr.mxu0 0.0
  %2146 = vmatpush1.msra.mxu0 0.0
  %2147 = vmatprep.subr.mxu0 0.0
  %2148 = vmatpush1.msra.mxu0 0.0
  %2149 = vmatprep.subr.mxu0 0.0
  %2150 = vmatpush1.msra.mxu0 0.0
  %2151 = vmatprep.subr.mxu0 0.0
  %2152 = vmatpush1.msra.mxu0 0.0
  %2153 = vmatprep.subr.mxu0 0.0
  %2154 = vmatpush1.msra.mxu0 0.0
  %2155 = vmatprep.subr.mxu0 0.0
  %2156 = vmatpush1.msra.mxu0 0.0
  %2157 = vmatprep.subr.mxu0 0.0
  %2158 = vmatpush1.msra.mxu0 0.0
  %2159 = vmatprep.subr.mxu0 0.0
  %2160 = vmatpush1.msra.mxu0 0.0
  %2161 = vmatprep.subr.mxu0 0.0
  %2162 = vmatpush1.msra.mxu0 0.0
  %2163 = vmatprep.subr.mxu0 0.0
  %2164 = vmatpush1.msra.mxu0 0.0
  %2165 = vmatprep.subr.mxu0 0.0
  %2166 = vmatpush1.msra.mxu0 0.0
  %2167 = vmatprep.subr.mxu0 0.0
  %2168 = vmatpush1.msra.mxu0 %v2130
  %2169 = vmatprep.subr.mxu0 0.0
  %2170 = vmatpush1.msra.mxu0 %v2128
  %2171 = vmatprep.subr.mxu0 0.0
  %2172 = vmatpush2.msra.mxu0 0.0
  %2173 = vmatprep.subr.mxu0 0.0
  %2174 = vmatpush2.msra.mxu0 0.0
  %2175 = vmatprep.subr.mxu0 0.0
  %2176 = vmatpush2.msra.mxu0 0.0
  %2177 = vmatprep.subr.mxu0 0.0
  %2178 = vmatpush2.msra.mxu0 0.0
  %2179 = vmatprep.subr.mxu0 0.0
  %2180 = vmatpush2.msra.mxu0 0.0
  %2181 = vmatprep.subr.mxu0 0.0
  %2182 = vmatpush2.msra.mxu0 0.0
  %2183 = vmatprep.subr.mxu0 0.0
  %2184 = vmatpush2.msra.mxu0 0.0
  %2185 = vmatprep.subr.mxu0 0.0
  %2186 = vmatpush2.msra.mxu0 0.0
  %2187 = vmatprep.subr.mxu0 0.0
  %2188 = vmatpush2.msra.mxu0 0.0
  %2189 = vmatprep.subr.mxu0 0.0
  %2190 = vmatpush2.msra.mxu0 0.0
  %2191 = vmatprep.subr.mxu0 0.0
  %2192 = vmatpush2.msra.mxu0 0.0
  %2193 = vmatprep.subr.mxu0 0.0
  %2194 = vmatpush2.msra.mxu0 0.0
  %2195 = vmatprep.subr.mxu0 0.0
  %2196 = vmatpush2.msra.mxu0 0.0
  %2197 = vmatprep.subr.mxu0 0.0
  %2198 = vmatpush2.msra.mxu0 0.0
  %2199 = vmatprep.subr.mxu0 0.0
  %2200 = vmatpush2.msra.mxu0 0.0
  %2201 = vmatprep.subr.mxu0 0.0
  %2202 = vmatpush2.msra.mxu0 0.0
  %2203 = vmatprep.mubr.f32.mxu0 0.0
  %2204 = vmatmul.mubr.f32.gmra.mxu0 %v2134
  %v2205 = vpop.f32.mrf.mxu0
  %v2206 = vadd.f32 0.0, %v2205
  %v2207 = vpop.f32.mrf.mxu0
  %2208 = vmatprep.mubr.f32.mxu0 0.0
  %2209 = vmatmul.mubr.f32.gmra.mxu0 %v2137
  %v2210 = vpop.f32.mrf.mxu0
  %v2211 = vadd.f32 0.0, %v2210
  %v2212 = vpop.f32.mrf.mxu0
  %2213 = vdwg.mxu0
  %v2214 = vld [vmem:[%s3 + $0x170] sm:$0xff]
  %v2216 = vsel %vm1419, %v2117, 0
  %v2219 = vsel %vm1419, %v2122, 0
  %v2222 = vsel %vm1419, %v2206, 0
  %v2225 = vsel %vm1419, %v2211, 0
  %2227 = vmatprep.subr.mxu0 0.0
  %2228 = vmatpush1.msra.mxu0 0.0
  %2229 = vmatprep.subr.mxu0 0.0
  %2230 = vmatpush1.msra.mxu0 0.0
  %2231 = vmatprep.subr.mxu0 0.0
  %2232 = vmatpush1.msra.mxu0 0.0
  %2233 = vmatprep.subr.mxu0 0.0
  %2234 = vmatpush1.msra.mxu0 0.0
  %2235 = vmatprep.subr.mxu0 0.0
  %2236 = vmatpush1.msra.mxu0 0.0
  %2237 = vmatprep.subr.mxu0 0.0
  %2238 = vmatpush1.msra.mxu0 0.0
  %2239 = vmatprep.subr.mxu0 0.0
  %2240 = vmatpush1.msra.mxu0 0.0
  %2241 = vmatprep.subr.mxu0 0.0
  %2242 = vmatpush1.msra.mxu0 0.0
  %2243 = vmatprep.subr.mxu0 0.0
  %2244 = vmatpush1.msra.mxu0 0.0
  %2245 = vmatprep.subr.mxu0 0.0
  %2246 = vmatpush1.msra.mxu0 0.0
  %2247 = vmatprep.subr.mxu0 0.0
  %2248 = vmatpush1.msra.mxu0 0.0
  %2249 = vmatprep.subr.mxu0 0.0
  %2250 = vmatpush1.msra.mxu0 0.0
  %2251 = vmatprep.subr.mxu0 0.0
  %2252 = vmatpush1.msra.mxu0 0.0
  %2253 = vmatprep.subr.mxu0 0.0
  %2254 = vmatpush1.msra.mxu0 0.0
  %2255 = vmatprep.subr.mxu0 0.0
  %2256 = vmatpush1.msra.mxu0 0.0
  %2257 = vmatprep.subr.mxu0 0.0
  %2258 = vmatpush1.msra.mxu0 %v2214
  %2259 = vmatprep.subr.mxu0 0.0
  %2260 = vmatpush2.msra.mxu0 0.0
  %2261 = vmatprep.subr.mxu0 0.0
  %2262 = vmatpush2.msra.mxu0 0.0
  %2263 = vmatprep.subr.mxu0 0.0
  %2264 = vmatpush2.msra.mxu0 0.0
  %2265 = vmatprep.subr.mxu0 0.0
  %2266 = vmatpush2.msra.mxu0 0.0
  %2267 = vmatprep.subr.mxu0 0.0
  %2268 = vmatpush2.msra.mxu0 0.0
  %2269 = vmatprep.subr.mxu0 0.0
  %2270 = vmatpush2.msra.mxu0 0.0
  %2271 = vmatprep.subr.mxu0 0.0
  %2272 = vmatpush2.msra.mxu0 0.0
  %2273 = vmatprep.subr.mxu0 0.0
  %2274 = vmatpush2.msra.mxu0 0.0
  %2275 = vmatprep.subr.mxu0 0.0
  %2276 = vmatpush2.msra.mxu0 0.0
  %2277 = vmatprep.subr.mxu0 0.0
  %2278 = vmatpush2.msra.mxu0 0.0
  %2279 = vmatprep.subr.mxu0 0.0
  %2280 = vmatpush2.msra.mxu0 0.0
  %2281 = vmatprep.subr.mxu0 0.0
  %2282 = vmatpush2.msra.mxu0 0.0
  %2283 = vmatprep.subr.mxu0 0.0
  %2284 = vmatpush2.msra.mxu0 0.0
  %2285 = vmatprep.subr.mxu0 0.0
  %2286 = vmatpush2.msra.mxu0 0.0
  %2287 = vmatprep.subr.mxu0 0.0
  %2288 = vmatpush2.msra.mxu0 0.0
  %2289 = vmatprep.subr.mxu0 0.0
  %2290 = vmatpush2.msra.mxu0 0.0
  %2291 = vmatprep.mubr.f32.mxu0 0.0
  %2292 = vmatmul.mubr.f32.gmra.mxu0 %v2216
  %v2293 = vpop.f32.mrf.mxu0
  %v2294 = vadd.f32 0.0, %v2293
  %v2295 = vpop.f32.mrf.mxu0
  %2296 = vmatprep.mubr.f32.mxu0 0.0
  %2297 = vmatmul.mubr.f32.gmra.mxu0 %v2219
  %v2298 = vpop.f32.mrf.mxu0
  %v2299 = vadd.f32 0.0, %v2298
  %v2300 = vpop.f32.mrf.mxu0
  %2301 = vmatprep.mubr.f32.mxu0 0.0
  %2302 = vmatmul.mubr.f32.gmra.mxu0 %v2222
  %v2303 = vpop.f32.mrf.mxu0
  %v2304 = vadd.f32 0.0, %v2303
  %v2305 = vpop.f32.mrf.mxu0
  %2306 = vmatprep.mubr.f32.mxu0 0.0
  %2307 = vmatmul.mubr.f32.gmra.mxu0 %v2225
  %v2308 = vpop.f32.mrf.mxu0
  %v2309 = vadd.f32 0.0, %v2308
  %v2310 = vpop.f32.mrf.mxu0
  %2311 = vdwg.mxu0
  %v2313 = vsel %vm1419, %v1716, 0
  %v2316 = vsel %vm1419, %v1721, 0
  %v2319 = vsel %vm1419, %v1797, 0
  %v2322 = vsel %vm1419, %v1802, 0
  %2324 = vmatprep.subr.mxu0 0.0
  %2325 = vmatpush1.msra.mxu0 0.0
  %2326 = vmatprep.subr.mxu0 0.0
  %2327 = vmatpush1.msra.mxu0 0.0
  %2328 = vmatprep.subr.mxu0 0.0
  %2329 = vmatpush1.msra.mxu0 0.0
  %2330 = vmatprep.subr.mxu0 0.0
  %2331 = vmatpush1.msra.mxu0 0.0
  %2332 = vmatprep.subr.mxu0 0.0
  %2333 = vmatpush1.msra.mxu0 0.0
  %2334 = vmatprep.subr.mxu0 0.0
  %2335 = vmatpush1.msra.mxu0 0.0
  %2336 = vmatprep.subr.mxu0 0.0
  %2337 = vmatpush1.msra.mxu0 0.0
  %2338 = vmatprep.subr.mxu0 0.0
  %2339 = vmatpush1.msra.mxu0 0.0
  %2340 = vmatprep.subr.mxu0 0.0
  %2341 = vmatpush1.msra.mxu0 0.0
  %2342 = vmatprep.subr.mxu0 0.0
  %2343 = vmatpush1.msra.mxu0 0.0
  %2344 = vmatprep.subr.mxu0 0.0
  %2345 = vmatpush1.msra.mxu0 0.0
  %2346 = vmatprep.subr.mxu0 0.0
  %2347 = vmatpush1.msra.mxu0 0.0
  %2348 = vmatprep.subr.mxu0 0.0
  %2349 = vmatpush1.msra.mxu0 0.0
  %2350 = vmatprep.subr.mxu0 0.0
  %2351 = vmatpush1.msra.mxu0 0.0
  %2352 = vmatprep.subr.mxu0 0.0
  %2353 = vmatpush1.msra.mxu0 0.0
  %2354 = vmatprep.subr.mxu0 0.0
  %2355 = vmatpush1.msra.mxu0 %v1805
  %2356 = vmatprep.subr.mxu0 0.0
  %2357 = vmatpush2.msra.mxu0 0.0
  %2358 = vmatprep.subr.mxu0 0.0
  %2359 = vmatpush2.msra.mxu0 0.0
  %2360 = vmatprep.subr.mxu0 0.0
  %2361 = vmatpush2.msra.mxu0 0.0
  %2362 = vmatprep.subr.mxu0 0.0
  %2363 = vmatpush2.msra.mxu0 0.0
  %2364 = vmatprep.subr.mxu0 0.0
  %2365 = vmatpush2.msra.mxu0 0.0
  %2366 = vmatprep.subr.mxu0 0.0
  %2367 = vmatpush2.msra.mxu0 0.0
  %2368 = vmatprep.subr.mxu0 0.0
  %2369 = vmatpush2.msra.mxu0 0.0
  %2370 = vmatprep.subr.mxu0 0.0
  %2371 = vmatpush2.msra.mxu0 0.0
  %2372 = vmatprep.subr.mxu0 0.0
  %2373 = vmatpush2.msra.mxu0 0.0
  %2374 = vmatprep.subr.mxu0 0.0
  %2375 = vmatpush2.msra.mxu0 0.0
  %2376 = vmatprep.subr.mxu0 0.0
  %2377 = vmatpush2.msra.mxu0 0.0
  %2378 = vmatprep.subr.mxu0 0.0
  %2379 = vmatpush2.msra.mxu0 0.0
  %2380 = vmatprep.subr.mxu0 0.0
  %2381 = vmatpush2.msra.mxu0 0.0
  %2382 = vmatprep.subr.mxu0 0.0
  %2383 = vmatpush2.msra.mxu0 0.0
  %2384 = vmatprep.subr.mxu0 0.0
  %2385 = vmatpush2.msra.mxu0 0.0
  %2386 = vmatprep.subr.mxu0 0.0
  %2387 = vmatpush2.msra.mxu0 0.0
  %2388 = vmatprep.mubr.f32.mxu0 0.0
  %2389 = vmatmul.mubr.f32.gmra.mxu0 %v2313
  %v2390 = vpop.f32.mrf.mxu0
  %v2391 = vadd.f32 %v2294, %v2390
  %v2392 = vpop.f32.mrf.mxu0
  %2393 = vmatprep.mubr.f32.mxu0 0.0
  %2394 = vmatmul.mubr.f32.gmra.mxu0 %v2316
  %v2395 = vpop.f32.mrf.mxu0
  %v2396 = vadd.f32 %v2299, %v2395
  %v2397 = vpop.f32.mrf.mxu0
  %2398 = vmatprep.mubr.f32.mxu0 0.0
  %2399 = vmatmul.mubr.f32.gmra.mxu0 %v2319
  %v2400 = vpop.f32.mrf.mxu0
  %v2401 = vadd.f32 %v2304, %v2400
  %v2402 = vpop.f32.mrf.mxu0
  %2403 = vmatprep.mubr.f32.mxu0 0.0
  %2404 = vmatmul.mubr.f32.gmra.mxu0 %v2322
  %v2405 = vpop.f32.mrf.mxu0
  %v2406 = vadd.f32 %v2309, %v2405
  %v2407 = vpop.f32.mrf.mxu0
  %2408 = vdwg.mxu0
  %2409 = vrot.lane.b32.xlu0 %v1213, 112
  %v2410 = vpop.permute.xlu0 %2409
  %2411 = vrot.lane.b32.xlu0 %v1218, 112
  %v2412 = vpop.permute.xlu0 %2411
  %2413 = vrot.lane.b32.xlu0 %v1307, 112
  %v2414 = vpop.permute.xlu0 %2413
  %2415 = vrot.lane.b32.xlu0 %v1312, 112
  %v2416 = vpop.permute.xlu0 %2415
  %v2417 = vsel %vm1419, %v2410, 0
  %v2419 = vsel %vm1419, %v2412, 0
  %v2421 = vsel %vm1419, %v2414, 0
  %v2423 = vsel %vm1419, %v2416, 0
  %2425 = vmatprep.subr.mxu0 0.0
  %2426 = vmatpush1.xpose.msra.mxu0 0.0
  %2427 = vmatprep.subr.mxu0 0.0
  %2428 = vmatpush1.xpose.msra.mxu0 0.0
  %2429 = vmatprep.subr.mxu0 0.0
  %2430 = vmatpush1.xpose.msra.mxu0 0.0
  %2431 = vmatprep.subr.mxu0 0.0
  %2432 = vmatpush1.xpose.msra.mxu0 0.0
  %2433 = vmatprep.subr.mxu0 0.0
  %2434 = vmatpush1.xpose.msra.mxu0 0.0
  %2435 = vmatprep.subr.mxu0 0.0
  %2436 = vmatpush1.xpose.msra.mxu0 0.0
  %2437 = vmatprep.subr.mxu0 0.0
  %2438 = vmatpush1.xpose.msra.mxu0 0.0
  %2439 = vmatprep.subr.mxu0 0.0
  %2440 = vmatpush1.xpose.msra.mxu0 0.0
  %2441 = vmatprep.subr.mxu0 0.0
  %2442 = vmatpush1.xpose.msra.mxu0 0.0
  %2443 = vmatprep.subr.mxu0 0.0
  %2444 = vmatpush1.xpose.msra.mxu0 0.0
  %2445 = vmatprep.subr.mxu0 0.0
  %2446 = vmatpush1.xpose.msra.mxu0 0.0
  %2447 = vmatprep.subr.mxu0 0.0
  %2448 = vmatpush1.xpose.msra.mxu0 0.0
  %2449 = vmatprep.subr.mxu0 0.0
  %2450 = vmatpush1.xpose.msra.mxu0 0.0
  %2451 = vmatprep.subr.mxu0 0.0
  %2452 = vmatpush1.xpose.msra.mxu0 0.0
  %2453 = vmatprep.subr.mxu0 0.0
  %2454 = vmatpush1.xpose.msra.mxu0 %v2423
  %2455 = vmatprep.subr.mxu0 0.0
  %2456 = vmatpush1.xpose.msra.mxu0 %v2421
  %2457 = vmatprep.subr.mxu0 0.0
  %2458 = vmatpush2.xpose.msra.mxu0 0.0
  %2459 = vmatprep.subr.mxu0 0.0
  %2460 = vmatpush2.xpose.msra.mxu0 0.0
  %2461 = vmatprep.subr.mxu0 0.0
  %2462 = vmatpush2.xpose.msra.mxu0 0.0
  %2463 = vmatprep.subr.mxu0 0.0
  %2464 = vmatpush2.xpose.msra.mxu0 0.0
  %2465 = vmatprep.subr.mxu0 0.0
  %2466 = vmatpush2.xpose.msra.mxu0 0.0
  %2467 = vmatprep.subr.mxu0 0.0
  %2468 = vmatpush2.xpose.msra.mxu0 0.0
  %2469 = vmatprep.subr.mxu0 0.0
  %2470 = vmatpush2.xpose.msra.mxu0 0.0
  %2471 = vmatprep.subr.mxu0 0.0
  %2472 = vmatpush2.xpose.msra.mxu0 0.0
  %2473 = vmatprep.subr.mxu0 0.0
  %2474 = vmatpush2.xpose.msra.mxu0 0.0
  %2475 = vmatprep.subr.mxu0 0.0
  %2476 = vmatpush2.xpose.msra.mxu0 0.0
  %2477 = vmatprep.subr.mxu0 0.0
  %2478 = vmatpush2.xpose.msra.mxu0 0.0
  %2479 = vmatprep.subr.mxu0 0.0
  %2480 = vmatpush2.xpose.msra.mxu0 0.0
  %2481 = vmatprep.subr.mxu0 0.0
  %2482 = vmatpush2.xpose.msra.mxu0 0.0
  %2483 = vmatprep.subr.mxu0 0.0
  %2484 = vmatpush2.xpose.msra.mxu0 0.0
  %2485 = vmatprep.subr.mxu0 0.0
  %2486 = vmatpush2.xpose.msra.mxu0 0.0
  %2487 = vmatprep.subr.mxu0 0.0
  %2488 = vmatpush2.xpose.msra.mxu0 0.0
  %2489 = vmatprep.mubr.f32.mxu0 0.0
  %2490 = vmatmul.mubr.f32.gmra.mxu0 %v2417
  %v2491 = vpop.f32.mrf.mxu0
  %v2492 = vadd.f32 0.0, %v2491
  %v2493 = vpop.f32.mrf.mxu0
  %2494 = vmatprep.mubr.f32.mxu0 0.0
  %2495 = vmatmul.mubr.f32.gmra.mxu0 %v2419
  %v2496 = vpop.f32.mrf.mxu0
  %v2497 = vadd.f32 0.0, %v2496
  %v2498 = vpop.f32.mrf.mxu0
  %2499 = vdwg.mxu0
  %2500 = vrot.lane.b32.xlu0 %v1223, 112
  %v2501 = vpop.permute.xlu0 %2500
  %2502 = vrot.lane.b32.xlu0 %v1228, 112
  %v2503 = vpop.permute.xlu0 %2502
  %2504 = vrot.lane.b32.xlu0 %v1317, 112
  %v2505 = vpop.permute.xlu0 %2504
  %2506 = vrot.lane.b32.xlu0 %v1322, 112
  %v2507 = vpop.permute.xlu0 %2506
  %v2508 = vsel %vm1419, %v2501, 0
  %v2510 = vsel %vm1419, %v2503, 0
  %v2512 = vsel %vm1419, %v2505, 0
  %v2514 = vsel %vm1419, %v2507, 0
  %2516 = vmatprep.subr.mxu0 0.0
  %2517 = vmatpush1.xpose.msra.mxu0 0.0
  %2518 = vmatprep.subr.mxu0 0.0
  %2519 = vmatpush1.xpose.msra.mxu0 0.0
  %2520 = vmatprep.subr.mxu0 0.0
  %2521 = vmatpush1.xpose.msra.mxu0 0.0
  %2522 = vmatprep.subr.mxu0 0.0
  %2523 = vmatpush1.xpose.msra.mxu0 0.0
  %2524 = vmatprep.subr.mxu0 0.0
  %2525 = vmatpush1.xpose.msra.mxu0 0.0
  %2526 = vmatprep.subr.mxu0 0.0
  %2527 = vmatpush1.xpose.msra.mxu0 0.0
  %2528 = vmatprep.subr.mxu0 0.0
  %2529 = vmatpush1.xpose.msra.mxu0 0.0
  %2530 = vmatprep.subr.mxu0 0.0
  %2531 = vmatpush1.xpose.msra.mxu0 0.0
  %2532 = vmatprep.subr.mxu0 0.0
  %2533 = vmatpush1.xpose.msra.mxu0 0.0
  %2534 = vmatprep.subr.mxu0 0.0
  %2535 = vmatpush1.xpose.msra.mxu0 0.0
  %2536 = vmatprep.subr.mxu0 0.0
  %2537 = vmatpush1.xpose.msra.mxu0 0.0
  %2538 = vmatprep.subr.mxu0 0.0
  %2539 = vmatpush1.xpose.msra.mxu0 0.0
  %2540 = vmatprep.subr.mxu0 0.0
  %2541 = vmatpush1.xpose.msra.mxu0 0.0
  %2542 = vmatprep.subr.mxu0 0.0
  %2543 = vmatpush1.xpose.msra.mxu0 0.0
  %2544 = vmatprep.subr.mxu0 0.0
  %2545 = vmatpush1.xpose.msra.mxu0 %v2514
  %2546 = vmatprep.subr.mxu0 0.0
  %2547 = vmatpush1.xpose.msra.mxu0 %v2512
  %2548 = vmatprep.subr.mxu0 0.0
  %2549 = vmatpush2.xpose.msra.mxu0 0.0
  %2550 = vmatprep.subr.mxu0 0.0
  %2551 = vmatpush2.xpose.msra.mxu0 0.0
  %2552 = vmatprep.subr.mxu0 0.0
  %2553 = vmatpush2.xpose.msra.mxu0 0.0
  %2554 = vmatprep.subr.mxu0 0.0
  %2555 = vmatpush2.xpose.msra.mxu0 0.0
  %2556 = vmatprep.subr.mxu0 0.0
  %2557 = vmatpush2.xpose.msra.mxu0 0.0
  %2558 = vmatprep.subr.mxu0 0.0
  %2559 = vmatpush2.xpose.msra.mxu0 0.0
  %2560 = vmatprep.subr.mxu0 0.0
  %2561 = vmatpush2.xpose.msra.mxu0 0.0
  %2562 = vmatprep.subr.mxu0 0.0
  %2563 = vmatpush2.xpose.msra.mxu0 0.0
  %2564 = vmatprep.subr.mxu0 0.0
  %2565 = vmatpush2.xpose.msra.mxu0 0.0
  %2566 = vmatprep.subr.mxu0 0.0
  %2567 = vmatpush2.xpose.msra.mxu0 0.0
  %2568 = vmatprep.subr.mxu0 0.0
  %2569 = vmatpush2.xpose.msra.mxu0 0.0
  %2570 = vmatprep.subr.mxu0 0.0
  %2571 = vmatpush2.xpose.msra.mxu0 0.0
  %2572 = vmatprep.subr.mxu0 0.0
  %2573 = vmatpush2.xpose.msra.mxu0 0.0
  %2574 = vmatprep.subr.mxu0 0.0
  %2575 = vmatpush2.xpose.msra.mxu0 0.0
  %2576 = vmatprep.subr.mxu0 0.0
  %2577 = vmatpush2.xpose.msra.mxu0 0.0
  %2578 = vmatprep.subr.mxu0 0.0
  %2579 = vmatpush2.xpose.msra.mxu0 0.0
  %2580 = vmatprep.mubr.f32.mxu0 0.0
  %2581 = vmatmul.mubr.f32.gmra.mxu0 %v2508
  %v2582 = vpop.f32.mrf.mxu0
  %v2583 = vadd.f32 0.0, %v2582
  %v2584 = vpop.f32.mrf.mxu0
  %2585 = vmatprep.mubr.f32.mxu0 0.0
  %2586 = vmatmul.mubr.f32.gmra.mxu0 %v2510
  %v2587 = vpop.f32.mrf.mxu0
  %v2588 = vadd.f32 0.0, %v2587
  %v2589 = vpop.f32.mrf.mxu0
  %2590 = vdwg.mxu0
  %v2591 = vmul.f32 %v2492, 0.35355338
  %v2592 = vmul.f32 %v2497, 0.35355338
  %v2593 = vmul.f32 %v2583, 0.35355338
  %v2594 = vmul.f32 %v2588, 0.35355338
  %v2595 = vsel %vm1598, %v2591, -inf
  %2596 = vmax.xlane.f32.xlu0 %v2595
  %v2597 = vpop.xlane.xlu0 %2596
  %v2598 = vsel %vm1598, %v2592, -inf
  %2599 = vmax.xlane.f32.xlu0 %v2598
  %v2600 = vpop.xlane.xlu0 %2599
  %v2601 = vsel %vm1598, %v2593, -inf
  %2602 = vmax.xlane.f32.xlu0 %v2601
  %v2603 = vpop.xlane.xlu0 %2602
  %v2604 = vsel %vm1598, %v2594, -inf
  %2605 = vmax.xlane.f32.xlu0 %v2604
  %v2606 = vpop.xlane.xlu0 %2605
  %v2607 = vsub.f32 %v2591, %v2597
  %v2608 = vsub.f32 %v2592, %v2600
  %v2609 = vsub.f32 %v2593, %v2603
  %v2610 = vsub.f32 %v2594, %v2606
  %v2611 = vmul.f32 %v2607, 1.442695
  %v2612 = vpow.pop %v2611
  %v2613 = vmul.f32 %v2608, 1.442695
  %v2614 = vpow.pop %v2613
  %v2615 = vmul.f32 %v2609, 1.442695
  %v2616 = vpow.pop %v2615
  %v2617 = vmul.f32 %v2610, 1.442695
  %v2618 = vpow.pop %v2617
  %v2619 = vsel %vm1598, %v2612, 0.0
  %2620 = vadd.xlane.f32.xlu0 %v2619
  %v2621 = vpop.xlane.xlu0 %2620
  %v2622 = vsel %vm1598, %v2614, 0.0
  %2623 = vadd.xlane.f32.xlu0 %v2622
  %v2624 = vpop.xlane.xlu0 %2623
  %v2625 = vsel %vm1598, %v2616, 0.0
  %2626 = vadd.xlane.f32.xlu0 %v2625
  %v2627 = vpop.xlane.xlu0 %2626
  %v2628 = vsel %vm1598, %v2618, 0.0
  %2629 = vadd.xlane.f32.xlu0 %v2628
  %v2630 = vpop.xlane.xlu0 %2629
  %v2631 = vrcp.pop %v2621
  %v2632 = vmul.f32 %v2612, %v2631
  %v2633 = vrcp.pop %v2624
  %v2634 = vmul.f32 %v2614, %v2633
  %v2635 = vrcp.pop %v2627
  %v2636 = vmul.f32 %v2616, %v2635
  %v2637 = vrcp.pop %v2630
  %v2638 = vmul.f32 %v2618, %v2637
  %2639 = vrot.lane.b32.xlu0 %v1401, 112
  %v2640 = vpop.permute.xlu0 %2639
  %2641 = vrot.lane.b32.xlu0 %v1406, 112
  %v2642 = vpop.permute.xlu0 %2641
  %v2646 = vsel %vm1598, %v2632, 0
  %v2649 = vsel %vm1598, %v2634, 0
  %2651 = vmatprep.subr.mxu0 0.0
  %2652 = vmatpush1.msra.mxu0 0.0
  %2653 = vmatprep.subr.mxu0 0.0
  %2654 = vmatpush1.msra.mxu0 0.0
  %2655 = vmatprep.subr.mxu0 0.0
  %2656 = vmatpush1.msra.mxu0 0.0
  %2657 = vmatprep.subr.mxu0 0.0
  %2658 = vmatpush1.msra.mxu0 0.0
  %2659 = vmatprep.subr.mxu0 0.0
  %2660 = vmatpush1.msra.mxu0 0.0
  %2661 = vmatprep.subr.mxu0 0.0
  %2662 = vmatpush1.msra.mxu0 0.0
  %2663 = vmatprep.subr.mxu0 0.0
  %2664 = vmatpush1.msra.mxu0 0.0
  %2665 = vmatprep.subr.mxu0 0.0
  %2666 = vmatpush1.msra.mxu0 0.0
  %2667 = vmatprep.subr.mxu0 0.0
  %2668 = vmatpush1.msra.mxu0 0.0
  %2669 = vmatprep.subr.mxu0 0.0
  %2670 = vmatpush1.msra.mxu0 0.0
  %2671 = vmatprep.subr.mxu0 0.0
  %2672 = vmatpush1.msra.mxu0 0.0
  %2673 = vmatprep.subr.mxu0 0.0
  %2674 = vmatpush1.msra.mxu0 0.0
  %2675 = vmatprep.subr.mxu0 0.0
  %2676 = vmatpush1.msra.mxu0 0.0
  %2677 = vmatprep.subr.mxu0 0.0
  %2678 = vmatpush1.msra.mxu0 0.0
  %2679 = vmatprep.subr.mxu0 0.0
  %2680 = vmatpush1.msra.mxu0 %v2642
  %2681 = vmatprep.subr.mxu0 0.0
  %2682 = vmatpush1.msra.mxu0 %v2640
  %2683 = vmatprep.subr.mxu0 0.0
  %2684 = vmatpush2.msra.mxu0 0.0
  %2685 = vmatprep.subr.mxu0 0.0
  %2686 = vmatpush2.msra.mxu0 0.0
  %2687 = vmatprep.subr.mxu0 0.0
  %2688 = vmatpush2.msra.mxu0 0.0
  %2689 = vmatprep.subr.mxu0 0.0
  %2690 = vmatpush2.msra.mxu0 0.0
  %2691 = vmatprep.subr.mxu0 0.0
  %2692 = vmatpush2.msra.mxu0 0.0
  %2693 = vmatprep.subr.mxu0 0.0
  %2694 = vmatpush2.msra.mxu0 0.0
  %2695 = vmatprep.subr.mxu0 0.0
  %2696 = vmatpush2.msra.mxu0 0.0
  %2697 = vmatprep.subr.mxu0 0.0
  %2698 = vmatpush2.msra.mxu0 0.0
  %2699 = vmatprep.subr.mxu0 0.0
  %2700 = vmatpush2.msra.mxu0 0.0
  %2701 = vmatprep.subr.mxu0 0.0
  %2702 = vmatpush2.msra.mxu0 0.0
  %2703 = vmatprep.subr.mxu0 0.0
  %2704 = vmatpush2.msra.mxu0 0.0
  %2705 = vmatprep.subr.mxu0 0.0
  %2706 = vmatpush2.msra.mxu0 0.0
  %2707 = vmatprep.subr.mxu0 0.0
  %2708 = vmatpush2.msra.mxu0 0.0
  %2709 = vmatprep.subr.mxu0 0.0
  %2710 = vmatpush2.msra.mxu0 0.0
  %2711 = vmatprep.subr.mxu0 0.0
  %2712 = vmatpush2.msra.mxu0 0.0
  %2713 = vmatprep.subr.mxu0 0.0
  %2714 = vmatpush2.msra.mxu0 0.0
  %2715 = vmatprep.mubr.f32.mxu0 0.0
  %2716 = vmatmul.mubr.f32.gmra.mxu0 %v2646
  %v2717 = vpop.f32.mrf.mxu0
  %v2718 = vadd.f32 0.0, %v2717
  %v2719 = vpop.f32.mrf.mxu0
  %2720 = vmatprep.mubr.f32.mxu0 0.0
  %2721 = vmatmul.mubr.f32.gmra.mxu0 %v2649
  %v2722 = vpop.f32.mrf.mxu0
  %v2723 = vadd.f32 0.0, %v2722
  %v2724 = vpop.f32.mrf.mxu0
  %2725 = vdwg.mxu0
  %2726 = vrot.lane.b32.xlu0 %v1411, 112
  %v2727 = vpop.permute.xlu0 %2726
  %2728 = vrot.lane.b32.xlu0 %v1416, 112
  %v2729 = vpop.permute.xlu0 %2728
  %v2733 = vsel %vm1598, %v2636, 0
  %v2736 = vsel %vm1598, %v2638, 0
  %2738 = vmatprep.subr.mxu0 0.0
  %2739 = vmatpush1.msra.mxu0 0.0
  %2740 = vmatprep.subr.mxu0 0.0
  %2741 = vmatpush1.msra.mxu0 0.0
  %2742 = vmatprep.subr.mxu0 0.0
  %2743 = vmatpush1.msra.mxu0 0.0
  %2744 = vmatprep.subr.mxu0 0.0
  %2745 = vmatpush1.msra.mxu0 0.0
  %2746 = vmatprep.subr.mxu0 0.0
  %2747 = vmatpush1.msra.mxu0 0.0
  %2748 = vmatprep.subr.mxu0 0.0
  %2749 = vmatpush1.msra.mxu0 0.0
  %2750 = vmatprep.subr.mxu0 0.0
  %2751 = vmatpush1.msra.mxu0 0.0
  %2752 = vmatprep.subr.mxu0 0.0
  %2753 = vmatpush1.msra.mxu0 0.0
  %2754 = vmatprep.subr.mxu0 0.0
  %2755 = vmatpush1.msra.mxu0 0.0
  %2756 = vmatprep.subr.mxu0 0.0
  %2757 = vmatpush1.msra.mxu0 0.0
  %2758 = vmatprep.subr.mxu0 0.0
  %2759 = vmatpush1.msra.mxu0 0.0
  %2760 = vmatprep.subr.mxu0 0.0
  %2761 = vmatpush1.msra.mxu0 0.0
  %2762 = vmatprep.subr.mxu0 0.0
  %2763 = vmatpush1.msra.mxu0 0.0
  %2764 = vmatprep.subr.mxu0 0.0
  %2765 = vmatpush1.msra.mxu0 0.0
  %2766 = vmatprep.subr.mxu0 0.0
  %2767 = vmatpush1.msra.mxu0 %v2729
  %2768 = vmatprep.subr.mxu0 0.0
  %2769 = vmatpush1.msra.mxu0 %v2727
  %2770 = vmatprep.subr.mxu0 0.0
  %2771 = vmatpush2.msra.mxu0 0.0
  %2772 = vmatprep.subr.mxu0 0.0
  %2773 = vmatpush2.msra.mxu0 0.0
  %2774 = vmatprep.subr.mxu0 0.0
  %2775 = vmatpush2.msra.mxu0 0.0
  %2776 = vmatprep.subr.mxu0 0.0
  %2777 = vmatpush2.msra.mxu0 0.0
  %2778 = vmatprep.subr.mxu0 0.0
  %2779 = vmatpush2.msra.mxu0 0.0
  %2780 = vmatprep.subr.mxu0 0.0
  %2781 = vmatpush2.msra.mxu0 0.0
  %2782 = vmatprep.subr.mxu0 0.0
  %2783 = vmatpush2.msra.mxu0 0.0
  %2784 = vmatprep.subr.mxu0 0.0
  %2785 = vmatpush2.msra.mxu0 0.0
  %2786 = vmatprep.subr.mxu0 0.0
  %2787 = vmatpush2.msra.mxu0 0.0
  %2788 = vmatprep.subr.mxu0 0.0
  %2789 = vmatpush2.msra.mxu0 0.0
  %2790 = vmatprep.subr.mxu0 0.0
  %2791 = vmatpush2.msra.mxu0 0.0
  %2792 = vmatprep.subr.mxu0 0.0
  %2793 = vmatpush2.msra.mxu0 0.0
  %2794 = vmatprep.subr.mxu0 0.0
  %2795 = vmatpush2.msra.mxu0 0.0
  %2796 = vmatprep.subr.mxu0 0.0
  %2797 = vmatpush2.msra.mxu0 0.0
  %2798 = vmatprep.subr.mxu0 0.0
  %2799 = vmatpush2.msra.mxu0 0.0
  %2800 = vmatprep.subr.mxu0 0.0
  %2801 = vmatpush2.msra.mxu0 0.0
  %2802 = vmatprep.mubr.f32.mxu0 0.0
  %2803 = vmatmul.mubr.f32.gmra.mxu0 %v2733
  %v2804 = vpop.f32.mrf.mxu0
  %v2805 = vadd.f32 0.0, %v2804
  %v2806 = vpop.f32.mrf.mxu0
  %2807 = vmatprep.mubr.f32.mxu0 0.0
  %2808 = vmatmul.mubr.f32.gmra.mxu0 %v2736
  %v2809 = vpop.f32.mrf.mxu0
  %v2810 = vadd.f32 0.0, %v2809
  %v2811 = vpop.f32.mrf.mxu0
  %2812 = vdwg.mxu0
  %v2813 = vld [vmem:[%s3 + $0x178] sm:$0xff]
  %v2815 = vsel %vm1419, %v2718, 0
  %v2818 = vsel %vm1419, %v2723, 0
  %v2821 = vsel %vm1419, %v2805, 0
  %v2824 = vsel %vm1419, %v2810, 0
  %2826 = vmatprep.subr.mxu0 0.0
  %2827 = vmatpush1.msra.mxu0 0.0
  %2828 = vmatprep.subr.mxu0 0.0
  %2829 = vmatpush1.msra.mxu0 0.0
  %2830 = vmatprep.subr.mxu0 0.0
  %2831 = vmatpush1.msra.mxu0 0.0
  %2832 = vmatprep.subr.mxu0 0.0
  %2833 = vmatpush1.msra.mxu0 0.0
  %2834 = vmatprep.subr.mxu0 0.0
  %2835 = vmatpush1.msra.mxu0 0.0
  %2836 = vmatprep.subr.mxu0 0.0
  %2837 = vmatpush1.msra.mxu0 0.0
  %2838 = vmatprep.subr.mxu0 0.0
  %2839 = vmatpush1.msra.mxu0 0.0
  %2840 = vmatprep.subr.mxu0 0.0
  %2841 = vmatpush1.msra.mxu0 0.0
  %2842 = vmatprep.subr.mxu0 0.0
  %2843 = vmatpush1.msra.mxu0 0.0
  %2844 = vmatprep.subr.mxu0 0.0
  %2845 = vmatpush1.msra.mxu0 0.0
  %2846 = vmatprep.subr.mxu0 0.0
  %2847 = vmatpush1.msra.mxu0 0.0
  %2848 = vmatprep.subr.mxu0 0.0
  %2849 = vmatpush1.msra.mxu0 0.0
  %2850 = vmatprep.subr.mxu0 0.0
  %2851 = vmatpush1.msra.mxu0 0.0
  %2852 = vmatprep.subr.mxu0 0.0
  %2853 = vmatpush1.msra.mxu0 0.0
  %2854 = vmatprep.subr.mxu0 0.0
  %2855 = vmatpush1.msra.mxu0 0.0
  %2856 = vmatprep.subr.mxu0 0.0
  %2857 = vmatpush1.msra.mxu0 %v2813
  %2858 = vmatprep.subr.mxu0 0.0
  %2859 = vmatpush2.msra.mxu0 0.0
  %2860 = vmatprep.subr.mxu0 0.0
  %2861 = vmatpush2.msra.mxu0 0.0
  %2862 = vmatprep.subr.mxu0 0.0
  %2863 = vmatpush2.msra.mxu0 0.0
  %2864 = vmatprep.subr.mxu0 0.0
  %2865 = vmatpush2.msra.mxu0 0.0
  %2866 = vmatprep.subr.mxu0 0.0
  %2867 = vmatpush2.msra.mxu0 0.0
  %2868 = vmatprep.subr.mxu0 0.0
  %2869 = vmatpush2.msra.mxu0 0.0
  %2870 = vmatprep.subr.mxu0 0.0
  %2871 = vmatpush2.msra.mxu0 0.0
  %2872 = vmatprep.subr.mxu0 0.0
  %2873 = vmatpush2.msra.mxu0 0.0
  %2874 = vmatprep.subr.mxu0 0.0
  %2875 = vmatpush2.msra.mxu0 0.0
  %2876 = vmatprep.subr.mxu0 0.0
  %2877 = vmatpush2.msra.mxu0 0.0
  %2878 = vmatprep.subr.mxu0 0.0
  %2879 = vmatpush2.msra.mxu0 0.0
  %2880 = vmatprep.subr.mxu0 0.0
  %2881 = vmatpush2.msra.mxu0 0.0
  %2882 = vmatprep.subr.mxu0 0.0
  %2883 = vmatpush2.msra.mxu0 0.0
  %2884 = vmatprep.subr.mxu0 0.0
  %2885 = vmatpush2.msra.mxu0 0.0
  %2886 = vmatprep.subr.mxu0 0.0
  %2887 = vmatpush2.msra.mxu0 0.0
  %2888 = vmatprep.subr.mxu0 0.0
  %2889 = vmatpush2.msra.mxu0 0.0
  %2890 = vmatprep.mubr.f32.mxu0 0.0
  %2891 = vmatmul.mubr.f32.gmra.mxu0 %v2815
  %v2892 = vpop.f32.mrf.mxu0
  %v2893 = vadd.f32 0.0, %v2892
  %v2894 = vpop.f32.mrf.mxu0
  %2895 = vmatprep.mubr.f32.mxu0 0.0
  %2896 = vmatmul.mubr.f32.gmra.mxu0 %v2818
  %v2897 = vpop.f32.mrf.mxu0
  %v2898 = vadd.f32 0.0, %v2897
  %v2899 = vpop.f32.mrf.mxu0
  %2900 = vmatprep.mubr.f32.mxu0 0.0
  %2901 = vmatmul.mubr.f32.gmra.mxu0 %v2821
  %v2902 = vpop.f32.mrf.mxu0
  %v2903 = vadd.f32 0.0, %v2902
  %v2904 = vpop.f32.mrf.mxu0
  %2905 = vmatprep.mubr.f32.mxu0 0.0
  %2906 = vmatmul.mubr.f32.gmra.mxu0 %v2824
  %v2907 = vpop.f32.mrf.mxu0
  %v2908 = vadd.f32 0.0, %v2907
  %v2909 = vpop.f32.mrf.mxu0
  %2910 = vdwg.mxu0
  %v2911 = vadd.f32 %v2391, %v2893
  %v2912 = vadd.f32 %v2396, %v2898
  %v2913 = vadd.f32 %v2401, %v2903
  %v2914 = vadd.f32 %v2406, %v2908
  %2915 = vrot.lane.b32.xlu0 %v1213, 104
  %v2916 = vpop.permute.xlu0 %2915
  %2917 = vrot.lane.b32.xlu0 %v1218, 104
  %v2918 = vpop.permute.xlu0 %2917
  %2919 = vrot.lane.b32.xlu0 %v1307, 104
  %v2920 = vpop.permute.xlu0 %2919
  %2921 = vrot.lane.b32.xlu0 %v1312, 104
  %v2922 = vpop.permute.xlu0 %2921
  %v2923 = vsel %vm1419, %v2916, 0
  %v2925 = vsel %vm1419, %v2918, 0
  %v2927 = vsel %vm1419, %v2920, 0
  %v2929 = vsel %vm1419, %v2922, 0
  %2931 = vmatprep.subr.mxu0 0.0
  %2932 = vmatpush1.xpose.msra.mxu0 0.0
  %2933 = vmatprep.subr.mxu0 0.0
  %2934 = vmatpush1.xpose.msra.mxu0 0.0
  %2935 = vmatprep.subr.mxu0 0.0
  %2936 = vmatpush1.xpose.msra.mxu0 0.0
  %2937 = vmatprep.subr.mxu0 0.0
  %2938 = vmatpush1.xpose.msra.mxu0 0.0
  %2939 = vmatprep.subr.mxu0 0.0
  %2940 = vmatpush1.xpose.msra.mxu0 0.0
  %2941 = vmatprep.subr.mxu0 0.0
  %2942 = vmatpush1.xpose.msra.mxu0 0.0
  %2943 = vmatprep.subr.mxu0 0.0
  %2944 = vmatpush1.xpose.msra.mxu0 0.0
  %2945 = vmatprep.subr.mxu0 0.0
  %2946 = vmatpush1.xpose.msra.mxu0 0.0
  %2947 = vmatprep.subr.mxu0 0.0
  %2948 = vmatpush1.xpose.msra.mxu0 0.0
  %2949 = vmatprep.subr.mxu0 0.0
  %2950 = vmatpush1.xpose.msra.mxu0 0.0
  %2951 = vmatprep.subr.mxu0 0.0
  %2952 = vmatpush1.xpose.msra.mxu0 0.0
  %2953 = vmatprep.subr.mxu0 0.0
  %2954 = vmatpush1.xpose.msra.mxu0 0.0
  %2955 = vmatprep.subr.mxu0 0.0
  %2956 = vmatpush1.xpose.msra.mxu0 0.0
  %2957 = vmatprep.subr.mxu0 0.0
  %2958 = vmatpush1.xpose.msra.mxu0 0.0
  %2959 = vmatprep.subr.mxu0 0.0
  %2960 = vmatpush1.xpose.msra.mxu0 %v2929
  %2961 = vmatprep.subr.mxu0 0.0
  %2962 = vmatpush1.xpose.msra.mxu0 %v2927
  %2963 = vmatprep.subr.mxu0 0.0
  %2964 = vmatpush2.xpose.msra.mxu0 0.0
  %2965 = vmatprep.subr.mxu0 0.0
  %2966 = vmatpush2.xpose.msra.mxu0 0.0
  %2967 = vmatprep.subr.mxu0 0.0
  %2968 = vmatpush2.xpose.msra.mxu0 0.0
  %2969 = vmatprep.subr.mxu0 0.0
  %2970 = vmatpush2.xpose.msra.mxu0 0.0
  %2971 = vmatprep.subr.mxu0 0.0
  %2972 = vmatpush2.xpose.msra.mxu0 0.0
  %2973 = vmatprep.subr.mxu0 0.0
  %2974 = vmatpush2.xpose.msra.mxu0 0.0
  %2975 = vmatprep.subr.mxu0 0.0
  %2976 = vmatpush2.xpose.msra.mxu0 0.0
  %2977 = vmatprep.subr.mxu0 0.0
  %2978 = vmatpush2.xpose.msra.mxu0 0.0
  %2979 = vmatprep.subr.mxu0 0.0
  %2980 = vmatpush2.xpose.msra.mxu0 0.0
  %2981 = vmatprep.subr.mxu0 0.0
  %2982 = vmatpush2.xpose.msra.mxu0 0.0
  %2983 = vmatprep.subr.mxu0 0.0
  %2984 = vmatpush2.xpose.msra.mxu0 0.0
  %2985 = vmatprep.subr.mxu0 0.0
  %2986 = vmatpush2.xpose.msra.mxu0 0.0
  %2987 = vmatprep.subr.mxu0 0.0
  %2988 = vmatpush2.xpose.msra.mxu0 0.0
  %2989 = vmatprep.subr.mxu0 0.0
  %2990 = vmatpush2.xpose.msra.mxu0 0.0
  %2991 = vmatprep.subr.mxu0 0.0
  %2992 = vmatpush2.xpose.msra.mxu0 0.0
  %2993 = vmatprep.subr.mxu0 0.0
  %2994 = vmatpush2.xpose.msra.mxu0 0.0
  %2995 = vmatprep.mubr.f32.mxu0 0.0
  %2996 = vmatmul.mubr.f32.gmra.mxu0 %v2923
  %v2997 = vpop.f32.mrf.mxu0
  %v2998 = vadd.f32 0.0, %v2997
  %v2999 = vpop.f32.mrf.mxu0
  %3000 = vmatprep.mubr.f32.mxu0 0.0
  %3001 = vmatmul.mubr.f32.gmra.mxu0 %v2925
  %v3002 = vpop.f32.mrf.mxu0
  %v3003 = vadd.f32 0.0, %v3002
  %v3004 = vpop.f32.mrf.mxu0
  %3005 = vdwg.mxu0
  %3006 = vrot.lane.b32.xlu0 %v1223, 104
  %v3007 = vpop.permute.xlu0 %3006
  %3008 = vrot.lane.b32.xlu0 %v1228, 104
  %v3009 = vpop.permute.xlu0 %3008
  %3010 = vrot.lane.b32.xlu0 %v1317, 104
  %v3011 = vpop.permute.xlu0 %3010
  %3012 = vrot.lane.b32.xlu0 %v1322, 104
  %v3013 = vpop.permute.xlu0 %3012
  %v3014 = vsel %vm1419, %v3007, 0
  %v3016 = vsel %vm1419, %v3009, 0
  %v3018 = vsel %vm1419, %v3011, 0
  %v3020 = vsel %vm1419, %v3013, 0
  %3022 = vmatprep.subr.mxu0 0.0
  %3023 = vmatpush1.xpose.msra.mxu0 0.0
  %3024 = vmatprep.subr.mxu0 0.0
  %3025 = vmatpush1.xpose.msra.mxu0 0.0
  %3026 = vmatprep.subr.mxu0 0.0
  %3027 = vmatpush1.xpose.msra.mxu0 0.0
  %3028 = vmatprep.subr.mxu0 0.0
  %3029 = vmatpush1.xpose.msra.mxu0 0.0
  %3030 = vmatprep.subr.mxu0 0.0
  %3031 = vmatpush1.xpose.msra.mxu0 0.0
  %3032 = vmatprep.subr.mxu0 0.0
  %3033 = vmatpush1.xpose.msra.mxu0 0.0
  %3034 = vmatprep.subr.mxu0 0.0
  %3035 = vmatpush1.xpose.msra.mxu0 0.0
  %3036 = vmatprep.subr.mxu0 0.0
  %3037 = vmatpush1.xpose.msra.mxu0 0.0
  %3038 = vmatprep.subr.mxu0 0.0
  %3039 = vmatpush1.xpose.msra.mxu0 0.0
  %3040 = vmatprep.subr.mxu0 0.0
  %3041 = vmatpush1.xpose.msra.mxu0 0.0
  %3042 = vmatprep.subr.mxu0 0.0
  %3043 = vmatpush1.xpose.msra.mxu0 0.0
  %3044 = vmatprep.subr.mxu0 0.0
  %3045 = vmatpush1.xpose.msra.mxu0 0.0
  %3046 = vmatprep.subr.mxu0 0.0
  %3047 = vmatpush1.xpose.msra.mxu0 0.0
  %3048 = vmatprep.subr.mxu0 0.0
  %3049 = vmatpush1.xpose.msra.mxu0 0.0
  %3050 = vmatprep.subr.mxu0 0.0
  %3051 = vmatpush1.xpose.msra.mxu0 %v3020
  %3052 = vmatprep.subr.mxu0 0.0
  %3053 = vmatpush1.xpose.msra.mxu0 %v3018
  %3054 = vmatprep.subr.mxu0 0.0
  %3055 = vmatpush2.xpose.msra.mxu0 0.0
  %3056 = vmatprep.subr.mxu0 0.0
  %3057 = vmatpush2.xpose.msra.mxu0 0.0
  %3058 = vmatprep.subr.mxu0 0.0
  %3059 = vmatpush2.xpose.msra.mxu0 0.0
  %3060 = vmatprep.subr.mxu0 0.0
  %3061 = vmatpush2.xpose.msra.mxu0 0.0
  %3062 = vmatprep.subr.mxu0 0.0
  %3063 = vmatpush2.xpose.msra.mxu0 0.0
  %3064 = vmatprep.subr.mxu0 0.0
  %3065 = vmatpush2.xpose.msra.mxu0 0.0
  %3066 = vmatprep.subr.mxu0 0.0
  %3067 = vmatpush2.xpose.msra.mxu0 0.0
  %3068 = vmatprep.subr.mxu0 0.0
  %3069 = vmatpush2.xpose.msra.mxu0 0.0
  %3070 = vmatprep.subr.mxu0 0.0
  %3071 = vmatpush2.xpose.msra.mxu0 0.0
  %3072 = vmatprep.subr.mxu0 0.0
  %3073 = vmatpush2.xpose.msra.mxu0 0.0
  %3074 = vmatprep.subr.mxu0 0.0
  %3075 = vmatpush2.xpose.msra.mxu0 0.0
  %3076 = vmatprep.subr.mxu0 0.0
  %3077 = vmatpush2.xpose.msra.mxu0 0.0
  %3078 = vmatprep.subr.mxu0 0.0
  %3079 = vmatpush2.xpose.msra.mxu0 0.0
  %3080 = vmatprep.subr.mxu0 0.0
  %3081 = vmatpush2.xpose.msra.mxu0 0.0
  %3082 = vmatprep.subr.mxu0 0.0
  %3083 = vmatpush2.xpose.msra.mxu0 0.0
  %3084 = vmatprep.subr.mxu0 0.0
  %3085 = vmatpush2.xpose.msra.mxu0 0.0
  %3086 = vmatprep.mubr.f32.mxu0 0.0
  %3087 = vmatmul.mubr.f32.gmra.mxu0 %v3014
  %v3088 = vpop.f32.mrf.mxu0
  %v3089 = vadd.f32 0.0, %v3088
  %v3090 = vpop.f32.mrf.mxu0
  %3091 = vmatprep.mubr.f32.mxu0 0.0
  %3092 = vmatmul.mubr.f32.gmra.mxu0 %v3016
  %v3093 = vpop.f32.mrf.mxu0
  %v3094 = vadd.f32 0.0, %v3093
  %v3095 = vpop.f32.mrf.mxu0
  %3096 = vdwg.mxu0
  %v3097 = vmul.f32 %v2998, 0.35355338
  %v3098 = vmul.f32 %v3003, 0.35355338
  %v3099 = vmul.f32 %v3089, 0.35355338
  %v3100 = vmul.f32 %v3094, 0.35355338
  %v3101 = vsel %vm1598, %v3097, -inf
  %3102 = vmax.xlane.f32.xlu0 %v3101
  %v3103 = vpop.xlane.xlu0 %3102
  %v3104 = vsel %vm1598, %v3098, -inf
  %3105 = vmax.xlane.f32.xlu0 %v3104
  %v3106 = vpop.xlane.xlu0 %3105
  %v3107 = vsel %vm1598, %v3099, -inf
  %3108 = vmax.xlane.f32.xlu0 %v3107
  %v3109 = vpop.xlane.xlu0 %3108
  %v3110 = vsel %vm1598, %v3100, -inf
  %3111 = vmax.xlane.f32.xlu0 %v3110
  %v3112 = vpop.xlane.xlu0 %3111
  %v3113 = vsub.f32 %v3097, %v3103
  %v3114 = vsub.f32 %v3098, %v3106
  %v3115 = vsub.f32 %v3099, %v3109
  %v3116 = vsub.f32 %v3100, %v3112
  %v3117 = vmul.f32 %v3113, 1.442695
  %v3118 = vpow.pop %v3117
  %v3119 = vmul.f32 %v3114, 1.442695
  %v3120 = vpow.pop %v3119
  %v3121 = vmul.f32 %v3115, 1.442695
  %v3122 = vpow.pop %v3121
  %v3123 = vmul.f32 %v3116, 1.442695
  %v3124 = vpow.pop %v3123
  %v3125 = vsel %vm1598, %v3118, 0.0
  %3126 = vadd.xlane.f32.xlu0 %v3125
  %v3127 = vpop.xlane.xlu0 %3126
  %v3128 = vsel %vm1598, %v3120, 0.0
  %3129 = vadd.xlane.f32.xlu0 %v3128
  %v3130 = vpop.xlane.xlu0 %3129
  %v3131 = vsel %vm1598, %v3122, 0.0
  %3132 = vadd.xlane.f32.xlu0 %v3131
  %v3133 = vpop.xlane.xlu0 %3132
  %v3134 = vsel %vm1598, %v3124, 0.0
  %3135 = vadd.xlane.f32.xlu0 %v3134
  %v3136 = vpop.xlane.xlu0 %3135
  %v3137 = vrcp.pop %v3127
  %v3138 = vmul.f32 %v3118, %v3137
  %v3139 = vrcp.pop %v3130
  %v3140 = vmul.f32 %v3120, %v3139
  %v3141 = vrcp.pop %v3133
  %v3142 = vmul.f32 %v3122, %v3141
  %v3143 = vrcp.pop %v3136
  %v3144 = vmul.f32 %v3124, %v3143
  %3145 = vrot.lane.b32.xlu0 %v1401, 104
  %v3146 = vpop.permute.xlu0 %3145
  %3147 = vrot.lane.b32.xlu0 %v1406, 104
  %v3148 = vpop.permute.xlu0 %3147
  %v3152 = vsel %vm1598, %v3138, 0
  %v3155 = vsel %vm1598, %v3140, 0
  %3157 = vmatprep.subr.mxu0 0.0
  %3158 = vmatpush1.msra.mxu0 0.0
  %3159 = vmatprep.subr.mxu0 0.0
  %3160 = vmatpush1.msra.mxu0 0.0
  %3161 = vmatprep.subr.mxu0 0.0
  %3162 = vmatpush1.msra.mxu0 0.0
  %3163 = vmatprep.subr.mxu0 0.0
  %3164 = vmatpush1.msra.mxu0 0.0
  %3165 = vmatprep.subr.mxu0 0.0
  %3166 = vmatpush1.msra.mxu0 0.0
  %3167 = vmatprep.subr.mxu0 0.0
  %3168 = vmatpush1.msra.mxu0 0.0
  %3169 = vmatprep.subr.mxu0 0.0
  %3170 = vmatpush1.msra.mxu0 0.0
  %3171 = vmatprep.subr.mxu0 0.0
  %3172 = vmatpush1.msra.mxu0 0.0
  %3173 = vmatprep.subr.mxu0 0.0
  %3174 = vmatpush1.msra.mxu0 0.0
  %3175 = vmatprep.subr.mxu0 0.0
  %3176 = vmatpush1.msra.mxu0 0.0
  %3177 = vmatprep.subr.mxu0 0.0
  %3178 = vmatpush1.msra.mxu0 0.0
  %3179 = vmatprep.subr.mxu0 0.0
  %3180 = vmatpush1.msra.mxu0 0.0
  %3181 = vmatprep.subr.mxu0 0.0
  %3182 = vmatpush1.msra.mxu0 0.0
  %3183 = vmatprep.subr.mxu0 0.0
  %3184 = vmatpush1.msra.mxu0 0.0
  %3185 = vmatprep.subr.mxu0 0.0
  %3186 = vmatpush1.msra.mxu0 %v3148
  %3187 = vmatprep.subr.mxu0 0.0
  %3188 = vmatpush1.msra.mxu0 %v3146
  %3189 = vmatprep.subr.mxu0 0.0
  %3190 = vmatpush2.msra.mxu0 0.0
  %3191 = vmatprep.subr.mxu0 0.0
  %3192 = vmatpush2.msra.mxu0 0.0
  %3193 = vmatprep.subr.mxu0 0.0
  %3194 = vmatpush2.msra.mxu0 0.0
  %3195 = vmatprep.subr.mxu0 0.0
  %3196 = vmatpush2.msra.mxu0 0.0
  %3197 = vmatprep.subr.mxu0 0.0
  %3198 = vmatpush2.msra.mxu0 0.0
  %3199 = vmatprep.subr.mxu0 0.0
  %3200 = vmatpush2.msra.mxu0 0.0
  %3201 = vmatprep.subr.mxu0 0.0
  %3202 = vmatpush2.msra.mxu0 0.0
  %3203 = vmatprep.subr.mxu0 0.0
  %3204 = vmatpush2.msra.mxu0 0.0
  %3205 = vmatprep.subr.mxu0 0.0
  %3206 = vmatpush2.msra.mxu0 0.0
  %3207 = vmatprep.subr.mxu0 0.0
  %3208 = vmatpush2.msra.mxu0 0.0
  %3209 = vmatprep.subr.mxu0 0.0
  %3210 = vmatpush2.msra.mxu0 0.0
  %3211 = vmatprep.subr.mxu0 0.0
  %3212 = vmatpush2.msra.mxu0 0.0
  %3213 = vmatprep.subr.mxu0 0.0
  %3214 = vmatpush2.msra.mxu0 0.0
  %3215 = vmatprep.subr.mxu0 0.0
  %3216 = vmatpush2.msra.mxu0 0.0
  %3217 = vmatprep.subr.mxu0 0.0
  %3218 = vmatpush2.msra.mxu0 0.0
  %3219 = vmatprep.subr.mxu0 0.0
  %3220 = vmatpush2.msra.mxu0 0.0
  %3221 = vmatprep.mubr.f32.mxu0 0.0
  %3222 = vmatmul.mubr.f32.gmra.mxu0 %v3152
  %v3223 = vpop.f32.mrf.mxu0
  %v3224 = vadd.f32 0.0, %v3223
  %v3225 = vpop.f32.mrf.mxu0
  %3226 = vmatprep.mubr.f32.mxu0 0.0
  %3227 = vmatmul.mubr.f32.gmra.mxu0 %v3155
  %v3228 = vpop.f32.mrf.mxu0
  %v3229 = vadd.f32 0.0, %v3228
  %v3230 = vpop.f32.mrf.mxu0
  %3231 = vdwg.mxu0
  %3232 = vrot.lane.b32.xlu0 %v1411, 104
  %v3233 = vpop.permute.xlu0 %3232
  %3234 = vrot.lane.b32.xlu0 %v1416, 104
  %v3235 = vpop.permute.xlu0 %3234
  %v3239 = vsel %vm1598, %v3142, 0
  %v3242 = vsel %vm1598, %v3144, 0
  %3244 = vmatprep.subr.mxu0 0.0
  %3245 = vmatpush1.msra.mxu0 0.0
  %3246 = vmatprep.subr.mxu0 0.0
  %3247 = vmatpush1.msra.mxu0 0.0
  %3248 = vmatprep.subr.mxu0 0.0
  %3249 = vmatpush1.msra.mxu0 0.0
  %3250 = vmatprep.subr.mxu0 0.0
  %3251 = vmatpush1.msra.mxu0 0.0
  %3252 = vmatprep.subr.mxu0 0.0
  %3253 = vmatpush1.msra.mxu0 0.0
  %3254 = vmatprep.subr.mxu0 0.0
  %3255 = vmatpush1.msra.mxu0 0.0
  %3256 = vmatprep.subr.mxu0 0.0
  %3257 = vmatpush1.msra.mxu0 0.0
  %3258 = vmatprep.subr.mxu0 0.0
  %3259 = vmatpush1.msra.mxu0 0.0
  %3260 = vmatprep.subr.mxu0 0.0
  %3261 = vmatpush1.msra.mxu0 0.0
  %3262 = vmatprep.subr.mxu0 0.0
  %3263 = vmatpush1.msra.mxu0 0.0
  %3264 = vmatprep.subr.mxu0 0.0
  %3265 = vmatpush1.msra.mxu0 0.0
  %3266 = vmatprep.subr.mxu0 0.0
  %3267 = vmatpush1.msra.mxu0 0.0
  %3268 = vmatprep.subr.mxu0 0.0
  %3269 = vmatpush1.msra.mxu0 0.0
  %3270 = vmatprep.subr.mxu0 0.0
  %3271 = vmatpush1.msra.mxu0 0.0
  %3272 = vmatprep.subr.mxu0 0.0
  %3273 = vmatpush1.msra.mxu0 %v3235
  %3274 = vmatprep.subr.mxu0 0.0
  %3275 = vmatpush1.msra.mxu0 %v3233
  %3276 = vmatprep.subr.mxu0 0.0
  %3277 = vmatpush2.msra.mxu0 0.0
  %3278 = vmatprep.subr.mxu0 0.0
  %3279 = vmatpush2.msra.mxu0 0.0
  %3280 = vmatprep.subr.mxu0 0.0
  %3281 = vmatpush2.msra.mxu0 0.0
  %3282 = vmatprep.subr.mxu0 0.0
  %3283 = vmatpush2.msra.mxu0 0.0
  %3284 = vmatprep.subr.mxu0 0.0
  %3285 = vmatpush2.msra.mxu0 0.0
  %3286 = vmatprep.subr.mxu0 0.0
  %3287 = vmatpush2.msra.mxu0 0.0
  %3288 = vmatprep.subr.mxu0 0.0
  %3289 = vmatpush2.msra.mxu0 0.0
  %3290 = vmatprep.subr.mxu0 0.0
  %3291 = vmatpush2.msra.mxu0 0.0
  %3292 = vmatprep.subr.mxu0 0.0
  %3293 = vmatpush2.msra.mxu0 0.0
  %3294 = vmatprep.subr.mxu0 0.0
  %3295 = vmatpush2.msra.mxu0 0.0
  %3296 = vmatprep.subr.mxu0 0.0
  %3297 = vmatpush2.msra.mxu0 0.0
  %3298 = vmatprep.subr.mxu0 0.0
  %3299 = vmatpush2.msra.mxu0 0.0
  %3300 = vmatprep.subr.mxu0 0.0
  %3301 = vmatpush2.msra.mxu0 0.0
  %3302 = vmatprep.subr.mxu0 0.0
  %3303 = vmatpush2.msra.mxu0 0.0
  %3304 = vmatprep.subr.mxu0 0.0
  %3305 = vmatpush2.msra.mxu0 0.0
  %3306 = vmatprep.subr.mxu0 0.0
  %3307 = vmatpush2.msra.mxu0 0.0
  %3308 = vmatprep.mubr.f32.mxu0 0.0
  %3309 = vmatmul.mubr.f32.gmra.mxu0 %v3239
  %v3310 = vpop.f32.mrf.mxu0
  %v3311 = vadd.f32 0.0, %v3310
  %v3312 = vpop.f32.mrf.mxu0
  %3313 = vmatprep.mubr.f32.mxu0 0.0
  %3314 = vmatmul.mubr.f32.gmra.mxu0 %v3242
  %v3315 = vpop.f32.mrf.mxu0
  %v3316 = vadd.f32 0.0, %v3315
  %v3317 = vpop.f32.mrf.mxu0
  %3318 = vdwg.mxu0
  %v3319 = vld [vmem:[%s3 + $0x180] sm:$0xff]
  %v3321 = vsel %vm1419, %v3224, 0
  %v3324 = vsel %vm1419, %v3229, 0
  %v3327 = vsel %vm1419, %v3311, 0
  %v3330 = vsel %vm1419, %v3316, 0
  %3332 = vmatprep.subr.mxu0 0.0
  %3333 = vmatpush1.msra.mxu0 0.0
  %3334 = vmatprep.subr.mxu0 0.0
  %3335 = vmatpush1.msra.mxu0 0.0
  %3336 = vmatprep.subr.mxu0 0.0
  %3337 = vmatpush1.msra.mxu0 0.0
  %3338 = vmatprep.subr.mxu0 0.0
  %3339 = vmatpush1.msra.mxu0 0.0
  %3340 = vmatprep.subr.mxu0 0.0
  %3341 = vmatpush1.msra.mxu0 0.0
  %3342 = vmatprep.subr.mxu0 0.0
  %3343 = vmatpush1.msra.mxu0 0.0
  %3344 = vmatprep.subr.mxu0 0.0
  %3345 = vmatpush1.msra.mxu0 0.0
  %3346 = vmatprep.subr.mxu0 0.0
  %3347 = vmatpush1.msra.mxu0 0.0
  %3348 = vmatprep.subr.mxu0 0.0
  %3349 = vmatpush1.msra.mxu0 0.0
  %3350 = vmatprep.subr.mxu0 0.0
  %3351 = vmatpush1.msra.mxu0 0.0
  %3352 = vmatprep.subr.mxu0 0.0
  %3353 = vmatpush1.msra.mxu0 0.0
  %3354 = vmatprep.subr.mxu0 0.0
  %3355 = vmatpush1.msra.mxu0 0.0
  %3356 = vmatprep.subr.mxu0 0.0
  %3357 = vmatpush1.msra.mxu0 0.0
  %3358 = vmatprep.subr.mxu0 0.0
  %3359 = vmatpush1.msra.mxu0 0.0
  %3360 = vmatprep.subr.mxu0 0.0
  %3361 = vmatpush1.msra.mxu0 0.0
  %3362 = vmatprep.subr.mxu0 0.0
  %3363 = vmatpush1.msra.mxu0 %v3319
  %3364 = vmatprep.subr.mxu0 0.0
  %3365 = vmatpush2.msra.mxu0 0.0
  %3366 = vmatprep.subr.mxu0 0.0
  %3367 = vmatpush2.msra.mxu0 0.0
  %3368 = vmatprep.subr.mxu0 0.0
  %3369 = vmatpush2.msra.mxu0 0.0
  %3370 = vmatprep.subr.mxu0 0.0
  %3371 = vmatpush2.msra.mxu0 0.0
  %3372 = vmatprep.subr.mxu0 0.0
  %3373 = vmatpush2.msra.mxu0 0.0
  %3374 = vmatprep.subr.mxu0 0.0
  %3375 = vmatpush2.msra.mxu0 0.0
  %3376 = vmatprep.subr.mxu0 0.0
  %3377 = vmatpush2.msra.mxu0 0.0
  %3378 = vmatprep.subr.mxu0 0.0
  %3379 = vmatpush2.msra.mxu0 0.0
  %3380 = vmatprep.subr.mxu0 0.0
  %3381 = vmatpush2.msra.mxu0 0.0
  %3382 = vmatprep.subr.mxu0 0.0
  %3383 = vmatpush2.msra.mxu0 0.0
  %3384 = vmatprep.subr.mxu0 0.0
  %3385 = vmatpush2.msra.mxu0 0.0
  %3386 = vmatprep.subr.mxu0 0.0
  %3387 = vmatpush2.msra.mxu0 0.0
  %3388 = vmatprep.subr.mxu0 0.0
  %3389 = vmatpush2.msra.mxu0 0.0
  %3390 = vmatprep.subr.mxu0 0.0
  %3391 = vmatpush2.msra.mxu0 0.0
  %3392 = vmatprep.subr.mxu0 0.0
  %3393 = vmatpush2.msra.mxu0 0.0
  %3394 = vmatprep.subr.mxu0 0.0
  %3395 = vmatpush2.msra.mxu0 0.0
  %3396 = vmatprep.mubr.f32.mxu0 0.0
  %3397 = vmatmul.mubr.f32.gmra.mxu0 %v3321
  %v3398 = vpop.f32.mrf.mxu0
  %v3399 = vadd.f32 0.0, %v3398
  %v3400 = vpop.f32.mrf.mxu0
  %3401 = vmatprep.mubr.f32.mxu0 0.0
  %3402 = vmatmul.mubr.f32.gmra.mxu0 %v3324
  %v3403 = vpop.f32.mrf.mxu0
  %v3404 = vadd.f32 0.0, %v3403
  %v3405 = vpop.f32.mrf.mxu0
  %3406 = vmatprep.mubr.f32.mxu0 0.0
  %3407 = vmatmul.mubr.f32.gmra.mxu0 %v3327
  %v3408 = vpop.f32.mrf.mxu0
  %v3409 = vadd.f32 0.0, %v3408
  %v3410 = vpop.f32.mrf.mxu0
  %3411 = vmatprep.mubr.f32.mxu0 0.0
  %3412 = vmatmul.mubr.f32.gmra.mxu0 %v3330
  %v3413 = vpop.f32.mrf.mxu0
  %v3414 = vadd.f32 0.0, %v3413
  %v3415 = vpop.f32.mrf.mxu0
  %3416 = vdwg.mxu0
  %v3417 = vadd.f32 %v2911, %v3399
  %v3418 = vadd.f32 %v2912, %v3404
  %v3419 = vadd.f32 %v2913, %v3409
  %v3420 = vadd.f32 %v2914, %v3414
  %v3421 = vld [vmem:[%s4 + $0x7] sm:$0x1]
  %v3422 = vlaneseq
  %v3423 = vshrl.u32 %v3422, 7
  %v3424 = vsub.s32 0, %v3423
  %v3425 = vrot.slane %v3421, %v3424
  %v3426 = vadd.f32 %v3417, %v3425
  %v3427 = vadd.f32 %v3418, %v3425
  %v3428 = vadd.f32 %v3419, %v3425
  %v3429 = vadd.f32 %v3420, %v3425
  %v3430 = vadd.f32 %v3426, %v1121
  %v3431 = vadd.f32 %v3427, %v1122
  %v3432 = vadd.f32 %v3428, %v1123
  %v3433 = vadd.f32 %v3429, %v1124
  %v3434 = vsel %vm633, %v3430, 0.0
  %3435 = vadd.xlane.f32.xlu0 %v3434
  %v3436 = vpop.xlane.xlu0 %3435
  %v3437 = vsel %vm633, %v3431, 0.0
  %3438 = vadd.xlane.f32.xlu0 %v3437
  %v3439 = vpop.xlane.xlu0 %3438
  %v3440 = vsel %vm633, %v3432, 0.0
  %3441 = vadd.xlane.f32.xlu0 %v3440
  %v3442 = vpop.xlane.xlu0 %3441
  %v3443 = vsel %vm633, %v3433, 0.0
  %3444 = vadd.xlane.f32.xlu0 %v3443
  %v3445 = vpop.xlane.xlu0 %3444
  %v3446 = vmul.f32 %v3436, %v756
  %v3447 = vmul.f32 %v3439, %v756
  %v3448 = vmul.f32 %v3442, %v756
  %v3449 = vmul.f32 %v3445, %v756
  %v3450 = vmul.f32 %v3430, %v3430
  %v3451 = vmul.f32 %v3431, %v3431
  %v3452 = vmul.f32 %v3432, %v3432
  %v3453 = vmul.f32 %v3433, %v3433
  %v3454 = vsel %vm633, %v3450, 0.0
  %3455 = vadd.xlane.f32.xlu0 %v3454
  %v3456 = vpop.xlane.xlu0 %3455
  %v3457 = vsel %vm633, %v3451, 0.0
  %3458 = vadd.xlane.f32.xlu0 %v3457
  %v3459 = vpop.xlane.xlu0 %3458
  %v3460 = vsel %vm633, %v3452, 0.0
  %3461 = vadd.xlane.f32.xlu0 %v3460
  %v3462 = vpop.xlane.xlu0 %3461
  %v3463 = vsel %vm633, %v3453, 0.0
  %3464 = vadd.xlane.f32.xlu0 %v3463
  %v3465 = vpop.xlane.xlu0 %3464
  %v3466 = vmul.f32 %v3456, %v756
  %v3467 = vmul.f32 %v3459, %v756
  %v3468 = vmul.f32 %v3462, %v756
  %v3469 = vmul.f32 %v3465, %v756
  %v3470 = vmul.f32 %v3446, %v3446
  %v3471 = vmul.f32 %v3447, %v3447
  %v3472 = vmul.f32 %v3448, %v3448
  %v3473 = vmul.f32 %v3449, %v3449
  %v3474 = vsub.f32 %v3466, %v3470
  %v3475 = vsub.f32 %v3467, %v3471
  %v3476 = vsub.f32 %v3468, %v3472
  %v3477 = vsub.f32 %v3469, %v3473
  %v3478 = vadd.f32 %v3474, 1e-05
  %v3479 = vadd.f32 %v3475, 1e-05
  %v3480 = vadd.f32 %v3476, 1e-05
  %v3481 = vadd.f32 %v3477, 1e-05
  %v3482 = vrsqrt.pop %v3478
  %v3483 = vrsqrt.pop %v3479
  %v3484 = vrsqrt.pop %v3480
  %v3485 = vrsqrt.pop %v3481
  %v3486 = vsub.f32 %v3430, %v3446
  %v3487 = vsub.f32 %v3431, %v3447
  %v3488 = vsub.f32 %v3432, %v3448
  %v3489 = vsub.f32 %v3433, %v3449
  %v3490 = vmul.f32 %v3486, %v3482
  %v3491 = vmul.f32 %v3487, %v3483
  %v3492 = vmul.f32 %v3488, %v3484
  %v3493 = vmul.f32 %v3489, %v3485
  %v3494 = vld [vmem:[%s4 + $0x8] sm:$0x1]
  %v3495 = vlaneseq
  %v3496 = vshrl.u32 %v3495, 7
  %v3497 = vsub.s32 0, %v3496
  %v3498 = vrot.slane %v3494, %v3497
  %v3499 = vmul.f32 %v3490, %v3498
  %v3500 = vmul.f32 %v3491, %v3498
  %v3501 = vmul.f32 %v3492, %v3498
  %v3502 = vmul.f32 %v3493, %v3498
  %v3503 = vld [vmem:[%s4 + $0x9] sm:$0x1]
  %v3504 = vlaneseq
  %v3505 = vshrl.u32 %v3504, 7
  %v3506 = vsub.s32 0, %v3505
  %v3507 = vrot.slane %v3503, %v3506
  %v3508 = vadd.f32 %v3499, %v3507
  %v3509 = vadd.f32 %v3500, %v3507
  %v3510 = vadd.f32 %v3501, %v3507
  %v3511 = vadd.f32 %v3502, %v3507
  %v3512 = vld [vmem:[%s3 + $0x68] sm:$0xff]
  %v3513 = vld [vmem:[%s3 + $0x70] sm:$0xff]
  %v3514 = vld [vmem:[%s3 + $0x78] sm:$0xff]
  %v3515 = vld [vmem:[%s3 + $0x80] sm:$0xff]
  %v3516 = vld [vmem:[%s4 + $0x11] sm:$0x1]
  %v3517 = vlaneseq
  %v3518 = vshrl.u32 %v3517, 7
  %v3519 = vsub.s32 0, %v3518
  %v3520 = vrot.slane %v3516, %v3519
  %3521 = vmatprep.subr.mxu0 0.0
  %3522 = vmatpush1.msra.mxu0 0.0
  %3523 = vmatprep.subr.mxu0 0.0
  %3524 = vmatpush1.msra.mxu0 0.0
  %3525 = vmatprep.subr.mxu0 0.0
  %3526 = vmatpush1.msra.mxu0 0.0
  %3527 = vmatprep.subr.mxu0 0.0
  %3528 = vmatpush1.msra.mxu0 0.0
  %3529 = vmatprep.subr.mxu0 0.0
  %3530 = vmatpush1.msra.mxu0 0.0
  %3531 = vmatprep.subr.mxu0 0.0
  %3532 = vmatpush1.msra.mxu0 0.0
  %3533 = vmatprep.subr.mxu0 0.0
  %3534 = vmatpush1.msra.mxu0 0.0
  %3535 = vmatprep.subr.mxu0 0.0
  %3536 = vmatpush1.msra.mxu0 0.0
  %3537 = vmatprep.subr.mxu0 0.0
  %3538 = vmatpush1.msra.mxu0 0.0
  %3539 = vmatprep.subr.mxu0 0.0
  %3540 = vmatpush1.msra.mxu0 0.0
  %3541 = vmatprep.subr.mxu0 0.0
  %3542 = vmatpush1.msra.mxu0 0.0
  %3543 = vmatprep.subr.mxu0 0.0
  %3544 = vmatpush1.msra.mxu0 0.0
  %3545 = vmatprep.subr.mxu0 0.0
  %3546 = vmatpush1.msra.mxu0 %v3515
  %3547 = vmatprep.subr.mxu0 0.0
  %3548 = vmatpush1.msra.mxu0 %v3514
  %3549 = vmatprep.subr.mxu0 0.0
  %3550 = vmatpush1.msra.mxu0 %v3513
  %3551 = vmatprep.subr.mxu0 0.0
  %3552 = vmatpush1.msra.mxu0 %v3512
  %3553 = vmatprep.subr.mxu0 0.0
  %3554 = vmatpush2.msra.mxu0 0.0
  %3555 = vmatprep.subr.mxu0 0.0
  %3556 = vmatpush2.msra.mxu0 0.0
  %3557 = vmatprep.subr.mxu0 0.0
  %3558 = vmatpush2.msra.mxu0 0.0
  %3559 = vmatprep.subr.mxu0 0.0
  %3560 = vmatpush2.msra.mxu0 0.0
  %3561 = vmatprep.subr.mxu0 0.0
  %3562 = vmatpush2.msra.mxu0 0.0
  %3563 = vmatprep.subr.mxu0 0.0
  %3564 = vmatpush2.msra.mxu0 0.0
  %3565 = vmatprep.subr.mxu0 0.0
  %3566 = vmatpush2.msra.mxu0 0.0
  %3567 = vmatprep.subr.mxu0 0.0
  %3568 = vmatpush2.msra.mxu0 0.0
  %3569 = vmatprep.subr.mxu0 0.0
  %3570 = vmatpush2.msra.mxu0 0.0
  %3571 = vmatprep.subr.mxu0 0.0
  %3572 = vmatpush2.msra.mxu0 0.0
  %3573 = vmatprep.subr.mxu0 0.0
  %3574 = vmatpush2.msra.mxu0 0.0
  %3575 = vmatprep.subr.mxu0 0.0
  %3576 = vmatpush2.msra.mxu0 0.0
  %3577 = vmatprep.subr.mxu0 0.0
  %3578 = vmatpush2.msra.mxu0 0.0
  %3579 = vmatprep.subr.mxu0 0.0
  %3580 = vmatpush2.msra.mxu0 0.0
  %3581 = vmatprep.subr.mxu0 0.0
  %3582 = vmatpush2.msra.mxu0 0.0
  %3583 = vmatprep.subr.mxu0 0.0
  %3584 = vmatpush2.msra.mxu0 0.0
  %3585 = vmatprep.mubr.f32.mxu0 0.0
  %3586 = vmatmul.mubr.f32.gmra.mxu0 %v635
  %v3587 = vpop.f32.mrf.mxu0
  %v3588 = vadd.f32 %v3520, %v3587
  %v3589 = vpop.f32.mrf.mxu0
  %3590 = vdwg.mxu0
  %v3593 = vunpack.c.l.s4 1966171168
  %v3594 = vunpack.c.0.s8 %v3593
  %v3595 = vlaneseq
  %v3596 = vshrl.u32 %v3595, 7
  %v3597 = vsub.s32 %v3594, %v3596
  %v3598 = vrot.slane %v3588, %v3597
  %v3599 = vcombine.high %v3598, %v3598
  %v3601 = vunpack.c.l.s4 1966171168
  %v3602 = vunpack.c.0.s8 %v3601
  %v3603 = vlaneseq
  %v3604 = vshrl.u32 %v3603, 7
  %v3605 = vsub.s32 %v3602, %v3604
  %v3606 = vrot.slane %v3598, %v3605
  %v3608 = vunpack.c.l.s4 1966171168
  %v3609 = vunpack.c.0.s8 %v3608
  %v3610 = vlaneseq
  %v3611 = vshrl.u32 %v3610, 7
  %v3612 = vsub.s32 %v3609, %v3611
  %v3613 = vrot.slane %v3599, %v3612
  %v3614 = vlaneseq
  %v3615 = vshrl.u32 %v3614, 7
  %v3616 = vsub.s32 0, %v3615
  %v3617 = vrot.slane %v3606, %v3616
  %v3618 = vlaneseq
  %v3619 = vshrl.u32 %v3618, 7
  %v3620 = vsub.s32 0, %v3619
  %v3621 = vrot.slane %v3613, %v3620
  %v3624 = vadd.f32 %v3617, %v3508
  %v3625 = vadd.f32 %v3617, %v3509
  %v3626 = vadd.f32 %v3621, %v3510
  %v3627 = vadd.f32 %v3621, %v3511
  %v3628 = vsel %vm633, %v3624, 0.0
  %3629 = vadd.xlane.f32.xlu0 %v3628
  %v3630 = vpop.xlane.xlu0 %3629
  %v3631 = vsel %vm633, %v3625, 0.0
  %3632 = vadd.xlane.f32.xlu0 %v3631
  %v3633 = vpop.xlane.xlu0 %3632
  %v3634 = vsel %vm633, %v3626, 0.0
  %3635 = vadd.xlane.f32.xlu0 %v3634
  %v3636 = vpop.xlane.xlu0 %3635
  %v3637 = vsel %vm633, %v3627, 0.0
  %3638 = vadd.xlane.f32.xlu0 %v3637
  %v3639 = vpop.xlane.xlu0 %3638
  %v3640 = vmul.f32 %v3630, %v756
  %v3641 = vmul.f32 %v3633, %v756
  %v3642 = vmul.f32 %v3636, %v756
  %v3643 = vmul.f32 %v3639, %v756
  %v3644 = vmul.f32 %v3624, %v3624
  %v3645 = vmul.f32 %v3625, %v3625
  %v3646 = vmul.f32 %v3626, %v3626
  %v3647 = vmul.f32 %v3627, %v3627
  %v3648 = vsel %vm633, %v3644, 0.0
  %3649 = vadd.xlane.f32.xlu0 %v3648
  %v3650 = vpop.xlane.xlu0 %3649
  %v3651 = vsel %vm633, %v3645, 0.0
  %3652 = vadd.xlane.f32.xlu0 %v3651
  %v3653 = vpop.xlane.xlu0 %3652
  %v3654 = vsel %vm633, %v3646, 0.0
  %3655 = vadd.xlane.f32.xlu0 %v3654
  %v3656 = vpop.xlane.xlu0 %3655
  %v3657 = vsel %vm633, %v3647, 0.0
  %3658 = vadd.xlane.f32.xlu0 %v3657
  %v3659 = vpop.xlane.xlu0 %3658
  %v3660 = vmul.f32 %v3650, %v756
  %v3661 = vmul.f32 %v3653, %v756
  %v3662 = vmul.f32 %v3656, %v756
  %v3663 = vmul.f32 %v3659, %v756
  %v3664 = vmul.f32 %v3640, %v3640
  %v3665 = vmul.f32 %v3641, %v3641
  %v3666 = vmul.f32 %v3642, %v3642
  %v3667 = vmul.f32 %v3643, %v3643
  %v3668 = vsub.f32 %v3660, %v3664
  %v3669 = vsub.f32 %v3661, %v3665
  %v3670 = vsub.f32 %v3662, %v3666
  %v3671 = vsub.f32 %v3663, %v3667
  %v3672 = vadd.f32 %v3668, 1e-05
  %v3673 = vadd.f32 %v3669, 1e-05
  %v3674 = vadd.f32 %v3670, 1e-05
  %v3675 = vadd.f32 %v3671, 1e-05
  %v3676 = vrsqrt.pop %v3672
  %v3677 = vrsqrt.pop %v3673
  %v3678 = vrsqrt.pop %v3674
  %v3679 = vrsqrt.pop %v3675
  %v3680 = vsub.f32 %v3624, %v3640
  %v3681 = vsub.f32 %v3625, %v3641
  %v3682 = vsub.f32 %v3626, %v3642
  %v3683 = vsub.f32 %v3627, %v3643
  %v3684 = vmul.f32 %v3680, %v3676
  %v3685 = vmul.f32 %v3681, %v3677
  %v3686 = vmul.f32 %v3682, %v3678
  %v3687 = vmul.f32 %v3683, %v3679
  %v3688 = vld [vmem:[%s4 + $0x14] sm:$0x1]
  %v3689 = vlaneseq
  %v3690 = vshrl.u32 %v3689, 7
  %v3691 = vsub.s32 0, %v3690
  %v3692 = vrot.slane %v3688, %v3691
  %v3693 = vmul.f32 %v3684, %v3692
  %v3694 = vmul.f32 %v3685, %v3692
  %v3695 = vmul.f32 %v3686, %v3692
  %v3696 = vmul.f32 %v3687, %v3692
  %v3697 = vld [vmem:[%s4 + $0x15] sm:$0x1]
  %v3698 = vlaneseq
  %v3699 = vshrl.u32 %v3698, 7
  %v3700 = vsub.s32 0, %v3699
  %v3701 = vrot.slane %v3697, %v3700
  %v3702 = vadd.f32 %v3693, %v3701
  %v3703 = vadd.f32 %v3694, %v3701
  %v3704 = vadd.f32 %v3695, %v3701
  %v3705 = vadd.f32 %v3696, %v3701
  %v3706 = vld [vmem:[%s2 + $0x360] sm:$0xff]
  %v3707 = vld [vmem:[%s2 + $0x368] sm:$0xff]
  %v3708 = vld [vmem:[%s2 + $0x370] sm:$0xff]
  %v3709 = vld [vmem:[%s2 + $0x378] sm:$0xff]
  %v3710 = vld [vmem:[%s4 + $0x12] sm:$0x1]
  %v3711 = vlaneseq
  %v3712 = vshrl.u32 %v3711, 7
  %v3713 = vsub.s32 0, %v3712
  %v3714 = vrot.slane %v3710, %v3713
  %v3716 = vsel %vm633, %v3702, 0
  %v3719 = vsel %vm633, %v3703, 0
  %v3722 = vsel %vm633, %v3704, 0
  %v3725 = vsel %vm633, %v3705, 0
  %3727 = vmatprep.subr.mxu0 0.0
  %3728 = vmatpush1.msra.mxu0 0.0
  %3729 = vmatprep.subr.mxu0 0.0
  %3730 = vmatpush1.msra.mxu0 0.0
  %3731 = vmatprep.subr.mxu0 0.0
  %3732 = vmatpush1.msra.mxu0 0.0
  %3733 = vmatprep.subr.mxu0 0.0
  %3734 = vmatpush1.msra.mxu0 0.0
  %3735 = vmatprep.subr.mxu0 0.0
  %3736 = vmatpush1.msra.mxu0 0.0
  %3737 = vmatprep.subr.mxu0 0.0
  %3738 = vmatpush1.msra.mxu0 0.0
  %3739 = vmatprep.subr.mxu0 0.0
  %3740 = vmatpush1.msra.mxu0 0.0
  %3741 = vmatprep.subr.mxu0 0.0
  %3742 = vmatpush1.msra.mxu0 0.0
  %3743 = vmatprep.subr.mxu0 0.0
  %3744 = vmatpush1.msra.mxu0 0.0
  %3745 = vmatprep.subr.mxu0 0.0
  %3746 = vmatpush1.msra.mxu0 0.0
  %3747 = vmatprep.subr.mxu0 0.0
  %3748 = vmatpush1.msra.mxu0 0.0
  %3749 = vmatprep.subr.mxu0 0.0
  %3750 = vmatpush1.msra.mxu0 0.0
  %3751 = vmatprep.subr.mxu0 0.0
  %3752 = vmatpush1.msra.mxu0 %v3709
  %3753 = vmatprep.subr.mxu0 0.0
  %3754 = vmatpush1.msra.mxu0 %v3708
  %3755 = vmatprep.subr.mxu0 0.0
  %3756 = vmatpush1.msra.mxu0 %v3707
  %3757 = vmatprep.subr.mxu0 0.0
  %3758 = vmatpush1.msra.mxu0 %v3706
  %3759 = vmatprep.subr.mxu0 0.0
  %3760 = vmatpush2.msra.mxu0 0.0
  %3761 = vmatprep.subr.mxu0 0.0
  %3762 = vmatpush2.msra.mxu0 0.0
  %3763 = vmatprep.subr.mxu0 0.0
  %3764 = vmatpush2.msra.mxu0 0.0
  %3765 = vmatprep.subr.mxu0 0.0
  %3766 = vmatpush2.msra.mxu0 0.0
  %3767 = vmatprep.subr.mxu0 0.0
  %3768 = vmatpush2.msra.mxu0 0.0
  %3769 = vmatprep.subr.mxu0 0.0
  %3770 = vmatpush2.msra.mxu0 0.0
  %3771 = vmatprep.subr.mxu0 0.0
  %3772 = vmatpush2.msra.mxu0 0.0
  %3773 = vmatprep.subr.mxu0 0.0
  %3774 = vmatpush2.msra.mxu0 0.0
  %3775 = vmatprep.subr.mxu0 0.0
  %3776 = vmatpush2.msra.mxu0 0.0
  %3777 = vmatprep.subr.mxu0 0.0
  %3778 = vmatpush2.msra.mxu0 0.0
  %3779 = vmatprep.subr.mxu0 0.0
  %3780 = vmatpush2.msra.mxu0 0.0
  %3781 = vmatprep.subr.mxu0 0.0
  %3782 = vmatpush2.msra.mxu0 0.0
  %3783 = vmatprep.subr.mxu0 0.0
  %3784 = vmatpush2.msra.mxu0 0.0
  %3785 = vmatprep.subr.mxu0 0.0
  %3786 = vmatpush2.msra.mxu0 0.0
  %3787 = vmatprep.subr.mxu0 0.0
  %3788 = vmatpush2.msra.mxu0 0.0
  %3789 = vmatprep.subr.mxu0 0.0
  %3790 = vmatpush2.msra.mxu0 0.0
  %3791 = vmatprep.mubr.f32.mxu0 0.0
  %3792 = vmatmul.mubr.f32.gmra.mxu0 %v3716
  %v3793 = vpop.f32.mrf.mxu0
  %v3794 = vadd.f32 %v3714, %v3793
  %v3795 = vpop.f32.mrf.mxu0
  %3796 = vmatprep.mubr.f32.mxu0 0.0
  %3797 = vmatmul.mubr.f32.gmra.mxu0 %v3719
  %v3798 = vpop.f32.mrf.mxu0
  %v3799 = vadd.f32 %v3714, %v3798
  %v3800 = vpop.f32.mrf.mxu0
  %3801 = vmatprep.mubr.f32.mxu0 0.0
  %3802 = vmatmul.mubr.f32.gmra.mxu0 %v3722
  %v3803 = vpop.f32.mrf.mxu0
  %v3804 = vadd.f32 %v3714, %v3803
  %v3805 = vpop.f32.mrf.mxu0
  %3806 = vmatprep.mubr.f32.mxu0 0.0
  %3807 = vmatmul.mubr.f32.gmra.mxu0 %v3725
  %v3808 = vpop.f32.mrf.mxu0
  %v3809 = vadd.f32 %v3714, %v3808
  %v3810 = vpop.f32.mrf.mxu0
  %3811 = vdwg.mxu0
  %v3812 = vmax.f32 %v3794, 0.0
  %v3813 = vmax.f32 %v3799, 0.0
  %v3814 = vmax.f32 %v3804, 0.0
  %v3815 = vmax.f32 %v3809, 0.0
  %v3816 = vld [vmem:[%s3 + $0xc8] sm:$0xff]
  %v3817 = vld [vmem:[%s3 + $0xd0] sm:$0xff]
  %v3818 = vld [vmem:[%s3 + $0xd8] sm:$0xff]
  %v3819 = vld [vmem:[%s3 + $0xe0] sm:$0xff]
  %v3820 = vld [vmem:[%s3 + $0xe8] sm:$0xff]
  %v3821 = vld [vmem:[%s3 + $0xf0] sm:$0xff]
  %v3822 = vld [vmem:[%s3 + $0xf8] sm:$0xff]
  %v3823 = vld [vmem:[%s3 + $0x100] sm:$0xff]
  %v3824 = vld [vmem:[%s4 + $0x13] sm:$0x1]
  %v3825 = vlaneseq
  %v3826 = vshrl.u32 %v3825, 7
  %v3827 = vsub.s32 0, %v3826
  %v3828 = vrot.slane %v3824, %v3827
  %v3830 = vsel %vm380, %v3812, 0
  %v3833 = vsel %vm380, %v3813, 0
  %v3836 = vsel %vm380, %v3814, 0
  %v3839 = vsel %vm380, %v3815, 0
  %3841 = vmatprep.subr.mxu0 0.0
  %3842 = vmatpush1.msra.mxu0 0.0
  %3843 = vmatprep.subr.mxu0 0.0
  %3844 = vmatpush1.msra.mxu0 0.0
  %3845 = vmatprep.subr.mxu0 0.0
  %3846 = vmatpush1.msra.mxu0 0.0
  %3847 = vmatprep.subr.mxu0 0.0
  %3848 = vmatpush1.msra.mxu0 0.0
  %3849 = vmatprep.subr.mxu0 0.0
  %3850 = vmatpush1.msra.mxu0 0.0
  %3851 = vmatprep.subr.mxu0 0.0
  %3852 = vmatpush1.msra.mxu0 0.0
  %3853 = vmatprep.subr.mxu0 0.0
  %3854 = vmatpush1.msra.mxu0 0.0
  %3855 = vmatprep.subr.mxu0 0.0
  %3856 = vmatpush1.msra.mxu0 0.0
  %3857 = vmatprep.subr.mxu0 0.0
  %3858 = vmatpush1.msra.mxu0 %v3823
  %3859 = vmatprep.subr.mxu0 0.0
  %3860 = vmatpush1.msra.mxu0 %v3822
  %3861 = vmatprep.subr.mxu0 0.0
  %3862 = vmatpush1.msra.mxu0 %v3821
  %3863 = vmatprep.subr.mxu0 0.0
  %3864 = vmatpush1.msra.mxu0 %v3820
  %3865 = vmatprep.subr.mxu0 0.0
  %3866 = vmatpush1.msra.mxu0 %v3819
  %3867 = vmatprep.subr.mxu0 0.0
  %3868 = vmatpush1.msra.mxu0 %v3818
  %3869 = vmatprep.subr.mxu0 0.0
  %3870 = vmatpush1.msra.mxu0 %v3817
  %3871 = vmatprep.subr.mxu0 0.0
  %3872 = vmatpush1.msra.mxu0 %v3816
  %3873 = vmatprep.subr.mxu0 0.0
  %3874 = vmatpush2.msra.mxu0 0.0
  %3875 = vmatprep.subr.mxu0 0.0
  %3876 = vmatpush2.msra.mxu0 0.0
  %3877 = vmatprep.subr.mxu0 0.0
  %3878 = vmatpush2.msra.mxu0 0.0
  %3879 = vmatprep.subr.mxu0 0.0
  %3880 = vmatpush2.msra.mxu0 0.0
  %3881 = vmatprep.subr.mxu0 0.0
  %3882 = vmatpush2.msra.mxu0 0.0
  %3883 = vmatprep.subr.mxu0 0.0
  %3884 = vmatpush2.msra.mxu0 0.0
  %3885 = vmatprep.subr.mxu0 0.0
  %3886 = vmatpush2.msra.mxu0 0.0
  %3887 = vmatprep.subr.mxu0 0.0
  %3888 = vmatpush2.msra.mxu0 0.0
  %3889 = vmatprep.subr.mxu0 0.0
  %3890 = vmatpush2.msra.mxu0 0.0
  %3891 = vmatprep.subr.mxu0 0.0
  %3892 = vmatpush2.msra.mxu0 0.0
  %3893 = vmatprep.subr.mxu0 0.0
  %3894 = vmatpush2.msra.mxu0 0.0
  %3895 = vmatprep.subr.mxu0 0.0
  %3896 = vmatpush2.msra.mxu0 0.0
  %3897 = vmatprep.subr.mxu0 0.0
  %3898 = vmatpush2.msra.mxu0 0.0
  %3899 = vmatprep.subr.mxu0 0.0
  %3900 = vmatpush2.msra.mxu0 0.0
  %3901 = vmatprep.subr.mxu0 0.0
  %3902 = vmatpush2.msra.mxu0 0.0
  %3903 = vmatprep.subr.mxu0 0.0
  %3904 = vmatpush2.msra.mxu0 0.0
  %3905 = vmatprep.mubr.f32.mxu0 0.0
  %3906 = vmatmul.mubr.f32.gmra.mxu0 %v3830
  %v3907 = vpop.f32.mrf.mxu0
  %v3908 = vadd.f32 %v3828, %v3907
  %v3909 = vpop.f32.mrf.mxu0
  %3910 = vmatprep.mubr.f32.mxu0 0.0
  %3911 = vmatmul.mubr.f32.gmra.mxu0 %v3833
  %v3912 = vpop.f32.mrf.mxu0
  %v3913 = vadd.f32 %v3828, %v3912
  %v3914 = vpop.f32.mrf.mxu0
  %3915 = vmatprep.mubr.f32.mxu0 0.0
  %3916 = vmatmul.mubr.f32.gmra.mxu0 %v3836
  %v3917 = vpop.f32.mrf.mxu0
  %v3918 = vadd.f32 %v3828, %v3917
  %v3919 = vpop.f32.mrf.mxu0
  %3920 = vmatprep.mubr.f32.mxu0 0.0
  %3921 = vmatmul.mubr.f32.gmra.mxu0 %v3839
  %v3922 = vpop.f32.mrf.mxu0
  %v3923 = vadd.f32 %v3828, %v3922
  %v3924 = vpop.f32.mrf.mxu0
  %3925 = vdwg.mxu0
  %v3926 = vadd.f32 %v3908, %v3702
  %v3927 = vadd.f32 %v3913, %v3703
  %v3928 = vadd.f32 %v3918, %v3704
  %v3929 = vadd.f32 %v3923, %v3705
  %v3930 = vsel %vm633, %v3926, 0.0
  %3931 = vadd.xlane.f32.xlu0 %v3930
  %v3932 = vpop.xlane.xlu0 %3931
  %v3933 = vsel %vm633, %v3927, 0.0
  %3934 = vadd.xlane.f32.xlu0 %v3933
  %v3935 = vpop.xlane.xlu0 %3934
  %v3936 = vsel %vm633, %v3928, 0.0
  %3937 = vadd.xlane.f32.xlu0 %v3936
  %v3938 = vpop.xlane.xlu0 %3937
  %v3939 = vsel %vm633, %v3929, 0.0
  %3940 = vadd.xlane.f32.xlu0 %v3939
  %v3941 = vpop.xlane.xlu0 %3940
  %v3942 = vmul.f32 %v3932, %v756
  %v3943 = vmul.f32 %v3935, %v756
  %v3944 = vmul.f32 %v3938, %v756
  %v3945 = vmul.f32 %v3941, %v756
  %v3946 = vmul.f32 %v3926, %v3926
  %v3947 = vmul.f32 %v3927, %v3927
  %v3948 = vmul.f32 %v3928, %v3928
  %v3949 = vmul.f32 %v3929, %v3929
  %v3950 = vsel %vm633, %v3946, 0.0
  %3951 = vadd.xlane.f32.xlu0 %v3950
  %v3952 = vpop.xlane.xlu0 %3951
  %v3953 = vsel %vm633, %v3947, 0.0
  %3954 = vadd.xlane.f32.xlu0 %v3953
  %v3955 = vpop.xlane.xlu0 %3954
  %v3956 = vsel %vm633, %v3948, 0.0
  %3957 = vadd.xlane.f32.xlu0 %v3956
  %v3958 = vpop.xlane.xlu0 %3957
  %v3959 = vsel %vm633, %v3949, 0.0
  %3960 = vadd.xlane.f32.xlu0 %v3959
  %v3961 = vpop.xlane.xlu0 %3960
  %v3962 = vmul.f32 %v3952, %v756
  %v3963 = vmul.f32 %v3955, %v756
  %v3964 = vmul.f32 %v3958, %v756
  %v3965 = vmul.f32 %v3961, %v756
  %v3966 = vmul.f32 %v3942, %v3942
  %v3967 = vmul.f32 %v3943, %v3943
  %v3968 = vmul.f32 %v3944, %v3944
  %v3969 = vmul.f32 %v3945, %v3945
  %v3970 = vsub.f32 %v3962, %v3966
  %v3971 = vsub.f32 %v3963, %v3967
  %v3972 = vsub.f32 %v3964, %v3968
  %v3973 = vsub.f32 %v3965, %v3969
  %v3974 = vadd.f32 %v3970, 1e-05
  %v3975 = vadd.f32 %v3971, 1e-05
  %v3976 = vadd.f32 %v3972, 1e-05
  %v3977 = vadd.f32 %v3973, 1e-05
  %v3978 = vrsqrt.pop %v3974
  %v3979 = vrsqrt.pop %v3975
  %v3980 = vrsqrt.pop %v3976
  %v3981 = vrsqrt.pop %v3977
  %v3982 = vsub.f32 %v3926, %v3942
  %v3983 = vsub.f32 %v3927, %v3943
  %v3984 = vsub.f32 %v3928, %v3944
  %v3985 = vsub.f32 %v3929, %v3945
  %v3986 = vmul.f32 %v3982, %v3978
  %v3987 = vmul.f32 %v3983, %v3979
  %v3988 = vmul.f32 %v3984, %v3980
  %v3989 = vmul.f32 %v3985, %v3981
  %v3990 = vld [vmem:[%s4 + $0x16] sm:$0x1]
  %v3991 = vlaneseq
  %v3992 = vshrl.u32 %v3991, 7
  %v3993 = vsub.s32 0, %v3992
  %v3994 = vrot.slane %v3990, %v3993
  %v3995 = vmul.f32 %v3986, %v3994
  %v3996 = vmul.f32 %v3987, %v3994
  %v3997 = vmul.f32 %v3988, %v3994
  %v3998 = vmul.f32 %v3989, %v3994
  %v3999 = vld [vmem:[%s4 + $0x17] sm:$0x1]
  %v4000 = vlaneseq
  %v4001 = vshrl.u32 %v4000, 7
  %v4002 = vsub.s32 0, %v4001
  %v4003 = vrot.slane %v3999, %v4002
  %v4004 = vadd.f32 %v3995, %v4003
  %v4005 = vadd.f32 %v3996, %v4003
  %v4006 = vadd.f32 %v3997, %v4003
  %v4007 = vadd.f32 %v3998, %v4003
  %v4008 = vld [vmem:[%s2 + $0x380] sm:$0xff]
  %v4009 = vld [vmem:[%s2 + $0x388] sm:$0xff]
  %v4010 = vld [vmem:[%s2 + $0x390] sm:$0xff]
  %v4011 = vld [vmem:[%s2 + $0x398] sm:$0xff]
  %v4013 = vsel %vm633, %v4004, 0
  %v4016 = vsel %vm633, %v4005, 0
  %v4019 = vsel %vm633, %v4006, 0
  %v4022 = vsel %vm633, %v4007, 0
  %4024 = vmatprep.subr.mxu0 0.0
  %4025 = vmatpush1.msra.mxu0 0.0
  %4026 = vmatprep.subr.mxu0 0.0
  %4027 = vmatpush1.msra.mxu0 0.0
  %4028 = vmatprep.subr.mxu0 0.0
  %4029 = vmatpush1.msra.mxu0 0.0
  %4030 = vmatprep.subr.mxu0 0.0
  %4031 = vmatpush1.msra.mxu0 0.0
  %4032 = vmatprep.subr.mxu0 0.0
  %4033 = vmatpush1.msra.mxu0 0.0
  %4034 = vmatprep.subr.mxu0 0.0
  %4035 = vmatpush1.msra.mxu0 0.0
  %4036 = vmatprep.subr.mxu0 0.0
  %4037 = vmatpush1.msra.mxu0 0.0
  %4038 = vmatprep.subr.mxu0 0.0
  %4039 = vmatpush1.msra.mxu0 0.0
  %4040 = vmatprep.subr.mxu0 0.0
  %4041 = vmatpush1.msra.mxu0 0.0
  %4042 = vmatprep.subr.mxu0 0.0
  %4043 = vmatpush1.msra.mxu0 0.0
  %4044 = vmatprep.subr.mxu0 0.0
  %4045 = vmatpush1.msra.mxu0 0.0
  %4046 = vmatprep.subr.mxu0 0.0
  %4047 = vmatpush1.msra.mxu0 0.0
  %4048 = vmatprep.subr.mxu0 0.0
  %4049 = vmatpush1.msra.mxu0 %v4011
  %4050 = vmatprep.subr.mxu0 0.0
  %4051 = vmatpush1.msra.mxu0 %v4010
  %4052 = vmatprep.subr.mxu0 0.0
  %4053 = vmatpush1.msra.mxu0 %v4009
  %4054 = vmatprep.subr.mxu0 0.0
  %4055 = vmatpush1.msra.mxu0 %v4008
  %4056 = vmatprep.subr.mxu0 0.0
  %4057 = vmatpush2.msra.mxu0 0.0
  %4058 = vmatprep.subr.mxu0 0.0
  %4059 = vmatpush2.msra.mxu0 0.0
  %4060 = vmatprep.subr.mxu0 0.0
  %4061 = vmatpush2.msra.mxu0 0.0
  %4062 = vmatprep.subr.mxu0 0.0
  %4063 = vmatpush2.msra.mxu0 0.0
  %4064 = vmatprep.subr.mxu0 0.0
  %4065 = vmatpush2.msra.mxu0 0.0
  %4066 = vmatprep.subr.mxu0 0.0
  %4067 = vmatpush2.msra.mxu0 0.0
  %4068 = vmatprep.subr.mxu0 0.0
  %4069 = vmatpush2.msra.mxu0 0.0
  %4070 = vmatprep.subr.mxu0 0.0
  %4071 = vmatpush2.msra.mxu0 0.0
  %4072 = vmatprep.subr.mxu0 0.0
  %4073 = vmatpush2.msra.mxu0 0.0
  %4074 = vmatprep.subr.mxu0 0.0
  %4075 = vmatpush2.msra.mxu0 0.0
  %4076 = vmatprep.subr.mxu0 0.0
  %4077 = vmatpush2.msra.mxu0 0.0
  %4078 = vmatprep.subr.mxu0 0.0
  %4079 = vmatpush2.msra.mxu0 0.0
  %4080 = vmatprep.subr.mxu0 0.0
  %4081 = vmatpush2.msra.mxu0 0.0
  %4082 = vmatprep.subr.mxu0 0.0
  %4083 = vmatpush2.msra.mxu0 0.0
  %4084 = vmatprep.subr.mxu0 0.0
  %4085 = vmatpush2.msra.mxu0 0.0
  %4086 = vmatprep.subr.mxu0 0.0
  %4087 = vmatpush2.msra.mxu0 0.0
  %4088 = vmatprep.mubr.f32.mxu0 0.0
  %4089 = vmatmul.mubr.f32.gmra.mxu0 %v4013
  %v4090 = vpop.f32.mrf.mxu0
  %v4091 = vadd.f32 0.0, %v4090
  %v4092 = vpop.f32.mrf.mxu0
  %4093 = vmatprep.mubr.f32.mxu0 0.0
  %4094 = vmatmul.mubr.f32.gmra.mxu0 %v4016
  %v4095 = vpop.f32.mrf.mxu0
  %v4096 = vadd.f32 0.0, %v4095
  %v4097 = vpop.f32.mrf.mxu0
  %4098 = vmatprep.mubr.f32.mxu0 0.0
  %4099 = vmatmul.mubr.f32.gmra.mxu0 %v4019
  %v4100 = vpop.f32.mrf.mxu0
  %v4101 = vadd.f32 0.0, %v4100
  %v4102 = vpop.f32.mrf.mxu0
  %4103 = vmatprep.mubr.f32.mxu0 0.0
  %4104 = vmatmul.mubr.f32.gmra.mxu0 %v4022
  %v4105 = vpop.f32.mrf.mxu0
  %v4106 = vadd.f32 0.0, %v4105
  %v4107 = vpop.f32.mrf.mxu0
  %4108 = vdwg.mxu0
  %v4109 = vld [vmem:[%s4 + $0x3] sm:$0x1]
  %v4110 = vlaneseq
  %v4111 = vshrl.u32 %v4110, 7
  %v4112 = vsub.s32 0, %v4111
  %v4113 = vrot.slane %v4109, %v4112
  %v4114 = vadd.f32 %v4091, %v4113
  %v4115 = vadd.f32 %v4096, %v4113
  %v4116 = vadd.f32 %v4101, %v4113
  %v4117 = vadd.f32 %v4106, %v4113
  %vm4118 = vcmask 392192
  %4119 = vst.msk [vmem:[%s5] sm:$0xff] %vm4118, %v4114
  %4120 = vst.msk [vmem:[%s5 + $0x8] sm:$0xff] %vm4118, %v4115
  %4121 = vst.msk [vmem:[%s5 + $0x10] sm:$0xff] %vm4118, %v4116
  %4122 = vst.msk [vmem:[%s5 + $0x18] sm:$0xff] %vm4118, %v4117
  // Predicated region
  $region22: #{forward.1} parent=0 // pred_check
    _
  $region23: #{forward.1} parent=0 // pred_check_branch
    %4124 = sbr.rel (0) target = $region25
  $region24: #{forward.1} parent=0 // pred_region
    _
  $region25: #{forward.1} parent=0 // pred_fallthru
    _
  // Predicated region
  $region26: #{forward.1} parent=0 // pred_check
    _
  $region27: #{forward.1} parent=0 // pred_check_branch
    %4126 = sbr.rel (0) target = $region29
  $region28: #{forward.1} parent=0 // pred_region
    _
  $region29: #{forward.1} parent=0 // pred_fallthru
    _

</llo_original>
